<compile_context>
chip_gen: v5e
topology: v5e:2x2
jax: 0.10.0
libtpu: 0.0.40
codegen_flags: <defaults>
</compile_context>

<pallas_src>
import functools

import jax
import jax.numpy as jnp
from jax import lax
from jax.experimental import pallas as pl
from jax.experimental.pallas import tpu as pltpu

KSIZE = 3  # kernel_size=3, padding=1, stride=1


def _dwsep_kernel(x_ref, top_ref, bot_ref, wdw_ref, wpw_ref, bpw_ref,
                  out_ref, xp_ref, acc_ref, *, mxu_dtype):
    # x_ref  : (1, TH, W, Cin)   current H-tile of the UNPADDED NHWC input
    # top_ref: (1, 1,  W, Cin)   row just above the tile (row 0 re-read at the top edge)
    # bot_ref: (1, 1,  W, Cin)   row just below the tile (row H-1 re-read at the bottom edge)
    # wdw_ref: (9, Cin)          depthwise weights, tap-major [kh*3+kw, ch]
    # wpw_ref: (Cin, Cout)       pointwise weights
    # bpw_ref: (1, Cout)         pointwise bias
    # out_ref: (1, TH, W, Cout)
    # xp_ref : (TH+2, W+2, Cin)  f32 VMEM scratch: zero-padded tile (padding fused here)
    # acc_ref: (TH, W, Cin)      f32 VMEM scratch: depthwise accumulator
    i = pl.program_id(1)
    nh = pl.num_programs(1)
    TH = out_ref.shape[1]
    W = out_ref.shape[2]
    Cin = x_ref.shape[3]
    f32 = jnp.float32

    # ---- build the zero-padded (TH+2, W+2, Cin) tile in VMEM (fused `padding=1`) ----
    xp_ref[0:TH + 2, 0:1, :] = jnp.zeros((TH + 2, 1, Cin), f32)           # left halo col
    xp_ref[0:TH + 2, W + 1:W + 2, :] = jnp.zeros((TH + 2, 1, Cin), f32)   # right halo col
    tmask = (i > 0).astype(f32)        # zero the top halo row at the image top border
    bmask = (i < nh - 1).astype(f32)   # zero the bottom halo row at the image bottom border
    xp_ref[0:1, 1:W + 1, :] = top_ref[0].astype(f32) * tmask
    xp_ref[TH + 1:TH + 2, 1:W + 1, :] = bot_ref[0].astype(f32) * bmask
    xp_ref[1:TH + 1, 1:W + 1, :] = x_ref[0].astype(f32)

    # ---- depthwise 3x3 (stride 1): 9 shifted taps, f32 accumulation in VMEM ----
    for kh in range(KSIZE):
        for kw in range(KSIZE):
            tap = (xp_ref[kh:kh + TH, kw:kw + W, :]
                   * wdw_ref[kh * KSIZE + kw, :].astype(f32))
            if kh == 0 and kw == 0:
                acc_ref[...] = tap
            else:
                acc_ref[...] += tap

    # ---- pointwise 1x1 conv on the MXU: (TH*W, Cin) @ (Cin, Cout) + bias ----
    a2 = acc_ref[...].reshape(TH * W, Cin).astype(mxu_dtype)
    y = lax.dot_general(a2, wpw_ref[...].astype(mxu_dtype),
                        (((1,), (0,)), ((), ())),
                        preferred_element_type=jnp.float32)
    y = y + bpw_ref[...].astype(jnp.float32)
    out_ref[0] = y.reshape(TH, W, -1).astype(out_ref.dtype)


def _vmem_capacity_bytes():
    try:
        return int(pltpu.get_tpu_info().vmem_capacity_bytes)
    except Exception:
        return 64 * 1024 * 1024  # conservative (v7x-sized) default


def _pick_tile_h(H, W, Cin, Cout, itemsize, budget_bytes):
    """Largest divisor of H whose double-buffered tiles + scratch fit the VMEM budget."""
    def footprint(th):
        in_tile = (th + 2) * W * Cin * itemsize          # main block + 2 halo rows
        out_tile = th * W * Cout * itemsize
        weights = (9 * Cin + Cin * Cout + Cout) * 4
        scratch = ((th + 2) * (W + 2) * Cin + th * W * Cin) * 4
        return 2 * (in_tile + out_tile + weights) + scratch  # 2x: pipeline double-buffering

    for th in sorted((d for d in range(1, H + 1) if H % d == 0), reverse=True):
        if footprint(th) <= budget_bytes:
            return th
    # Extremely wide rows (W * Cin too large even for a single row) would also need W
    # tiling; fall back to 1-row tiles and rely on the raised VMEM limit.
    return 1


def dw_separable_conv_nhwc(x_nhwc, wdw9, wpw, bpw, *, mxu_dtype=jnp.float32, tile_h=None):
    """Fused depthwise(3x3, pad=1, stride=1, no bias) + pointwise(1x1, bias) conv in NHWC.

    x_nhwc: (N, H, W, Cin)
    wdw9  : (9, Cin)     depthwise taps, [kh*3+kw, ch]
    wpw   : (Cin, Cout)  pointwise weights
    bpw   : (1, Cout)    pointwise bias
    mxu_dtype: jnp.bfloat16 on v6e/v7x roughly doubles pointwise MXU throughput
               (f32 accumulation is kept either way).
    returns (N, H, W, Cout)
    """
    N, H, W, Cin = x_nhwc.shape
    Cout = wpw.shape[1]

    vmem_cap = _vmem_capacity_bytes()                      # 64 MiB on v7x, 128 MiB on v5e/v6e
    vmem_limit = int(min(vmem_cap * 3 // 4, 100 * 1024 * 1024))
    if tile_h is None:
        TH = _pick_tile_h(H, W, Cin, Cout, jnp.dtype(x_nhwc.dtype).itemsize,
                          int(vmem_limit * 0.8))
    else:
        assert H % tile_h == 0, (H, tile_h)
        TH = tile_h
    nH = H // TH

    main_spec = pl.BlockSpec((1, TH, W, Cin), lambda n, i: (n, i, 0, 0))
    # Halo rows: 1-row blocks, so block index == row index.  Clamped at the image borders
    # (keeps the DMA in bounds); the kernel zeroes those rows there.
    top_spec = pl.BlockSpec((1, 1, W, Cin),
                            lambda n, i: (n, jnp.maximum(i * TH - 1, 0), 0, 0))
    bot_spec = pl.BlockSpec((1, 1, W, Cin),
                            lambda n, i: (n, jnp.minimum(i * TH + TH, H - 1), 0, 0))

    kernel = functools.partial(_dwsep_kernel, mxu_dtype=mxu_dtype)

    return pl.pallas_call(
        kernel,
        out_shape=jax.ShapeDtypeStruct((N, H, W, Cout), x_nhwc.dtype),
        grid_spec=pltpu.PrefetchScalarGridSpec(
            num_scalar_prefetch=0,
            grid=(N, nH),
            in_specs=[
                main_spec,
                top_spec,
                bot_spec,
                pl.BlockSpec((KSIZE * KSIZE, Cin), lambda n, i: (0, 0)),
                pl.BlockSpec((Cin, Cout), lambda n, i: (0, 0)),
                pl.BlockSpec((1, Cout), lambda n, i: (0, 0)),
            ],
            out_specs=pl.BlockSpec((1, TH, W, Cout), lambda n, i: (n, i, 0, 0)),
            scratch_shapes=[
                pltpu.VMEM((TH + 2, W + 2, Cin), jnp.float32),   # padded input tile
                pltpu.VMEM((TH, W, Cin), jnp.float32),           # depthwise accumulator
            ],
        ),
        compiler_params=pltpu.CompilerParams(
            dimension_semantics=("parallel", "parallel"),
            vmem_limit_bytes=vmem_limit,
        ),
    )(x_nhwc, x_nhwc, x_nhwc, wdw9, wpw, bpw)


def dw_separable_conv(x_nchw, w_dw, w_pw, b_pw, *, mxu_dtype=jnp.float32, tile_h=None):
    """PyTorch-convention wrapper (NCHW in / NCHW out) around the NHWC kernel.

    x_nchw: (N, Cin, H, W), w_dw: (Cin, 1, 3, 3), w_pw: (Cout, Cin, 1, 1), b_pw: (Cout,)
    Prefer dw_separable_conv_nhwc inside an NHWC network: each activation transpose here is
    a full HBM round trip done by XLA outside the kernel.
    """
    N, Cin, H, W = x_nchw.shape
    Cout = w_pw.shape[0]

    x_nhwc = jnp.transpose(x_nchw, (0, 2, 3, 1))                                  # (N,H,W,Cin)
    wdw9 = jnp.transpose(w_dw[:, 0, :, :], (1, 2, 0)).reshape(KSIZE * KSIZE, Cin)  # (9,Cin)
    wpw = jnp.transpose(w_pw[:, :, 0, 0], (1, 0))                                 # (Cin,Cout)
    bpw = b_pw.reshape(1, Cout)                                                   # (1,Cout)

    out_nhwc = dw_separable_conv_nhwc(x_nhwc, wdw9, wpw, bpw,
                                      mxu_dtype=mxu_dtype, tile_h=tile_h)
    return jnp.transpose(out_nhwc, (0, 3, 1, 2))                                  # back to NCHW


def _reference(x_nchw, w_dw, w_pw, b_pw):
    """Pure-JAX reference matching PyTorch Conv2d semantics."""
    Cin = x_nchw.shape[1]
    dw = lax.conv_general_dilated(
        x_nchw, w_dw, window_strides=(1, 1), padding=((1, 1), (1, 1)),
        dimension_numbers=("NCHW", "OIHW", "NCHW"), feature_group_count=Cin)
    pw = lax.conv_general_dilated(
        dw, w_pw, window_strides=(1, 1), padding=((0, 0), (0, 0)),
        dimension_numbers=("NCHW", "OIHW", "NCHW"))
    return pw + b_pw[None, :, None, None]


if __name__ == "__main__":
    N, Cin, Cout, H, W = 2, 4, 8, 16, 16

    key = jax.random.PRNGKey(0)
    kx, kdw, kpw, kb = jax.random.split(key, 4)

    x = jax.random.normal(kx, (N, Cin, H, W), jnp.float32)
    w_dw = jax.random.normal(kdw, (Cin, 1, KSIZE, KSIZE), jnp.float32) * 0.1  # dw weight (bias=False)
    w_pw = jax.random.normal(kpw, (Cout, Cin, 1, 1), jnp.float32) * 0.1       # pw weight
    b_pw = jax.random.normal(kb, (Cout,), jnp.float32) * 0.1                  # pw bias

    ref = _reference(x, w_dw, w_pw, b_pw)

    # Auto-sized tile (single H-tile at this small size).
    out = jax.block_until_ready(dw_separable_conv(x, w_dw, w_pw, b_pw))
    assert out.shape == (N, Cout, H, W), out.shape
    assert jnp.allclose(out, ref, atol=1e-4, rtol=1e-4), float(jnp.max(jnp.abs(out - ref)))

    # Forced multi-tile grid (grid = (N, 4)) to exercise the halo-row / fused-padding path.
    out_tiled = jax.block_until_ready(dw_separable_conv(x, w_dw, w_pw, b_pw, tile_h=4))
    assert jnp.allclose(out_tiled, ref, atol=1e-4, rtol=1e-4), \
        float(jnp.max(jnp.abs(out_tiled - ref)))

    print("KERNEL_OK")
</pallas_src>

<mosaic_0001>
module attributes {stable_mosaic.version = 11 : i64} {
  func.func @_dwsep_kernel(%arg0: i32, %arg1: i32, %arg2: memref<1x16x16x4xf32, #tpu.memory_space<vmem>>, %arg3: memref<1x1x16x4xf32, #tpu.memory_space<vmem>>, %arg4: memref<1x1x16x4xf32, #tpu.memory_space<vmem>>, %arg5: memref<9x4xf32, #tpu.memory_space<vmem>>, %arg6: memref<4x8xf32, #tpu.memory_space<vmem>>, %arg7: memref<1x8xf32, #tpu.memory_space<vmem>>, %arg8: memref<1x16x16x8xf32, #tpu.memory_space<vmem>>, %arg9: memref<18x18x4xf32, #tpu.memory_space<vmem>>, %arg10: memref<16x16x4xf32, #tpu.memory_space<vmem>>) attributes {dimension_semantics = [#tpu.dimension_semantics<parallel>, #tpu.dimension_semantics<parallel>], iteration_bounds = array<i64: 2, 1>, scalar_prefetch = 0 : i64, scratch_operands = 2 : i64, tpu.core_type = #tpu.core_type<tc>, window_params = [{transform_indices = @transform_0, window_bounds = array<i64: 1, 16, 16, 4>}, {transform_indices = @transform_1, window_bounds = array<i64: 1, 1, 16, 4>}, {transform_indices = @transform_2, window_bounds = array<i64: 1, 1, 16, 4>}, {pipeline_mode = #tpu.pipeline_mode<synchronous>, transform_indices = @transform_3, window_bounds = array<i64: 9, 4>}, {pipeline_mode = #tpu.pipeline_mode<synchronous>, transform_indices = @transform_4, window_bounds = array<i64: 4, 8>}, {pipeline_mode = #tpu.pipeline_mode<synchronous>, transform_indices = @transform_5, window_bounds = array<i64: 1, 8>}, {transform_indices = @transform_6, window_bounds = array<i64: 1, 16, 16, 8>}]} {
    %cst = arith.constant 0.000000e+00 : f32
    %0 = vector.broadcast %cst : f32 to vector<18x1x4xf32>
    %c0 = arith.constant 0 : index
    %c0_0 = arith.constant 0 : index
    %c0_1 = arith.constant 0 : index
    %1 = vector.load %arg9[%c0, %c0_0, %c0_1] : memref<18x18x4xf32, #tpu.memory_space<vmem>>, vector<18x1x4xf32>
    tpu.vector_store %arg9[%c0, %c0_0, %c0_1], %0 {strides = array<i32>} : memref<18x18x4xf32, #tpu.memory_space<vmem>>, vector<18x1x4xf32>,
    %cst_2 = arith.constant 0.000000e+00 : f32
    %2 = vector.broadcast %cst_2 : f32 to vector<18x1x4xf32>
    %c0_3 = arith.constant 0 : index
    %c17 = arith.constant 17 : index
    %c0_4 = arith.constant 0 : index
    %3 = vector.load %arg9[%c0_3, %c17, %c0_4] : memref<18x18x4xf32, #tpu.memory_space<vmem>>, vector<18x1x4xf32>
    tpu.vector_store %arg9[%c0_3, %c17, %c0_4], %2 {strides = array<i32>} : memref<18x18x4xf32, #tpu.memory_space<vmem>>, vector<18x1x4xf32>,
    %c0_i32 = arith.constant 0 : i32
    %4 = arith.cmpi sgt, %arg1, %c0_i32 : i32
    %5 = arith.extui %4 : i1 to i32
    %6 = arith.sitofp %5 : i32 to f32
    %c0_i32_5 = arith.constant 0 : i32
    %7 = arith.cmpi slt, %arg1, %c0_i32_5 : i32
    %8 = arith.extui %7 : i1 to i32
    %9 = arith.sitofp %8 : i32 to f32
    %c0_6 = arith.constant 0 : index
    %c0_7 = arith.constant 0 : index
    %c0_8 = arith.constant 0 : index
    %c0_9 = arith.constant 0 : index
    %10 = vector.load %arg3[%c0_6, %c0_7, %c0_8, %c0_9] : memref<1x1x16x4xf32, #tpu.memory_space<vmem>>, vector<1x1x16x4xf32>
    %11 = vector.shape_cast %10 : vector<1x1x16x4xf32> to vector<1x16x4xf32>
    %12 = vector.broadcast %6 : f32 to vector<1x16x4xf32>
    %13 = arith.mulf %11, %12 : vector<1x16x4xf32>
    %c0_10 = arith.constant 0 : index
    %c1 = arith.constant 1 : index
    %c0_11 = arith.constant 0 : index
    %14 = vector.load %arg9[%c0_10, %c1, %c0_11] : memref<18x18x4xf32, #tpu.memory_space<vmem>>, vector<1x16x4xf32>
    tpu.vector_store %arg9[%c0_10, %c1, %c0_11], %13 {strides = array<i32>} : memref<18x18x4xf32, #tpu.memory_space<vmem>>, vector<1x16x4xf32>,
    %c0_12 = arith.constant 0 : index
    %c0_13 = arith.constant 0 : index
    %c0_14 = arith.constant 0 : index
    %c0_15 = arith.constant 0 : index
    %15 = vector.load %arg4[%c0_12, %c0_13, %c0_14, %c0_15] : memref<1x1x16x4xf32, #tpu.memory_space<vmem>>, vector<1x1x16x4xf32>
    %16 = vector.shape_cast %15 : vector<1x1x16x4xf32> to vector<1x16x4xf32>
    %17 = vector.broadcast %9 : f32 to vector<1x16x4xf32>
    %18 = arith.mulf %16, %17 : vector<1x16x4xf32>
    %c17_16 = arith.constant 17 : index
    %c1_17 = arith.constant 1 : index
    %c0_18 = arith.constant 0 : index
    %19 = vector.load %arg9[%c17_16, %c1_17, %c0_18] : memref<18x18x4xf32, #tpu.memory_space<vmem>>, vector<1x16x4xf32>
    tpu.vector_store %arg9[%c17_16, %c1_17, %c0_18], %18 {strides = array<i32>} : memref<18x18x4xf32, #tpu.memory_space<vmem>>, vector<1x16x4xf32>,
    %c0_19 = arith.constant 0 : index
    %c0_20 = arith.constant 0 : index
    %c0_21 = arith.constant 0 : index
    %c0_22 = arith.constant 0 : index
    %20 = vector.load %arg2[%c0_19, %c0_20, %c0_21, %c0_22] : memref<1x16x16x4xf32, #tpu.memory_space<vmem>>, vector<1x16x16x4xf32>
    %21 = vector.shape_cast %20 : vector<1x16x16x4xf32> to vector<16x16x4xf32>
    %c1_23 = arith.constant 1 : index
    %c1_24 = arith.constant 1 : index
    %c0_25 = arith.constant 0 : index
    %22 = vector.load %arg9[%c1_23, %c1_24, %c0_25] : memref<18x18x4xf32, #tpu.memory_space<vmem>>, vector<16x16x4xf32>
    tpu.vector_store %arg9[%c1_23, %c1_24, %c0_25], %21 {strides = array<i32>} : memref<18x18x4xf32, #tpu.memory_space<vmem>>, vector<16x16x4xf32>,
    %c0_26 = arith.constant 0 : index
    %c0_27 = arith.constant 0 : index
    %c0_28 = arith.constant 0 : index
    %23 = vector.load %arg9[%c0_26, %c0_27, %c0_28] : memref<18x18x4xf32, #tpu.memory_space<vmem>>, vector<16x16x4xf32>
    %c0_29 = arith.constant 0 : index
    %c0_30 = arith.constant 0 : index
    %24 = vector.load %arg5[%c0_29, %c0_30] : memref<9x4xf32, #tpu.memory_space<vmem>>, vector<1x4xf32>
    %25 = vector.shape_cast %24 : vector<1x4xf32> to vector<4xf32>
    %26 = vector.shape_cast %25 : vector<4xf32> to vector<1x1x4xf32>
    %27 = vector.broadcast %26 : vector<1x1x4xf32> to vector<16x16x4xf32>
    %28 = arith.mulf %23, %27 : vector<16x16x4xf32>
    %c0_31 = arith.constant 0 : index
    %c0_32 = arith.constant 0 : index
    %c0_33 = arith.constant 0 : index
    %29 = vector.load %arg10[%c0_31, %c0_32, %c0_33] : memref<16x16x4xf32, #tpu.memory_space<vmem>>, vector<16x16x4xf32>
    tpu.vector_store %arg10[%c0_31, %c0_32, %c0_33], %28 {strides = array<i32>} : memref<16x16x4xf32, #tpu.memory_space<vmem>>, vector<16x16x4xf32>,
    %c0_34 = arith.constant 0 : index
    %c1_35 = arith.constant 1 : index
    %c0_36 = arith.constant 0 : index
    %30 = vector.load %arg9[%c0_34, %c1_35, %c0_36] : memref<18x18x4xf32, #tpu.memory_space<vmem>>, vector<16x16x4xf32>
    %c1_37 = arith.constant 1 : index
    %c0_38 = arith.constant 0 : index
    %31 = vector.load %arg5[%c1_37, %c0_38] : memref<9x4xf32, #tpu.memory_space<vmem>>, vector<1x4xf32>
    %32 = vector.shape_cast %31 : vector<1x4xf32> to vector<4xf32>
    %33 = vector.shape_cast %32 : vector<4xf32> to vector<1x1x4xf32>
    %34 = vector.broadcast %33 : vector<1x1x4xf32> to vector<16x16x4xf32>
    %35 = arith.mulf %30, %34 : vector<16x16x4xf32>
    %c0_39 = arith.constant 0 : index
    %c0_40 = arith.constant 0 : index
    %c0_41 = arith.constant 0 : index
    %36 = vector.load %arg10[%c0_39, %c0_40, %c0_41] : memref<16x16x4xf32, #tpu.memory_space<vmem>>, vector<16x16x4xf32>
    %37 = arith.addf %36, %35 : vector<16x16x4xf32>
    %c0_42 = arith.constant 0 : index
    %c0_43 = arith.constant 0 : index
    %c0_44 = arith.constant 0 : index
    %38 = vector.load %arg10[%c0_42, %c0_43, %c0_44] : memref<16x16x4xf32, #tpu.memory_space<vmem>>, vector<16x16x4xf32>
    tpu.vector_store %arg10[%c0_42, %c0_43, %c0_44], %37 {strides = array<i32>} : memref<16x16x4xf32, #tpu.memory_space<vmem>>, vector<16x16x4xf32>,
    %c0_45 = arith.constant 0 : index
    %c2 = arith.constant 2 : index
    %c0_46 = arith.constant 0 : index
    %39 = vector.load %arg9[%c0_45, %c2, %c0_46] : memref<18x18x4xf32, #tpu.memory_space<vmem>>, vector<16x16x4xf32>
    %c2_47 = arith.constant 2 : index
    %c0_48 = arith.constant 0 : index
    %40 = vector.load %arg5[%c2_47, %c0_48] : memref<9x4xf32, #tpu.memory_space<vmem>>, vector<1x4xf32>
    %41 = vector.shape_cast %40 : vector<1x4xf32> to vector<4xf32>
    %42 = vector.shape_cast %41 : vector<4xf32> to vector<1x1x4xf32>
    %43 = vector.broadcast %42 : vector<1x1x4xf32> to vector<16x16x4xf32>
    %44 = arith.mulf %39, %43 : vector<16x16x4xf32>
    %c0_49 = arith.constant 0 : index
    %c0_50 = arith.constant 0 : index
    %c0_51 = arith.constant 0 : index
    %45 = vector.load %arg10[%c0_49, %c0_50, %c0_51] : memref<16x16x4xf32, #tpu.memory_space<vmem>>, vector<16x16x4xf32>
    %46 = arith.addf %45, %44 : vector<16x16x4xf32>
    %c0_52 = arith.constant 0 : index
    %c0_53 = arith.constant 0 : index
    %c0_54 = arith.constant 0 : index
    %47 = vector.load %arg10[%c0_52, %c0_53, %c0_54] : memref<16x16x4xf32, #tpu.memory_space<vmem>>, vector<16x16x4xf32>
    tpu.vector_store %arg10[%c0_52, %c0_53, %c0_54], %46 {strides = array<i32>} : memref<16x16x4xf32, #tpu.memory_space<vmem>>, vector<16x16x4xf32>,
    %c1_55 = arith.constant 1 : index
    %c0_56 = arith.constant 0 : index
    %c0_57 = arith.constant 0 : index
    %48 = vector.load %arg9[%c1_55, %c0_56, %c0_57] : memref<18x18x4xf32, #tpu.memory_space<vmem>>, vector<16x16x4xf32>
    %c3 = arith.constant 3 : index
    %c0_58 = arith.constant 0 : index
    %49 = vector.load %arg5[%c3, %c0_58] : memref<9x4xf32, #tpu.memory_space<vmem>>, vector<1x4xf32>
    %50 = vector.shape_cast %49 : vector<1x4xf32> to vector<4xf32>
    %51 = vector.shape_cast %50 : vector<4xf32> to vector<1x1x4xf32>
    %52 = vector.broadcast %51 : vector<1x1x4xf32> to vector<16x16x4xf32>
    %53 = arith.mulf %48, %52 : vector<16x16x4xf32>
    %c0_59 = arith.constant 0 : index
    %c0_60 = arith.constant 0 : index
    %c0_61 = arith.constant 0 : index
    %54 = vector.load %arg10[%c0_59, %c0_60, %c0_61] : memref<16x16x4xf32, #tpu.memory_space<vmem>>, vector<16x16x4xf32>
    %55 = arith.addf %54, %53 : vector<16x16x4xf32>
    %c0_62 = arith.constant 0 : index
    %c0_63 = arith.constant 0 : index
    %c0_64 = arith.constant 0 : index
    %56 = vector.load %arg10[%c0_62, %c0_63, %c0_64] : memref<16x16x4xf32, #tpu.memory_space<vmem>>, vector<16x16x4xf32>
    tpu.vector_store %arg10[%c0_62, %c0_63, %c0_64], %55 {strides = array<i32>} : memref<16x16x4xf32, #tpu.memory_space<vmem>>, vector<16x16x4xf32>,
    %c1_65 = arith.constant 1 : index
    %c1_66 = arith.constant 1 : index
    %c0_67 = arith.constant 0 : index
    %57 = vector.load %arg9[%c1_65, %c1_66, %c0_67] : memref<18x18x4xf32, #tpu.memory_space<vmem>>, vector<16x16x4xf32>
    %c4 = arith.constant 4 : index
    %c0_68 = arith.constant 0 : index
    %58 = vector.load %arg5[%c4, %c0_68] : memref<9x4xf32, #tpu.memory_space<vmem>>, vector<1x4xf32>
    %59 = vector.shape_cast %58 : vector<1x4xf32> to vector<4xf32>
    %60 = vector.shape_cast %59 : vector<4xf32> to vector<1x1x4xf32>
    %61 = vector.broadcast %60 : vector<1x1x4xf32> to vector<16x16x4xf32>
    %62 = arith.mulf %57, %61 : vector<16x16x4xf32>
    %c0_69 = arith.constant 0 : index
    %c0_70 = arith.constant 0 : index
    %c0_71 = arith.constant 0 : index
    %63 = vector.load %arg10[%c0_69, %c0_70, %c0_71] : memref<16x16x4xf32, #tpu.memory_space<vmem>>, vector<16x16x4xf32>
    %64 = arith.addf %63, %62 : vector<16x16x4xf32>
    %c0_72 = arith.constant 0 : index
    %c0_73 = arith.constant 0 : index
    %c0_74 = arith.constant 0 : index
    %65 = vector.load %arg10[%c0_72, %c0_73, %c0_74] : memref<16x16x4xf32, #tpu.memory_space<vmem>>, vector<16x16x4xf32>
    tpu.vector_store %arg10[%c0_72, %c0_73, %c0_74], %64 {strides = array<i32>} : memref<16x16x4xf32, #tpu.memory_space<vmem>>, vector<16x16x4xf32>,
    %c1_75 = arith.constant 1 : index
    %c2_76 = arith.constant 2 : index
    %c0_77 = arith.constant 0 : index
    %66 = vector.load %arg9[%c1_75, %c2_76, %c0_77] : memref<18x18x4xf32, #tpu.memory_space<vmem>>, vector<16x16x4xf32>
    %c5 = arith.constant 5 : index
    %c0_78 = arith.constant 0 : index
    %67 = vector.load %arg5[%c5, %c0_78] : memref<9x4xf32, #tpu.memory_space<vmem>>, vector<1x4xf32>
    %68 = vector.shape_cast %67 : vector<1x4xf32> to vector<4xf32>
    %69 = vector.shape_cast %68 : vector<4xf32> to vector<1x1x4xf32>
    %70 = vector.broadcast %69 : vector<1x1x4xf32> to vector<16x16x4xf32>
    %71 = arith.mulf %66, %70 : vector<16x16x4xf32>
    %c0_79 = arith.constant 0 : index
    %c0_80 = arith.constant 0 : index
    %c0_81 = arith.constant 0 : index
    %72 = vector.load %arg10[%c0_79, %c0_80, %c0_81] : memref<16x16x4xf32, #tpu.memory_space<vmem>>, vector<16x16x4xf32>
    %73 = arith.addf %72, %71 : vector<16x16x4xf32>
    %c0_82 = arith.constant 0 : index
    %c0_83 = arith.constant 0 : index
    %c0_84 = arith.constant 0 : index
    %74 = vector.load %arg10[%c0_82, %c0_83, %c0_84] : memref<16x16x4xf32, #tpu.memory_space<vmem>>, vector<16x16x4xf32>
    tpu.vector_store %arg10[%c0_82, %c0_83, %c0_84], %73 {strides = array<i32>} : memref<16x16x4xf32, #tpu.memory_space<vmem>>, vector<16x16x4xf32>,
    %c2_85 = arith.constant 2 : index
    %c0_86 = arith.constant 0 : index
    %c0_87 = arith.constant 0 : index
    %75 = vector.load %arg9[%c2_85, %c0_86, %c0_87] : memref<18x18x4xf32, #tpu.memory_space<vmem>>, vector<16x16x4xf32>
    %c6 = arith.constant 6 : index
    %c0_88 = arith.constant 0 : index
    %76 = vector.load %arg5[%c6, %c0_88] : memref<9x4xf32, #tpu.memory_space<vmem>>, vector<1x4xf32>
    %77 = vector.shape_cast %76 : vector<1x4xf32> to vector<4xf32>
    %78 = vector.shape_cast %77 : vector<4xf32> to vector<1x1x4xf32>
    %79 = vector.broadcast %78 : vector<1x1x4xf32> to vector<16x16x4xf32>
    %80 = arith.mulf %75, %79 : vector<16x16x4xf32>
    %c0_89 = arith.constant 0 : index
    %c0_90 = arith.constant 0 : index
    %c0_91 = arith.constant 0 : index
    %81 = vector.load %arg10[%c0_89, %c0_90, %c0_91] : memref<16x16x4xf32, #tpu.memory_space<vmem>>, vector<16x16x4xf32>
    %82 = arith.addf %81, %80 : vector<16x16x4xf32>
    %c0_92 = arith.constant 0 : index
    %c0_93 = arith.constant 0 : index
    %c0_94 = arith.constant 0 : index
    %83 = vector.load %arg10[%c0_92, %c0_93, %c0_94] : memref<16x16x4xf32, #tpu.memory_space<vmem>>, vector<16x16x4xf32>
    tpu.vector_store %arg10[%c0_92, %c0_93, %c0_94], %82 {strides = array<i32>} : memref<16x16x4xf32, #tpu.memory_space<vmem>>, vector<16x16x4xf32>,
    %c2_95 = arith.constant 2 : index
    %c1_96 = arith.constant 1 : index
    %c0_97 = arith.constant 0 : index
    %84 = vector.load %arg9[%c2_95, %c1_96, %c0_97] : memref<18x18x4xf32, #tpu.memory_space<vmem>>, vector<16x16x4xf32>
    %c7 = arith.constant 7 : index
    %c0_98 = arith.constant 0 : index
    %85 = vector.load %arg5[%c7, %c0_98] : memref<9x4xf32, #tpu.memory_space<vmem>>, vector<1x4xf32>
    %86 = vector.shape_cast %85 : vector<1x4xf32> to vector<4xf32>
    %87 = vector.shape_cast %86 : vector<4xf32> to vector<1x1x4xf32>
    %88 = vector.broadcast %87 : vector<1x1x4xf32> to vector<16x16x4xf32>
    %89 = arith.mulf %84, %88 : vector<16x16x4xf32>
    %c0_99 = arith.constant 0 : index
    %c0_100 = arith.constant 0 : index
    %c0_101 = arith.constant 0 : index
    %90 = vector.load %arg10[%c0_99, %c0_100, %c0_101] : memref<16x16x4xf32, #tpu.memory_space<vmem>>, vector<16x16x4xf32>
    %91 = arith.addf %90, %89 : vector<16x16x4xf32>
    %c0_102 = arith.constant 0 : index
    %c0_103 = arith.constant 0 : index
    %c0_104 = arith.constant 0 : index
    %92 = vector.load %arg10[%c0_102, %c0_103, %c0_104] : memref<16x16x4xf32, #tpu.memory_space<vmem>>, vector<16x16x4xf32>
    tpu.vector_store %arg10[%c0_102, %c0_103, %c0_104], %91 {strides = array<i32>} : memref<16x16x4xf32, #tpu.memory_space<vmem>>, vector<16x16x4xf32>,
    %c2_105 = arith.constant 2 : index
    %c2_106 = arith.constant 2 : index
    %c0_107 = arith.constant 0 : index
    %93 = vector.load %arg9[%c2_105, %c2_106, %c0_107] : memref<18x18x4xf32, #tpu.memory_space<vmem>>, vector<16x16x4xf32>
    %c8 = arith.constant 8 : index
    %c0_108 = arith.constant 0 : index
    %94 = vector.load %arg5[%c8, %c0_108] : memref<9x4xf32, #tpu.memory_space<vmem>>, vector<1x4xf32>
    %95 = vector.shape_cast %94 : vector<1x4xf32> to vector<4xf32>
    %96 = vector.shape_cast %95 : vector<4xf32> to vector<1x1x4xf32>
    %97 = vector.broadcast %96 : vector<1x1x4xf32> to vector<16x16x4xf32>
    %98 = arith.mulf %93, %97 : vector<16x16x4xf32>
    %c0_109 = arith.constant 0 : index
    %c0_110 = arith.constant 0 : index
    %c0_111 = arith.constant 0 : index
    %99 = vector.load %arg10[%c0_109, %c0_110, %c0_111] : memref<16x16x4xf32, #tpu.memory_space<vmem>>, vector<16x16x4xf32>
    %100 = arith.addf %99, %98 : vector<16x16x4xf32>
    %c0_112 = arith.constant 0 : index
    %c0_113 = arith.constant 0 : index
    %c0_114 = arith.constant 0 : index
    %101 = vector.load %arg10[%c0_112, %c0_113, %c0_114] : memref<16x16x4xf32, #tpu.memory_space<vmem>>, vector<16x16x4xf32>
    tpu.vector_store %arg10[%c0_112, %c0_113, %c0_114], %100 {strides = array<i32>} : memref<16x16x4xf32, #tpu.memory_space<vmem>>, vector<16x16x4xf32>,
    %c0_115 = arith.constant 0 : index
    %c0_116 = arith.constant 0 : index
    %c0_117 = arith.constant 0 : index
    %102 = vector.load %arg10[%c0_115, %c0_116, %c0_117] : memref<16x16x4xf32, #tpu.memory_space<vmem>>, vector<16x16x4xf32>
    %103 = vector.shape_cast %102 : vector<16x16x4xf32> to vector<256x4xf32>
    %c0_118 = arith.constant 0 : index
    %c0_119 = arith.constant 0 : index
    %104 = vector.load %arg6[%c0_118, %c0_119] : memref<4x8xf32, #tpu.memory_space<vmem>>, vector<4x8xf32>
    %cst_120 = arith.constant dense<0.000000e+00> : vector<256x8xf32>
    %105 = tpu.matmul %103, %104, %cst_120 {dimension_numbers = #tpu.dot_dimension_numbers<[1], [0], [0], [1], [0, 0, 1, 1], [], []>} : vector<256x4xf32>, vector<4x8xf32>, vector<256x8xf32> -> vector<256x8xf32>
    %c0_121 = arith.constant 0 : index
    %c0_122 = arith.constant 0 : index
    %106 = vector.load %arg7[%c0_121, %c0_122] : memref<1x8xf32, #tpu.memory_space<vmem>>, vector<1x8xf32>
    %107 = vector.broadcast %106 : vector<1x8xf32> to vector<256x8xf32>
    %108 = arith.addf %105, %107 : vector<256x8xf32>
    %109 = vector.shape_cast %108 : vector<256x8xf32> to vector<16x16x8xf32>
    %c0_123 = arith.constant 0 : index
    %c0_124 = arith.constant 0 : index
    %c0_125 = arith.constant 0 : index
    %c0_126 = arith.constant 0 : index
    %110 = vector.load %arg8[%c0_123, %c0_124, %c0_125, %c0_126] : memref<1x16x16x8xf32, #tpu.memory_space<vmem>>, vector<1x16x16x8xf32>
    %111 = vector.shape_cast %110 : vector<1x16x16x8xf32> to vector<16x16x8xf32>
    %112 = vector.shape_cast %109 : vector<16x16x8xf32> to vector<1x16x16x8xf32>
    tpu.vector_store %arg8[%c0_123, %c0_124, %c0_125, %c0_126], %112 {strides = array<i32>} : memref<1x16x16x8xf32, #tpu.memory_space<vmem>>, vector<1x16x16x8xf32>,
    return
  }
  func.func @transform_0(%arg0: i32, %arg1: i32) -> (i32, i32, i32, i32) {
    %c0_i32 = arith.constant 0 : i32
    %c0_i32_0 = arith.constant 0 : i32
    %c0_i32_1 = arith.constant 0 : i32
    return %arg0, %arg1, %c0_i32, %c0_i32_0 : i32, i32, i32, i32
  }
  func.func @transform_1(%arg0: i32, %arg1: i32) -> (i32, i32, i32, i32) {
    %c16_i32 = arith.constant 16 : i32
    %0 = arith.muli %arg1, %c16_i32 : i32
    %c1_i32 = arith.constant 1 : i32
    %1 = arith.subi %0, %c1_i32 : i32
    %c0_i32 = arith.constant 0 : i32
    %2 = arith.maxsi %1, %c0_i32 : i32
    %c0_i32_0 = arith.constant 0 : i32
    %c0_i32_1 = arith.constant 0 : i32
    %c0_i32_2 = arith.constant 0 : i32
    return %arg0, %2, %c0_i32_0, %c0_i32_1 : i32, i32, i32, i32
  }
  func.func @transform_2(%arg0: i32, %arg1: i32) -> (i32, i32, i32, i32) {
    %c16_i32 = arith.constant 16 : i32
    %0 = arith.muli %arg1, %c16_i32 : i32
    %c16_i32_0 = arith.constant 16 : i32
    %1 = arith.addi %0, %c16_i32_0 : i32
    %c15_i32 = arith.constant 15 : i32
    %2 = arith.minsi %1, %c15_i32 : i32
    %c0_i32 = arith.constant 0 : i32
    %c0_i32_1 = arith.constant 0 : i32
    %c0_i32_2 = arith.constant 0 : i32
    return %arg0, %2, %c0_i32, %c0_i32_1 : i32, i32, i32, i32
  }
  func.func @transform_3(%arg0: i32, %arg1: i32) -> (i32, i32) {
    %c0_i32 = arith.constant 0 : i32
    %c0_i32_0 = arith.constant 0 : i32
    %c0_i32_1 = arith.constant 0 : i32
    return %c0_i32, %c0_i32_0 : i32, i32
  }
  func.func @transform_4(%arg0: i32, %arg1: i32) -> (i32, i32) {
    %c0_i32 = arith.constant 0 : i32
    %c0_i32_0 = arith.constant 0 : i32
    %c0_i32_1 = arith.constant 0 : i32
    return %c0_i32, %c0_i32_0 : i32, i32
  }
  func.func @transform_5(%arg0: i32, %arg1: i32) -> (i32, i32) {
    %c0_i32 = arith.constant 0 : i32
    %c0_i32_0 = arith.constant 0 : i32
    %c0_i32_1 = arith.constant 0 : i32
    return %c0_i32, %c0_i32_0 : i32, i32
  }
  func.func @transform_6(%arg0: i32, %arg1: i32) -> (i32, i32, i32, i32) {
    %c0_i32 = arith.constant 0 : i32
    %c0_i32_0 = arith.constant 0 : i32
    %c0_i32_1 = arith.constant 0 : i32
    return %arg0, %arg1, %c0_i32, %c0_i32_0 : i32, i32, i32, i32
  }
}

</mosaic_0001>

<llo_original>
// kernel: tpu_custom_call.1
$region0: #{tpu_custom_call.1}
  #allocation0 [shape = 'u32[]', space=smem, size = 0x4, offset = 0x4, fixed_abs, tag = 'smem constant byte address 0x4 - core index']
  #allocation1 [shape = 'u32[72,128]{1,0:T(1,128)}', space=vmem, size = 0x9000, scoped, tag = 'internal scratch']
  #allocation2 [shape = 'f32[18,18,4]{2,1,0:T(8,128)}', space=vmem, size = 0x36000, scoped, tag = 'scratch operand']
  #allocation3 [shape = 'f32[16,16,4]{2,1,0:T(8,128)}', space=vmem, size = 0x20000, scoped, tag = 'scratch operand']
  %s0 = inlined_call_operand.vmem [shape: f32[2,16,16,4], index: 0, kind: input, shape index: {}]
  %s1 = inlined_call_operand.vmem [shape: f32[2,16,16,4], index: 1, kind: input, shape index: {}]
  %s2 = inlined_call_operand.vmem [shape: f32[2,16,16,4], index: 2, kind: input, shape index: {}]
  %s3 = inlined_call_operand.vmem [shape: f32[9,4], index: 3, kind: input, shape index: {}]
  %s4 = inlined_call_operand.vmem [shape: f32[4,8], index: 4, kind: input, shape index: {}]
  %s5 = inlined_call_operand.vmem [shape: f32[1,8], index: 5, kind: input, shape index: {}]
  %s6 = inlined_call_operand.vmem [shape: f32[2,16,16,8], index: 6, kind: output, shape index: {}]
  %s7 = sld [smem:[#allocation0]]
  $region57: #{tpu_custom_call.1} parent=0
    _
  %s9 = ssub.s32 1, %s7
  %s10 = scalar_select 0, %s9, %s7
  loop: start=0, step=1, limit=4
  $region2: #{tpu_custom_call.1} parent=0 // loop_pre_header
    _
  $region3: #{tpu_custom_call.1} parent=0 // loop_header
    %s12 = sphi 0, %s16
    %p13 = scmp.ge.s32.totalorder %s12, 4
    %s19 = sphi 0, %s31
    %s20 = sphi 0, %s27
    %s21 = sphi 0, %s19
    %s22 = sphi 0, %s20
    %s23 = sphi 0, %s21
    %s24 = sphi 0, %s22
    %s36 = sphi 0, %s38
    %s39 = sphi 0, %s36
    %s40 = sphi 0, %s39
    %s56 = sphi 0, %s40
    %s72 = sphi 0, %s74
    %s75 = sphi 0, %s72
    %s76 = sphi 0, %s75
    %s92 = sphi 0, %s76
    %s108 = sphi 0, %s110
    %s111 = sphi 0, %s108
    %s112 = sphi 0, %s111
    %s128 = sphi 0, %s112
    %s132 = sphi 0, %s132
    %s134 = sphi 0, %s132
    %s135 = sphi 0, %s134
    %s149 = sphi 0, %s135
    %s153 = sphi 0, %s153
    %s155 = sphi 0, %s153
    %s156 = sphi 0, %s155
    %s170 = sphi 0, %s156
    %s174 = sphi 0, %s174
    %s176 = sphi 0, %s174
    %s177 = sphi 0, %s176
    %s191 = sphi 0, %s177
    %s199 = sphi 0, %s201
    %s202 = sphi 0, %s199
    %s203 = sphi 0, %s202
    %s219 = sphi 0, %s203
  $region4: #{tpu_custom_call.1} parent=0 // loop_header_branch
    %15 = sbr.rel (%p13) target = $region8
  $region5: #{tpu_custom_call.1} parent=0 // loop_body
    %s17 = ssub.s32 %s12, 1
    %s18 = ssub.s32 %s12, 2
    %s25 = sadd.s32 1, %s20
    %p26 = scmp.ge.s32.totalorder %s25, 1
    %s27 = scalar_select %p26, 0, %s25
    %s28 = sadd.s32 1, %s19
    %s29 = scalar_select %p26, %s28, %s19
    %p30 = scmp.ge.s32.totalorder %s29, 2
    %s31 = scalar_select %p30, 0, %s29
    %s32 = ssub.s32 %s19, %s31
    %s33 = ssub.s32 %s20, %s27
    %s34 = sor.u32 %s32, %s33
    %p35 = scmp.eq.s32.totalorder %s34, 0
    %s37 = sadd.s32 %s36, 1
    %s38 = scalar_select %p35, %s36, %s37
    %p41 = pneg %p35
    %p42 = scmp.eq.s32.totalorder %s12, 1
    %p43 = por %p41, %p42
    %p44 = scmp.ne.s32.totalorder %s36, %s39
    %p45 = scmp.eq.s32.totalorder %s12, 0
    %p46 = por %p44, %p45
    %p47 = scmp.ne.s32.totalorder %s36, %s39
    %p48 = scmp.eq.s32.totalorder %s17, 1
    %p49 = por %p47, %p48
    %p50 = scmp.ne.s32.totalorder %s39, %s40
    %p51 = scmp.eq.s32.totalorder %s17, 0
    %p52 = por %p50, %p51
    %p53 = scmp.ne.s32.totalorder %s39, %s40
    %p54 = scmp.eq.s32.totalorder %s18, 1
    %p55 = por %p53, %p54
    %p57 = scmp.ne.s32.totalorder %s40, %s56
    %p58 = scmp.eq.s32.totalorder %s18, 0
    %p59 = por %p57, %p58
    %s60 = smul.u32 %s20, 16
    %s61 = ssub.s32 %s60, 1
    %p62 = scmp.gt.s32.totalorder %s61, 0
    %s63 = scalar_select %p62, %s61, 0
    %s64 = smul.u32 %s27, 16
    %s65 = ssub.s32 %s64, 1
    %p66 = scmp.gt.s32.totalorder %s65, 0
    %s67 = scalar_select %p66, %s65, 0
    %s68 = ssub.s32 %s19, %s31
    %s69 = ssub.s32 %s63, %s67
    %s70 = sor.u32 %s68, %s69
    %p71 = scmp.eq.s32.totalorder %s70, 0
    %s73 = sadd.s32 %s72, 1
    %s74 = scalar_select %p71, %s72, %s73
    %p77 = pneg %p71
    %p78 = scmp.eq.s32.totalorder %s12, 1
    %p79 = por %p77, %p78
    %p80 = scmp.ne.s32.totalorder %s72, %s75
    %p81 = scmp.eq.s32.totalorder %s12, 0
    %p82 = por %p80, %p81
    %p83 = scmp.ne.s32.totalorder %s72, %s75
    %p84 = scmp.eq.s32.totalorder %s17, 1
    %p85 = por %p83, %p84
    %p86 = scmp.ne.s32.totalorder %s75, %s76
    %p87 = scmp.eq.s32.totalorder %s17, 0
    %p88 = por %p86, %p87
    %p89 = scmp.ne.s32.totalorder %s75, %s76
    %p90 = scmp.eq.s32.totalorder %s18, 1
    %p91 = por %p89, %p90
    %p93 = scmp.ne.s32.totalorder %s76, %s92
    %p94 = scmp.eq.s32.totalorder %s18, 0
    %p95 = por %p93, %p94
    %s96 = smul.u32 %s20, 16
    %s97 = sadd.s32 %s96, 16
    %p98 = scmp.lt.s32.totalorder %s97, 15
    %s99 = scalar_select %p98, %s97, 15
    %s100 = smul.u32 %s27, 16
    %s101 = sadd.s32 %s100, 16
    %p102 = scmp.lt.s32.totalorder %s101, 15
    %s103 = scalar_select %p102, %s101, 15
    %s104 = ssub.s32 %s19, %s31
    %s105 = ssub.s32 %s99, %s103
    %s106 = sor.u32 %s104, %s105
    %p107 = scmp.eq.s32.totalorder %s106, 0
    %s109 = sadd.s32 %s108, 1
    %s110 = scalar_select %p107, %s108, %s109
    %p113 = pneg %p107
    %p114 = scmp.eq.s32.totalorder %s12, 1
    %p115 = por %p113, %p114
    %p116 = scmp.ne.s32.totalorder %s108, %s111
    %p117 = scmp.eq.s32.totalorder %s12, 0
    %p118 = por %p116, %p117
    %p119 = scmp.ne.s32.totalorder %s108, %s111
    %p120 = scmp.eq.s32.totalorder %s17, 1
    %p121 = por %p119, %p120
    %p122 = scmp.ne.s32.totalorder %s111, %s112
    %p123 = scmp.eq.s32.totalorder %s17, 0
    %p124 = por %p122, %p123
    %p125 = scmp.ne.s32.totalorder %s111, %s112
    %p126 = scmp.eq.s32.totalorder %s18, 1
    %p127 = por %p125, %p126
    %p129 = scmp.ne.s32.totalorder %s112, %s128
    %p130 = scmp.eq.s32.totalorder %s18, 0
    %p131 = por %p129, %p130
    %s133 = sadd.s32 %s132, 1
    %p136 = scmp.eq.s32.totalorder %s12, 1
    %p137 = scmp.ne.s32.totalorder %s132, %s134
    %p138 = scmp.eq.s32.totalorder %s12, 0
    %p139 = por %p137, %p138
    %p140 = scmp.ne.s32.totalorder %s132, %s134
    %p141 = scmp.eq.s32.totalorder %s17, 1
    %p142 = por %p140, %p141
    %p143 = scmp.ne.s32.totalorder %s134, %s135
    %p144 = scmp.eq.s32.totalorder %s17, 0
    %p145 = por %p143, %p144
    %p146 = scmp.ne.s32.totalorder %s134, %s135
    %p147 = scmp.eq.s32.totalorder %s18, 1
    %p148 = por %p146, %p147
    %p150 = scmp.ne.s32.totalorder %s135, %s149
    %p151 = scmp.eq.s32.totalorder %s18, 0
    %p152 = por %p150, %p151
    %s154 = sadd.s32 %s153, 1
    %p157 = scmp.eq.s32.totalorder %s12, 1
    %p158 = scmp.ne.s32.totalorder %s153, %s155
    %p159 = scmp.eq.s32.totalorder %s12, 0
    %p160 = por %p158, %p159
    %p161 = scmp.ne.s32.totalorder %s153, %s155
    %p162 = scmp.eq.s32.totalorder %s17, 1
    %p163 = por %p161, %p162
    %p164 = scmp.ne.s32.totalorder %s155, %s156
    %p165 = scmp.eq.s32.totalorder %s17, 0
    %p166 = por %p164, %p165
    %p167 = scmp.ne.s32.totalorder %s155, %s156
    %p168 = scmp.eq.s32.totalorder %s18, 1
    %p169 = por %p167, %p168
    %p171 = scmp.ne.s32.totalorder %s156, %s170
    %p172 = scmp.eq.s32.totalorder %s18, 0
    %p173 = por %p171, %p172
    %s175 = sadd.s32 %s174, 1
    %p178 = scmp.eq.s32.totalorder %s12, 1
    %p179 = scmp.ne.s32.totalorder %s174, %s176
    %p180 = scmp.eq.s32.totalorder %s12, 0
    %p181 = por %p179, %p180
    %p182 = scmp.ne.s32.totalorder %s174, %s176
    %p183 = scmp.eq.s32.totalorder %s17, 1
    %p184 = por %p182, %p183
    %p185 = scmp.ne.s32.totalorder %s176, %s177
    %p186 = scmp.eq.s32.totalorder %s17, 0
    %p187 = por %p185, %p186
    %p188 = scmp.ne.s32.totalorder %s176, %s177
    %p189 = scmp.eq.s32.totalorder %s18, 1
    %p190 = por %p188, %p189
    %p192 = scmp.ne.s32.totalorder %s177, %s191
    %p193 = scmp.eq.s32.totalorder %s18, 0
    %p194 = por %p192, %p193
    %s195 = ssub.s32 %s19, %s31
    %s196 = ssub.s32 %s20, %s27
    %s197 = sor.u32 %s195, %s196
    %p198 = scmp.eq.s32.totalorder %s197, 0
    %s200 = sadd.s32 %s199, 1
    %s201 = scalar_select %p198, %s199, %s200
    %p204 = pneg %p198
    %p205 = scmp.eq.s32.totalorder %s12, 1
    %p206 = por %p204, %p205
    %p207 = scmp.ne.s32.totalorder %s199, %s202
    %p208 = scmp.eq.s32.totalorder %s12, 0
    %p209 = por %p207, %p208
    %p210 = scmp.ne.s32.totalorder %s199, %s202
    %p211 = scmp.eq.s32.totalorder %s17, 1
    %p212 = por %p210, %p211
    %p213 = scmp.ne.s32.totalorder %s202, %s203
    %p214 = scmp.eq.s32.totalorder %s17, 0
    %p215 = por %p213, %p214
    %p216 = scmp.ne.s32.totalorder %s202, %s203
    %p217 = scmp.eq.s32.totalorder %s18, 1
    %p218 = por %p216, %p217
    %p220 = scmp.ne.s32.totalorder %s203, %s219
    %p221 = scmp.eq.s32.totalorder %s18, 0
    %p222 = por %p220, %p221
    %p223 = scmp.le.s32.totalorder 1, %s12
    %p224 = scmp.lt.s32.totalorder %s12, 3
    %p225 = pnand %p223, %p224
    %p226 = pneg %p225
    // Predicated region
    $region9: #{tpu_custom_call.1} parent=5 // pred_check
      _
    $region10: #{tpu_custom_call.1} parent=5 // pred_check_branch
      %228 = sbr.rel (%p225) target = $region12
    $region11: #{tpu_custom_call.1} parent=5 // pred_region
      %s229 = ssub.s32 %s12, 1
      // Predicated region
      $region13: #{tpu_custom_call.1} parent=11 // pred_check
        %p230 = pneg %p145
      $region14: #{tpu_custom_call.1} parent=11 // pred_check_branch
        %232 = sbr.rel (%p230) target = $region16
      $region15: #{tpu_custom_call.1} parent=11 // pred_region
        _
      $region16: #{tpu_custom_call.1} parent=11 // pred_fallthru
        _
      // Predicated region
      $region17: #{tpu_custom_call.1} parent=11 // pred_check
        %p233 = pneg %p166
      $region18: #{tpu_custom_call.1} parent=11 // pred_check_branch
        %235 = sbr.rel (%p233) target = $region20
      $region19: #{tpu_custom_call.1} parent=11 // pred_region
        _
      $region20: #{tpu_custom_call.1} parent=11 // pred_fallthru
        _
      // Predicated region
      $region21: #{tpu_custom_call.1} parent=11 // pred_check
        %p236 = pneg %p187
      $region22: #{tpu_custom_call.1} parent=11 // pred_check_branch
        %238 = sbr.rel (%p236) target = $region24
      $region23: #{tpu_custom_call.1} parent=11 // pred_region
        _
      $region24: #{tpu_custom_call.1} parent=11 // pred_fallthru
        _
    $region12: #{tpu_custom_call.1} parent=5 // pred_fallthru
      _
    %p239 = scmp.lt.s32.totalorder %s12, 2
    // Predicated region
    $region25: #{tpu_custom_call.1} parent=5 // pred_check
      %p240 = pneg %p239
    $region26: #{tpu_custom_call.1} parent=5 // pred_check_branch
      %242 = sbr.rel (%p240) target = $region28
    $region27: #{tpu_custom_call.1} parent=5 // pred_region
      // Predicated region
      $region29: #{tpu_custom_call.1} parent=27 // pred_check
        %p243 = pneg %p46
      $region30: #{tpu_custom_call.1} parent=27 // pred_check_branch
        %245 = sbr.rel (%p243) target = $region32
      $region31: #{tpu_custom_call.1} parent=27 // pred_region
        %s246 = smul.u32 16, %s20
        %p247 = scmp.lt.s32.totalorder %s19, 1
        %s248 = scalar_select %p247, %s19, 1
        %p249 = scmp.lt.s32.totalorder %s246, 15
        %s250 = scalar_select %p249, %s246, 15
        %s251 = smul.addr %s250, 2
        %s252 = smul.addr %s248, 32
        %s253 = sadd.s32 %s251, %s252
        %s254 = smul.addr %s253, 8
        %s255 = scalar_lea.vmem %s0, %s254
        %s256 = smul.u32 16, %s20
      $region32: #{tpu_custom_call.1} parent=27 // pred_fallthru
        _
      // Predicated region
      $region33: #{tpu_custom_call.1} parent=27 // pred_check
        %p257 = pneg %p82
      $region34: #{tpu_custom_call.1} parent=27 // pred_check_branch
        %259 = sbr.rel (%p257) target = $region36
      $region35: #{tpu_custom_call.1} parent=27 // pred_region
        %s260 = smul.u32 %s20, 16
        %s261 = ssub.s32 %s260, 1
        %p262 = scmp.gt.s32.totalorder %s261, 0
        %s263 = scalar_select %p262, %s261, 0
        %p264 = scmp.lt.s32.totalorder %s19, 1
        %s265 = scalar_select %p264, %s19, 1
        %p266 = scmp.lt.s32.totalorder %s263, 15
        %s267 = scalar_select %p266, %s263, 15
        %s268 = smul.addr %s267, 2
        %s269 = smul.addr %s265, 32
        %s270 = sadd.s32 %s268, %s269
        %s271 = smul.addr %s270, 8
        %s272 = scalar_lea.vmem %s1, %s271
        %s273 = smul.u32 %s20, 16
        %s274 = ssub.s32 %s273, 1
        %p275 = scmp.gt.s32.totalorder %s274, 0
        %s276 = scalar_select %p275, %s274, 0
      $region36: #{tpu_custom_call.1} parent=27 // pred_fallthru
        _
      // Predicated region
      $region37: #{tpu_custom_call.1} parent=27 // pred_check
        %p277 = pneg %p118
      $region38: #{tpu_custom_call.1} parent=27 // pred_check_branch
        %279 = sbr.rel (%p277) target = $region40
      $region39: #{tpu_custom_call.1} parent=27 // pred_region
        %s280 = smul.u32 %s20, 16
        %s281 = sadd.s32 %s280, 16
        %p282 = scmp.lt.s32.totalorder %s281, 15
        %s283 = scalar_select %p282, %s281, 15
        %p284 = scmp.lt.s32.totalorder %s19, 1
        %s285 = scalar_select %p284, %s19, 1
        %p286 = scmp.lt.s32.totalorder %s283, 15
        %s287 = scalar_select %p286, %s283, 15
        %s288 = smul.addr %s287, 2
        %s289 = smul.addr %s285, 32
        %s290 = sadd.s32 %s288, %s289
        %s291 = smul.addr %s290, 8
        %s292 = scalar_lea.vmem %s2, %s291
        %s293 = smul.u32 %s20, 16
        %s294 = sadd.s32 %s293, 16
        %p295 = scmp.lt.s32.totalorder %s294, 15
        %s296 = scalar_select %p295, %s294, 15
      $region40: #{tpu_custom_call.1} parent=27 // pred_fallthru
        _
    $region28: #{tpu_custom_call.1} parent=5 // pred_fallthru
      _
    %p297 = scmp.le.s32.totalorder 1, %s12
    %p298 = scmp.lt.s32.totalorder %s12, 3
    %p299 = pnand %p297, %p298
    %p300 = pneg %p299
    // Predicated region
    $region41: #{tpu_custom_call.1} parent=5 // pred_check
      _
    $region42: #{tpu_custom_call.1} parent=5 // pred_check_branch
      %302 = sbr.rel (%p299) target = $region44
    $region43: #{tpu_custom_call.1} parent=5 // pred_region
      %s303 = ssub.s32 %s12, 1
      %s304 = smul.u32 16, %s22
      %p305 = scmp.lt.s32.totalorder %s21, 1
      %s306 = scalar_select %p305, %s21, 1
      %p307 = scmp.lt.s32.totalorder %s304, 15
      %s308 = scalar_select %p307, %s304, 15
      %s309 = smul.addr %s308, 2
      %s310 = smul.addr %s306, 32
      %s311 = sadd.s32 %s309, %s310
      %s312 = smul.addr %s311, 8
      %s313 = scalar_lea.vmem %s0, %s312
      %p314 = pneg %p52
      %p315 = pneg %p49
      %s316 = smul.u32 %s22, 16
      %s317 = ssub.s32 %s316, 1
      %p318 = scmp.gt.s32.totalorder %s317, 0
      %s319 = scalar_select %p318, %s317, 0
      %p320 = scmp.lt.s32.totalorder %s21, 1
      %s321 = scalar_select %p320, %s21, 1
      %p322 = scmp.lt.s32.totalorder %s319, 15
      %s323 = scalar_select %p322, %s319, 15
      %s324 = smul.addr %s323, 2
      %s325 = smul.addr %s321, 32
      %s326 = sadd.s32 %s324, %s325
      %s327 = smul.addr %s326, 8
      %s328 = scalar_lea.vmem %s1, %s327
      %p329 = pneg %p88
      %p330 = pneg %p85
      %s331 = smul.u32 %s22, 16
      %s332 = sadd.s32 %s331, 16
      %p333 = scmp.lt.s32.totalorder %s332, 15
      %s334 = scalar_select %p333, %s332, 15
      %p335 = scmp.lt.s32.totalorder %s21, 1
      %s336 = scalar_select %p335, %s21, 1
      %p337 = scmp.lt.s32.totalorder %s334, 15
      %s338 = scalar_select %p337, %s334, 15
      %s339 = smul.addr %s338, 2
      %s340 = smul.addr %s336, 32
      %s341 = sadd.s32 %s339, %s340
      %s342 = smul.addr %s341, 8
      %s343 = scalar_lea.vmem %s2, %s342
      %p344 = pneg %p124
      %p345 = pneg %p121
      %p346 = pneg %p145
      %p347 = pneg %p142
      %p348 = pneg %p166
      %p349 = pneg %p163
      %p350 = pneg %p187
      %p351 = pneg %p184
      %p352 = pneg %p215
      %p353 = pneg %p212
      %s354 = smul.u32 16, %s22
      %p355 = scmp.lt.s32.totalorder %s21, 1
      %s356 = scalar_select %p355, %s21, 1
      %p357 = scmp.lt.s32.totalorder %s354, 15
      %s358 = scalar_select %p357, %s354, 15
      %s359 = smul.addr %s358, 2
      %s360 = smul.addr %s356, 32
      %s361 = sadd.s32 %s359, %s360
      %s362 = smul.addr %s361, 8
      %s363 = scalar_lea.vmem %s6, %s362
      %s364 = smul.u32 16, %s22
      %p365 = scmp.lt.s32.totalorder %s21, 1
      %s366 = scalar_select %p365, %s21, 1
      %p367 = scmp.lt.s32.totalorder %s364, 15
      %s368 = scalar_select %p367, %s364, 15
      %s369 = smul.addr %s368, 2
      %s370 = smul.addr %s366, 32
      %s371 = sadd.s32 %s369, %s370
      %s372 = smul.addr %s371, 8
      %s373 = scalar_lea.vmem %s0, %s372
      %s374 = smul.u32 16, %s22
      %s375 = smul.u32 %s22, 16
      %s376 = ssub.s32 %s375, 1
      %p377 = scmp.gt.s32.totalorder %s376, 0
      %s378 = scalar_select %p377, %s376, 0
      %p379 = scmp.lt.s32.totalorder %s21, 1
      %s380 = scalar_select %p379, %s21, 1
      %p381 = scmp.lt.s32.totalorder %s378, 15
      %s382 = scalar_select %p381, %s378, 15
      %s383 = smul.addr %s382, 2
      %s384 = smul.addr %s380, 32
      %s385 = sadd.s32 %s383, %s384
      %s386 = smul.addr %s385, 8
      %s387 = scalar_lea.vmem %s1, %s386
      %s388 = smul.u32 %s22, 16
      %s389 = ssub.s32 %s388, 1
      %p390 = scmp.gt.s32.totalorder %s389, 0
      %s391 = scalar_select %p390, %s389, 0
      %s392 = smul.u32 %s22, 16
      %s393 = sadd.s32 %s392, 16
      %p394 = scmp.lt.s32.totalorder %s393, 15
      %s395 = scalar_select %p394, %s393, 15
      %p396 = scmp.lt.s32.totalorder %s21, 1
      %s397 = scalar_select %p396, %s21, 1
      %p398 = scmp.lt.s32.totalorder %s395, 15
      %s399 = scalar_select %p398, %s395, 15
      %s400 = smul.addr %s399, 2
      %s401 = smul.addr %s397, 32
      %s402 = sadd.s32 %s400, %s401
      %s403 = smul.addr %s402, 8
      %s404 = scalar_lea.vmem %s2, %s403
      %s405 = smul.u32 %s22, 16
      %s406 = sadd.s32 %s405, 16
      %p407 = scmp.lt.s32.totalorder %s406, 15
      %s408 = scalar_select %p407, %s406, 15
      %s409 = smul.u32 16, %s22
      %p410 = scmp.lt.s32.totalorder %s21, 1
      %s411 = scalar_select %p410, %s21, 1
      %p412 = scmp.lt.s32.totalorder %s409, 15
      %s413 = scalar_select %p412, %s409, 15
      %s414 = smul.addr %s413, 2
      %s415 = smul.addr %s411, 32
      %s416 = sadd.s32 %s414, %s415
      %s417 = smul.addr %s416, 8
      %s418 = scalar_lea.vmem %s6, %s417
      %s419 = smul.u32 16, %s22
      %vm420 = vcmask 24576
      %421 = vst.msk [vmem:[#allocation2] sm:$0x1] %vm420, 0.0
      %422 = vst.msk [vmem:[#allocation2 + $0x18] sm:$0x1] %vm420, 0.0
      %423 = vst.msk [vmem:[#allocation2 + $0x30] sm:$0x1] %vm420, 0.0
      %424 = vst.msk [vmem:[#allocation2 + $0x48] sm:$0x1] %vm420, 0.0
      %425 = vst.msk [vmem:[#allocation2 + $0x60] sm:$0x1] %vm420, 0.0
      %426 = vst.msk [vmem:[#allocation2 + $0x78] sm:$0x1] %vm420, 0.0
      %427 = vst.msk [vmem:[#allocation2 + $0x90] sm:$0x1] %vm420, 0.0
      %428 = vst.msk [vmem:[#allocation2 + $0xa8] sm:$0x1] %vm420, 0.0
      %429 = vst.msk [vmem:[#allocation2 + $0xc0] sm:$0x1] %vm420, 0.0
      %430 = vst.msk [vmem:[#allocation2 + $0xd8] sm:$0x1] %vm420, 0.0
      %431 = vst.msk [vmem:[#allocation2 + $0xf0] sm:$0x1] %vm420, 0.0
      %432 = vst.msk [vmem:[#allocation2 + $0x108] sm:$0x1] %vm420, 0.0
      %433 = vst.msk [vmem:[#allocation2 + $0x120] sm:$0x1] %vm420, 0.0
      %434 = vst.msk [vmem:[#allocation2 + $0x138] sm:$0x1] %vm420, 0.0
      %435 = vst.msk [vmem:[#allocation2 + $0x150] sm:$0x1] %vm420, 0.0
      %436 = vst.msk [vmem:[#allocation2 + $0x168] sm:$0x1] %vm420, 0.0
      %437 = vst.msk [vmem:[#allocation2 + $0x180] sm:$0x1] %vm420, 0.0
      %438 = vst.msk [vmem:[#allocation2 + $0x198] sm:$0x1] %vm420, 0.0
      %439 = vst.msk [vmem:[#allocation2 + $0x11] sm:$0x1] %vm420, 0.0
      %440 = vst.msk [vmem:[#allocation2 + $0x29] sm:$0x1] %vm420, 0.0
      %441 = vst.msk [vmem:[#allocation2 + $0x41] sm:$0x1] %vm420, 0.0
      %442 = vst.msk [vmem:[#allocation2 + $0x59] sm:$0x1] %vm420, 0.0
      %443 = vst.msk [vmem:[#allocation2 + $0x71] sm:$0x1] %vm420, 0.0
      %444 = vst.msk [vmem:[#allocation2 + $0x89] sm:$0x1] %vm420, 0.0
      %445 = vst.msk [vmem:[#allocation2 + $0xa1] sm:$0x1] %vm420, 0.0
      %446 = vst.msk [vmem:[#allocation2 + $0xb9] sm:$0x1] %vm420, 0.0
      %447 = vst.msk [vmem:[#allocation2 + $0xd1] sm:$0x1] %vm420, 0.0
      %448 = vst.msk [vmem:[#allocation2 + $0xe9] sm:$0x1] %vm420, 0.0
      %449 = vst.msk [vmem:[#allocation2 + $0x101] sm:$0x1] %vm420, 0.0
      %450 = vst.msk [vmem:[#allocation2 + $0x119] sm:$0x1] %vm420, 0.0
      %451 = vst.msk [vmem:[#allocation2 + $0x131] sm:$0x1] %vm420, 0.0
      %452 = vst.msk [vmem:[#allocation2 + $0x149] sm:$0x1] %vm420, 0.0
      %453 = vst.msk [vmem:[#allocation2 + $0x161] sm:$0x1] %vm420, 0.0
      %454 = vst.msk [vmem:[#allocation2 + $0x179] sm:$0x1] %vm420, 0.0
      %455 = vst.msk [vmem:[#allocation2 + $0x191] sm:$0x1] %vm420, 0.0
      %456 = vst.msk [vmem:[#allocation2 + $0x1a9] sm:$0x1] %vm420, 0.0
      %p457 = scmp.gt.s32.totalorder %s22, 0
      %s458 = scalar_select %p457, 1, 0
      %s459 = scvt.s32.f32 %s458
      %p460 = scmp.lt.s32.totalorder %s22, 0
      %s461 = scalar_select %p460, 1, 0
      %s462 = scvt.s32.f32 %s461
      %v463 = vld [vmem:[%s387] sm:$0xff]
      %v464 = vld [vmem:[%s387 + $0x8] sm:$0xff]
      %v465 = vstv %s459
      %v466 = vmul.f32 %v463, %v465
      %v467 = vmul.f32 %v464, %v465
      %vm468 = vcmask 31744
      %469 = vst.msk [vmem:[#allocation2 + $0x1] sm:$0xff] %vm468, %v466
      %470 = vst.msk [vmem:[#allocation2 + $0x9] sm:$0xff] %vm468, %v467
      %v471 = vld [vmem:[%s404] sm:$0xff]
      %v472 = vld [vmem:[%s404 + $0x8] sm:$0xff]
      %v473 = vstv %s462
      %v474 = vmul.f32 %v471, %v473
      %v475 = vmul.f32 %v472, %v473
      %s476 = scalar_lea.vmem [#allocation2], 408
      %477 = vst.msk [vmem:[%s476 + $0x1] sm:$0xff] %vm468, %v474
      %478 = vst.msk [vmem:[%s476 + $0x9] sm:$0xff] %vm468, %v475
      %v479 = vld [vmem:[%s373] sm:$0xff]
      %v480 = vld [vmem:[%s373 + $0x8] sm:$0xff]
      %v481 = vld [vmem:[%s373 + $0x10] sm:$0xff]
      %v482 = vld [vmem:[%s373 + $0x18] sm:$0xff]
      %v483 = vld [vmem:[%s373 + $0x20] sm:$0xff]
      %v484 = vld [vmem:[%s373 + $0x28] sm:$0xff]
      %v485 = vld [vmem:[%s373 + $0x30] sm:$0xff]
      %v486 = vld [vmem:[%s373 + $0x38] sm:$0xff]
      %v487 = vld [vmem:[%s373 + $0x40] sm:$0xff]
      %v488 = vld [vmem:[%s373 + $0x48] sm:$0xff]
      %v489 = vld [vmem:[%s373 + $0x50] sm:$0xff]
      %v490 = vld [vmem:[%s373 + $0x58] sm:$0xff]
      %v491 = vld [vmem:[%s373 + $0x60] sm:$0xff]
      %v492 = vld [vmem:[%s373 + $0x68] sm:$0xff]
      %v493 = vld [vmem:[%s373 + $0x70] sm:$0xff]
      %v494 = vld [vmem:[%s373 + $0x78] sm:$0xff]
      %v495 = vld [vmem:[%s373 + $0x80] sm:$0xff]
      %v496 = vld [vmem:[%s373 + $0x88] sm:$0xff]
      %v497 = vld [vmem:[%s373 + $0x90] sm:$0xff]
      %v498 = vld [vmem:[%s373 + $0x98] sm:$0xff]
      %v499 = vld [vmem:[%s373 + $0xa0] sm:$0xff]
      %v500 = vld [vmem:[%s373 + $0xa8] sm:$0xff]
      %v501 = vld [vmem:[%s373 + $0xb0] sm:$0xff]
      %v502 = vld [vmem:[%s373 + $0xb8] sm:$0xff]
      %v503 = vld [vmem:[%s373 + $0xc0] sm:$0xff]
      %v504 = vld [vmem:[%s373 + $0xc8] sm:$0xff]
      %v505 = vld [vmem:[%s373 + $0xd0] sm:$0xff]
      %v506 = vld [vmem:[%s373 + $0xd8] sm:$0xff]
      %v507 = vld [vmem:[%s373 + $0xe0] sm:$0xff]
      %v508 = vld [vmem:[%s373 + $0xe8] sm:$0xff]
      %v509 = vld [vmem:[%s373 + $0xf0] sm:$0xff]
      %v510 = vld [vmem:[%s373 + $0xf8] sm:$0xff]
      %s511 = scalar_lea.vmem [#allocation2], 24
      %512 = vst.msk [vmem:[%s511 + $0x1] sm:$0xff] %vm468, %v479
      %513 = vst.msk [vmem:[%s511 + $0x9] sm:$0xff] %vm468, %v480
      %514 = vst.msk [vmem:[%s511 + $0x19] sm:$0xff] %vm468, %v481
      %515 = vst.msk [vmem:[%s511 + $0x21] sm:$0xff] %vm468, %v482
      %516 = vst.msk [vmem:[%s511 + $0x31] sm:$0xff] %vm468, %v483
      %517 = vst.msk [vmem:[%s511 + $0x39] sm:$0xff] %vm468, %v484
      %518 = vst.msk [vmem:[%s511 + $0x49] sm:$0xff] %vm468, %v485
      %519 = vst.msk [vmem:[%s511 + $0x51] sm:$0xff] %vm468, %v486
      %520 = vst.msk [vmem:[%s511 + $0x61] sm:$0xff] %vm468, %v487
      %521 = vst.msk [vmem:[%s511 + $0x69] sm:$0xff] %vm468, %v488
      %522 = vst.msk [vmem:[%s511 + $0x79] sm:$0xff] %vm468, %v489
      %523 = vst.msk [vmem:[%s511 + $0x81] sm:$0xff] %vm468, %v490
      %524 = vst.msk [vmem:[%s511 + $0x91] sm:$0xff] %vm468, %v491
      %525 = vst.msk [vmem:[%s511 + $0x99] sm:$0xff] %vm468, %v492
      %526 = vst.msk [vmem:[%s511 + $0xa9] sm:$0xff] %vm468, %v493
      %527 = vst.msk [vmem:[%s511 + $0xb1] sm:$0xff] %vm468, %v494
      %528 = vst.msk [vmem:[%s511 + $0xc1] sm:$0xff] %vm468, %v495
      %529 = vst.msk [vmem:[%s511 + $0xc9] sm:$0xff] %vm468, %v496
      %530 = vst.msk [vmem:[%s511 + $0xd9] sm:$0xff] %vm468, %v497
      %531 = vst.msk [vmem:[%s511 + $0xe1] sm:$0xff] %vm468, %v498
      %532 = vst.msk [vmem:[%s511 + $0xf1] sm:$0xff] %vm468, %v499
      %533 = vst.msk [vmem:[%s511 + $0xf9] sm:$0xff] %vm468, %v500
      %534 = vst.msk [vmem:[%s511 + $0x109] sm:$0xff] %vm468, %v501
      %535 = vst.msk [vmem:[%s511 + $0x111] sm:$0xff] %vm468, %v502
      %536 = vst.msk [vmem:[%s511 + $0x121] sm:$0xff] %vm468, %v503
      %537 = vst.msk [vmem:[%s511 + $0x129] sm:$0xff] %vm468, %v504
      %538 = vst.msk [vmem:[%s511 + $0x139] sm:$0xff] %vm468, %v505
      %539 = vst.msk [vmem:[%s511 + $0x141] sm:$0xff] %vm468, %v506
      %540 = vst.msk [vmem:[%s511 + $0x151] sm:$0xff] %vm468, %v507
      %541 = vst.msk [vmem:[%s511 + $0x159] sm:$0xff] %vm468, %v508
      %542 = vst.msk [vmem:[%s511 + $0x169] sm:$0xff] %vm468, %v509
      %543 = vst.msk [vmem:[%s511 + $0x171] sm:$0xff] %vm468, %v510
      %v544 = vld [vmem:[#allocation2] sm:$0xff]
      %v545 = vld [vmem:[#allocation2 + $0x8] sm:$0xff]
      %v546 = vld [vmem:[#allocation2 + $0x18] sm:$0xff]
      %v547 = vld [vmem:[#allocation2 + $0x20] sm:$0xff]
      %v548 = vld [vmem:[#allocation2 + $0x30] sm:$0xff]
      %v549 = vld [vmem:[#allocation2 + $0x38] sm:$0xff]
      %v550 = vld [vmem:[#allocation2 + $0x48] sm:$0xff]
      %v551 = vld [vmem:[#allocation2 + $0x50] sm:$0xff]
      %v552 = vld [vmem:[#allocation2 + $0x60] sm:$0xff]
      %v553 = vld [vmem:[#allocation2 + $0x68] sm:$0xff]
      %v554 = vld [vmem:[#allocation2 + $0x78] sm:$0xff]
      %v555 = vld [vmem:[#allocation2 + $0x80] sm:$0xff]
      %v556 = vld [vmem:[#allocation2 + $0x90] sm:$0xff]
      %v557 = vld [vmem:[#allocation2 + $0x98] sm:$0xff]
      %v558 = vld [vmem:[#allocation2 + $0xa8] sm:$0xff]
      %v559 = vld [vmem:[#allocation2 + $0xb0] sm:$0xff]
      %v560 = vld [vmem:[#allocation2 + $0xc0] sm:$0xff]
      %v561 = vld [vmem:[#allocation2 + $0xc8] sm:$0xff]
      %v562 = vld [vmem:[#allocation2 + $0xd8] sm:$0xff]
      %v563 = vld [vmem:[#allocation2 + $0xe0] sm:$0xff]
      %v564 = vld [vmem:[#allocation2 + $0xf0] sm:$0xff]
      %v565 = vld [vmem:[#allocation2 + $0xf8] sm:$0xff]
      %v566 = vld [vmem:[#allocation2 + $0x108] sm:$0xff]
      %v567 = vld [vmem:[#allocation2 + $0x110] sm:$0xff]
      %v568 = vld [vmem:[#allocation2 + $0x120] sm:$0xff]
      %v569 = vld [vmem:[#allocation2 + $0x128] sm:$0xff]
      %v570 = vld [vmem:[#allocation2 + $0x138] sm:$0xff]
      %v571 = vld [vmem:[#allocation2 + $0x140] sm:$0xff]
      %v572 = vld [vmem:[#allocation2 + $0x150] sm:$0xff]
      %v573 = vld [vmem:[#allocation2 + $0x158] sm:$0xff]
      %v574 = vld [vmem:[#allocation2 + $0x168] sm:$0xff]
      %v575 = vld [vmem:[#allocation2 + $0x170] sm:$0xff]
      %v576 = vld [vmem:[%s3] sm:$0x1]
      %v577 = vperm.slane %v576, 0
      %v578 = vmul.f32 %v544, %v577
      %v579 = vmul.f32 %v545, %v577
      %v580 = vmul.f32 %v546, %v577
      %v581 = vmul.f32 %v547, %v577
      %v582 = vmul.f32 %v548, %v577
      %v583 = vmul.f32 %v549, %v577
      %v584 = vmul.f32 %v550, %v577
      %v585 = vmul.f32 %v551, %v577
      %v586 = vmul.f32 %v552, %v577
      %v587 = vmul.f32 %v553, %v577
      %v588 = vmul.f32 %v554, %v577
      %v589 = vmul.f32 %v555, %v577
      %v590 = vmul.f32 %v556, %v577
      %v591 = vmul.f32 %v557, %v577
      %v592 = vmul.f32 %v558, %v577
      %v593 = vmul.f32 %v559, %v577
      %v594 = vmul.f32 %v560, %v577
      %v595 = vmul.f32 %v561, %v577
      %v596 = vmul.f32 %v562, %v577
      %v597 = vmul.f32 %v563, %v577
      %v598 = vmul.f32 %v564, %v577
      %v599 = vmul.f32 %v565, %v577
      %v600 = vmul.f32 %v566, %v577
      %v601 = vmul.f32 %v567, %v577
      %v602 = vmul.f32 %v568, %v577
      %v603 = vmul.f32 %v569, %v577
      %v604 = vmul.f32 %v570, %v577
      %v605 = vmul.f32 %v571, %v577
      %v606 = vmul.f32 %v572, %v577
      %v607 = vmul.f32 %v573, %v577
      %v608 = vmul.f32 %v574, %v577
      %v609 = vmul.f32 %v575, %v577
      %610 = vst.msk [vmem:[#allocation3] sm:$0xff] %vm468, %v578
      %611 = vst.msk [vmem:[#allocation3 + $0x8] sm:$0xff] %vm468, %v579
      %612 = vst.msk [vmem:[#allocation3 + $0x10] sm:$0xff] %vm468, %v580
      %613 = vst.msk [vmem:[#allocation3 + $0x18] sm:$0xff] %vm468, %v581
      %614 = vst.msk [vmem:[#allocation3 + $0x20] sm:$0xff] %vm468, %v582
      %615 = vst.msk [vmem:[#allocation3 + $0x28] sm:$0xff] %vm468, %v583
      %616 = vst.msk [vmem:[#allocation3 + $0x30] sm:$0xff] %vm468, %v584
      %617 = vst.msk [vmem:[#allocation3 + $0x38] sm:$0xff] %vm468, %v585
      %618 = vst.msk [vmem:[#allocation3 + $0x40] sm:$0xff] %vm468, %v586
      %619 = vst.msk [vmem:[#allocation3 + $0x48] sm:$0xff] %vm468, %v587
      %620 = vst.msk [vmem:[#allocation3 + $0x50] sm:$0xff] %vm468, %v588
      %621 = vst.msk [vmem:[#allocation3 + $0x58] sm:$0xff] %vm468, %v589
      %622 = vst.msk [vmem:[#allocation3 + $0x60] sm:$0xff] %vm468, %v590
      %623 = vst.msk [vmem:[#allocation3 + $0x68] sm:$0xff] %vm468, %v591
      %624 = vst.msk [vmem:[#allocation3 + $0x70] sm:$0xff] %vm468, %v592
      %625 = vst.msk [vmem:[#allocation3 + $0x78] sm:$0xff] %vm468, %v593
      %626 = vst.msk [vmem:[#allocation3 + $0x80] sm:$0xff] %vm468, %v594
      %627 = vst.msk [vmem:[#allocation3 + $0x88] sm:$0xff] %vm468, %v595
      %628 = vst.msk [vmem:[#allocation3 + $0x90] sm:$0xff] %vm468, %v596
      %629 = vst.msk [vmem:[#allocation3 + $0x98] sm:$0xff] %vm468, %v597
      %630 = vst.msk [vmem:[#allocation3 + $0xa0] sm:$0xff] %vm468, %v598
      %631 = vst.msk [vmem:[#allocation3 + $0xa8] sm:$0xff] %vm468, %v599
      %632 = vst.msk [vmem:[#allocation3 + $0xb0] sm:$0xff] %vm468, %v600
      %633 = vst.msk [vmem:[#allocation3 + $0xb8] sm:$0xff] %vm468, %v601
      %634 = vst.msk [vmem:[#allocation3 + $0xc0] sm:$0xff] %vm468, %v602
      %635 = vst.msk [vmem:[#allocation3 + $0xc8] sm:$0xff] %vm468, %v603
      %636 = vst.msk [vmem:[#allocation3 + $0xd0] sm:$0xff] %vm468, %v604
      %637 = vst.msk [vmem:[#allocation3 + $0xd8] sm:$0xff] %vm468, %v605
      %638 = vst.msk [vmem:[#allocation3 + $0xe0] sm:$0xff] %vm468, %v606
      %639 = vst.msk [vmem:[#allocation3 + $0xe8] sm:$0xff] %vm468, %v607
      %640 = vst.msk [vmem:[#allocation3 + $0xf0] sm:$0xff] %vm468, %v608
      %641 = vst.msk [vmem:[#allocation3 + $0xf8] sm:$0xff] %vm468, %v609
      %v642 = vld [vmem:[#allocation2 + $0x1] sm:$0xff]
      %v643 = vld [vmem:[#allocation2 + $0x9] sm:$0xff]
      %v644 = vld [vmem:[#allocation2 + $0x19] sm:$0xff]
      %v645 = vld [vmem:[#allocation2 + $0x21] sm:$0xff]
      %v646 = vld [vmem:[#allocation2 + $0x31] sm:$0xff]
      %v647 = vld [vmem:[#allocation2 + $0x39] sm:$0xff]
      %v648 = vld [vmem:[#allocation2 + $0x49] sm:$0xff]
      %v649 = vld [vmem:[#allocation2 + $0x51] sm:$0xff]
      %v650 = vld [vmem:[#allocation2 + $0x61] sm:$0xff]
      %v651 = vld [vmem:[#allocation2 + $0x69] sm:$0xff]
      %v652 = vld [vmem:[#allocation2 + $0x79] sm:$0xff]
      %v653 = vld [vmem:[#allocation2 + $0x81] sm:$0xff]
      %v654 = vld [vmem:[#allocation2 + $0x91] sm:$0xff]
      %v655 = vld [vmem:[#allocation2 + $0x99] sm:$0xff]
      %v656 = vld [vmem:[#allocation2 + $0xa9] sm:$0xff]
      %v657 = vld [vmem:[#allocation2 + $0xb1] sm:$0xff]
      %v658 = vld [vmem:[#allocation2 + $0xc1] sm:$0xff]
      %v659 = vld [vmem:[#allocation2 + $0xc9] sm:$0xff]
      %v660 = vld [vmem:[#allocation2 + $0xd9] sm:$0xff]
      %v661 = vld [vmem:[#allocation2 + $0xe1] sm:$0xff]
      %v662 = vld [vmem:[#allocation2 + $0xf1] sm:$0xff]
      %v663 = vld [vmem:[#allocation2 + $0xf9] sm:$0xff]
      %v664 = vld [vmem:[#allocation2 + $0x109] sm:$0xff]
      %v665 = vld [vmem:[#allocation2 + $0x111] sm:$0xff]
      %v666 = vld [vmem:[#allocation2 + $0x121] sm:$0xff]
      %v667 = vld [vmem:[#allocation2 + $0x129] sm:$0xff]
      %v668 = vld [vmem:[#allocation2 + $0x139] sm:$0xff]
      %v669 = vld [vmem:[#allocation2 + $0x141] sm:$0xff]
      %v670 = vld [vmem:[#allocation2 + $0x151] sm:$0xff]
      %v671 = vld [vmem:[#allocation2 + $0x159] sm:$0xff]
      %v672 = vld [vmem:[#allocation2 + $0x169] sm:$0xff]
      %v673 = vld [vmem:[#allocation2 + $0x171] sm:$0xff]
      %v674 = vld [vmem:[%s3 + $0x1] sm:$0x1]
      %v675 = vperm.slane %v674, 0
      %v676 = vmul.f32 %v642, %v675
      %v677 = vmul.f32 %v643, %v675
      %v678 = vmul.f32 %v644, %v675
      %v679 = vmul.f32 %v645, %v675
      %v680 = vmul.f32 %v646, %v675
      %v681 = vmul.f32 %v647, %v675
      %v682 = vmul.f32 %v648, %v675
      %v683 = vmul.f32 %v649, %v675
      %v684 = vmul.f32 %v650, %v675
      %v685 = vmul.f32 %v651, %v675
      %v686 = vmul.f32 %v652, %v675
      %v687 = vmul.f32 %v653, %v675
      %v688 = vmul.f32 %v654, %v675
      %v689 = vmul.f32 %v655, %v675
      %v690 = vmul.f32 %v656, %v675
      %v691 = vmul.f32 %v657, %v675
      %v692 = vmul.f32 %v658, %v675
      %v693 = vmul.f32 %v659, %v675
      %v694 = vmul.f32 %v660, %v675
      %v695 = vmul.f32 %v661, %v675
      %v696 = vmul.f32 %v662, %v675
      %v697 = vmul.f32 %v663, %v675
      %v698 = vmul.f32 %v664, %v675
      %v699 = vmul.f32 %v665, %v675
      %v700 = vmul.f32 %v666, %v675
      %v701 = vmul.f32 %v667, %v675
      %v702 = vmul.f32 %v668, %v675
      %v703 = vmul.f32 %v669, %v675
      %v704 = vmul.f32 %v670, %v675
      %v705 = vmul.f32 %v671, %v675
      %v706 = vmul.f32 %v672, %v675
      %v707 = vmul.f32 %v673, %v675
      %v708 = vld [vmem:[#allocation3] sm:$0xff]
      %v709 = vld [vmem:[#allocation3 + $0x8] sm:$0xff]
      %v710 = vld [vmem:[#allocation3 + $0x10] sm:$0xff]
      %v711 = vld [vmem:[#allocation3 + $0x18] sm:$0xff]
      %v712 = vld [vmem:[#allocation3 + $0x20] sm:$0xff]
      %v713 = vld [vmem:[#allocation3 + $0x28] sm:$0xff]
      %v714 = vld [vmem:[#allocation3 + $0x30] sm:$0xff]
      %v715 = vld [vmem:[#allocation3 + $0x38] sm:$0xff]
      %v716 = vld [vmem:[#allocation3 + $0x40] sm:$0xff]
      %v717 = vld [vmem:[#allocation3 + $0x48] sm:$0xff]
      %v718 = vld [vmem:[#allocation3 + $0x50] sm:$0xff]
      %v719 = vld [vmem:[#allocation3 + $0x58] sm:$0xff]
      %v720 = vld [vmem:[#allocation3 + $0x60] sm:$0xff]
      %v721 = vld [vmem:[#allocation3 + $0x68] sm:$0xff]
      %v722 = vld [vmem:[#allocation3 + $0x70] sm:$0xff]
      %v723 = vld [vmem:[#allocation3 + $0x78] sm:$0xff]
      %v724 = vld [vmem:[#allocation3 + $0x80] sm:$0xff]
      %v725 = vld [vmem:[#allocation3 + $0x88] sm:$0xff]
      %v726 = vld [vmem:[#allocation3 + $0x90] sm:$0xff]
      %v727 = vld [vmem:[#allocation3 + $0x98] sm:$0xff]
      %v728 = vld [vmem:[#allocation3 + $0xa0] sm:$0xff]
      %v729 = vld [vmem:[#allocation3 + $0xa8] sm:$0xff]
      %v730 = vld [vmem:[#allocation3 + $0xb0] sm:$0xff]
      %v731 = vld [vmem:[#allocation3 + $0xb8] sm:$0xff]
      %v732 = vld [vmem:[#allocation3 + $0xc0] sm:$0xff]
      %v733 = vld [vmem:[#allocation3 + $0xc8] sm:$0xff]
      %v734 = vld [vmem:[#allocation3 + $0xd0] sm:$0xff]
      %v735 = vld [vmem:[#allocation3 + $0xd8] sm:$0xff]
      %v736 = vld [vmem:[#allocation3 + $0xe0] sm:$0xff]
      %v737 = vld [vmem:[#allocation3 + $0xe8] sm:$0xff]
      %v738 = vld [vmem:[#allocation3 + $0xf0] sm:$0xff]
      %v739 = vld [vmem:[#allocation3 + $0xf8] sm:$0xff]
      %v740 = vadd.f32 %v708, %v676
      %v741 = vadd.f32 %v709, %v677
      %v742 = vadd.f32 %v710, %v678
      %v743 = vadd.f32 %v711, %v679
      %v744 = vadd.f32 %v712, %v680
      %v745 = vadd.f32 %v713, %v681
      %v746 = vadd.f32 %v714, %v682
      %v747 = vadd.f32 %v715, %v683
      %v748 = vadd.f32 %v716, %v684
      %v749 = vadd.f32 %v717, %v685
      %v750 = vadd.f32 %v718, %v686
      %v751 = vadd.f32 %v719, %v687
      %v752 = vadd.f32 %v720, %v688
      %v753 = vadd.f32 %v721, %v689
      %v754 = vadd.f32 %v722, %v690
      %v755 = vadd.f32 %v723, %v691
      %v756 = vadd.f32 %v724, %v692
      %v757 = vadd.f32 %v725, %v693
      %v758 = vadd.f32 %v726, %v694
      %v759 = vadd.f32 %v727, %v695
      %v760 = vadd.f32 %v728, %v696
      %v761 = vadd.f32 %v729, %v697
      %v762 = vadd.f32 %v730, %v698
      %v763 = vadd.f32 %v731, %v699
      %v764 = vadd.f32 %v732, %v700
      %v765 = vadd.f32 %v733, %v701
      %v766 = vadd.f32 %v734, %v702
      %v767 = vadd.f32 %v735, %v703
      %v768 = vadd.f32 %v736, %v704
      %v769 = vadd.f32 %v737, %v705
      %v770 = vadd.f32 %v738, %v706
      %v771 = vadd.f32 %v739, %v707
      %772 = vst.msk [vmem:[#allocation3] sm:$0xff] %vm468, %v740
      %773 = vst.msk [vmem:[#allocation3 + $0x8] sm:$0xff] %vm468, %v741
      %774 = vst.msk [vmem:[#allocation3 + $0x10] sm:$0xff] %vm468, %v742
      %775 = vst.msk [vmem:[#allocation3 + $0x18] sm:$0xff] %vm468, %v743
      %776 = vst.msk [vmem:[#allocation3 + $0x20] sm:$0xff] %vm468, %v744
      %777 = vst.msk [vmem:[#allocation3 + $0x28] sm:$0xff] %vm468, %v745
      %778 = vst.msk [vmem:[#allocation3 + $0x30] sm:$0xff] %vm468, %v746
      %779 = vst.msk [vmem:[#allocation3 + $0x38] sm:$0xff] %vm468, %v747
      %780 = vst.msk [vmem:[#allocation3 + $0x40] sm:$0xff] %vm468, %v748
      %781 = vst.msk [vmem:[#allocation3 + $0x48] sm:$0xff] %vm468, %v749
      %782 = vst.msk [vmem:[#allocation3 + $0x50] sm:$0xff] %vm468, %v750
      %783 = vst.msk [vmem:[#allocation3 + $0x58] sm:$0xff] %vm468, %v751
      %784 = vst.msk [vmem:[#allocation3 + $0x60] sm:$0xff] %vm468, %v752
      %785 = vst.msk [vmem:[#allocation3 + $0x68] sm:$0xff] %vm468, %v753
      %786 = vst.msk [vmem:[#allocation3 + $0x70] sm:$0xff] %vm468, %v754
      %787 = vst.msk [vmem:[#allocation3 + $0x78] sm:$0xff] %vm468, %v755
      %788 = vst.msk [vmem:[#allocation3 + $0x80] sm:$0xff] %vm468, %v756
      %789 = vst.msk [vmem:[#allocation3 + $0x88] sm:$0xff] %vm468, %v757
      %790 = vst.msk [vmem:[#allocation3 + $0x90] sm:$0xff] %vm468, %v758
      %791 = vst.msk [vmem:[#allocation3 + $0x98] sm:$0xff] %vm468, %v759
      %792 = vst.msk [vmem:[#allocation3 + $0xa0] sm:$0xff] %vm468, %v760
      %793 = vst.msk [vmem:[#allocation3 + $0xa8] sm:$0xff] %vm468, %v761
      %794 = vst.msk [vmem:[#allocation3 + $0xb0] sm:$0xff] %vm468, %v762
      %795 = vst.msk [vmem:[#allocation3 + $0xb8] sm:$0xff] %vm468, %v763
      %796 = vst.msk [vmem:[#allocation3 + $0xc0] sm:$0xff] %vm468, %v764
      %797 = vst.msk [vmem:[#allocation3 + $0xc8] sm:$0xff] %vm468, %v765
      %798 = vst.msk [vmem:[#allocation3 + $0xd0] sm:$0xff] %vm468, %v766
      %799 = vst.msk [vmem:[#allocation3 + $0xd8] sm:$0xff] %vm468, %v767
      %800 = vst.msk [vmem:[#allocation3 + $0xe0] sm:$0xff] %vm468, %v768
      %801 = vst.msk [vmem:[#allocation3 + $0xe8] sm:$0xff] %vm468, %v769
      %802 = vst.msk [vmem:[#allocation3 + $0xf0] sm:$0xff] %vm468, %v770
      %803 = vst.msk [vmem:[#allocation3 + $0xf8] sm:$0xff] %vm468, %v771
      %v804 = vld [vmem:[#allocation2 + $0x2] sm:$0xff]
      %v805 = vld [vmem:[#allocation2 + $0xa] sm:$0xff]
      %v806 = vld [vmem:[#allocation2 + $0x1a] sm:$0xff]
      %v807 = vld [vmem:[#allocation2 + $0x22] sm:$0xff]
      %v808 = vld [vmem:[#allocation2 + $0x32] sm:$0xff]
      %v809 = vld [vmem:[#allocation2 + $0x3a] sm:$0xff]
      %v810 = vld [vmem:[#allocation2 + $0x4a] sm:$0xff]
      %v811 = vld [vmem:[#allocation2 + $0x52] sm:$0xff]
      %v812 = vld [vmem:[#allocation2 + $0x62] sm:$0xff]
      %v813 = vld [vmem:[#allocation2 + $0x6a] sm:$0xff]
      %v814 = vld [vmem:[#allocation2 + $0x7a] sm:$0xff]
      %v815 = vld [vmem:[#allocation2 + $0x82] sm:$0xff]
      %v816 = vld [vmem:[#allocation2 + $0x92] sm:$0xff]
      %v817 = vld [vmem:[#allocation2 + $0x9a] sm:$0xff]
      %v818 = vld [vmem:[#allocation2 + $0xaa] sm:$0xff]
      %v819 = vld [vmem:[#allocation2 + $0xb2] sm:$0xff]
      %v820 = vld [vmem:[#allocation2 + $0xc2] sm:$0xff]
      %v821 = vld [vmem:[#allocation2 + $0xca] sm:$0xff]
      %v822 = vld [vmem:[#allocation2 + $0xda] sm:$0xff]
      %v823 = vld [vmem:[#allocation2 + $0xe2] sm:$0xff]
      %v824 = vld [vmem:[#allocation2 + $0xf2] sm:$0xff]
      %v825 = vld [vmem:[#allocation2 + $0xfa] sm:$0xff]
      %v826 = vld [vmem:[#allocation2 + $0x10a] sm:$0xff]
      %v827 = vld [vmem:[#allocation2 + $0x112] sm:$0xff]
      %v828 = vld [vmem:[#allocation2 + $0x122] sm:$0xff]
      %v829 = vld [vmem:[#allocation2 + $0x12a] sm:$0xff]
      %v830 = vld [vmem:[#allocation2 + $0x13a] sm:$0xff]
      %v831 = vld [vmem:[#allocation2 + $0x142] sm:$0xff]
      %v832 = vld [vmem:[#allocation2 + $0x152] sm:$0xff]
      %v833 = vld [vmem:[#allocation2 + $0x15a] sm:$0xff]
      %v834 = vld [vmem:[#allocation2 + $0x16a] sm:$0xff]
      %v835 = vld [vmem:[#allocation2 + $0x172] sm:$0xff]
      %v836 = vld [vmem:[%s3 + $0x2] sm:$0x1]
      %v837 = vperm.slane %v836, 0
      %v838 = vmul.f32 %v804, %v837
      %v839 = vmul.f32 %v805, %v837
      %v840 = vmul.f32 %v806, %v837
      %v841 = vmul.f32 %v807, %v837
      %v842 = vmul.f32 %v808, %v837
      %v843 = vmul.f32 %v809, %v837
      %v844 = vmul.f32 %v810, %v837
      %v845 = vmul.f32 %v811, %v837
      %v846 = vmul.f32 %v812, %v837
      %v847 = vmul.f32 %v813, %v837
      %v848 = vmul.f32 %v814, %v837
      %v849 = vmul.f32 %v815, %v837
      %v850 = vmul.f32 %v816, %v837
      %v851 = vmul.f32 %v817, %v837
      %v852 = vmul.f32 %v818, %v837
      %v853 = vmul.f32 %v819, %v837
      %v854 = vmul.f32 %v820, %v837
      %v855 = vmul.f32 %v821, %v837
      %v856 = vmul.f32 %v822, %v837
      %v857 = vmul.f32 %v823, %v837
      %v858 = vmul.f32 %v824, %v837
      %v859 = vmul.f32 %v825, %v837
      %v860 = vmul.f32 %v826, %v837
      %v861 = vmul.f32 %v827, %v837
      %v862 = vmul.f32 %v828, %v837
      %v863 = vmul.f32 %v829, %v837
      %v864 = vmul.f32 %v830, %v837
      %v865 = vmul.f32 %v831, %v837
      %v866 = vmul.f32 %v832, %v837
      %v867 = vmul.f32 %v833, %v837
      %v868 = vmul.f32 %v834, %v837
      %v869 = vmul.f32 %v835, %v837
      %v870 = vld [vmem:[#allocation3] sm:$0xff]
      %v871 = vld [vmem:[#allocation3 + $0x8] sm:$0xff]
      %v872 = vld [vmem:[#allocation3 + $0x10] sm:$0xff]
      %v873 = vld [vmem:[#allocation3 + $0x18] sm:$0xff]
      %v874 = vld [vmem:[#allocation3 + $0x20] sm:$0xff]
      %v875 = vld [vmem:[#allocation3 + $0x28] sm:$0xff]
      %v876 = vld [vmem:[#allocation3 + $0x30] sm:$0xff]
      %v877 = vld [vmem:[#allocation3 + $0x38] sm:$0xff]
      %v878 = vld [vmem:[#allocation3 + $0x40] sm:$0xff]
      %v879 = vld [vmem:[#allocation3 + $0x48] sm:$0xff]
      %v880 = vld [vmem:[#allocation3 + $0x50] sm:$0xff]
      %v881 = vld [vmem:[#allocation3 + $0x58] sm:$0xff]
      %v882 = vld [vmem:[#allocation3 + $0x60] sm:$0xff]
      %v883 = vld [vmem:[#allocation3 + $0x68] sm:$0xff]
      %v884 = vld [vmem:[#allocation3 + $0x70] sm:$0xff]
      %v885 = vld [vmem:[#allocation3 + $0x78] sm:$0xff]
      %v886 = vld [vmem:[#allocation3 + $0x80] sm:$0xff]
      %v887 = vld [vmem:[#allocation3 + $0x88] sm:$0xff]
      %v888 = vld [vmem:[#allocation3 + $0x90] sm:$0xff]
      %v889 = vld [vmem:[#allocation3 + $0x98] sm:$0xff]
      %v890 = vld [vmem:[#allocation3 + $0xa0] sm:$0xff]
      %v891 = vld [vmem:[#allocation3 + $0xa8] sm:$0xff]
      %v892 = vld [vmem:[#allocation3 + $0xb0] sm:$0xff]
      %v893 = vld [vmem:[#allocation3 + $0xb8] sm:$0xff]
      %v894 = vld [vmem:[#allocation3 + $0xc0] sm:$0xff]
      %v895 = vld [vmem:[#allocation3 + $0xc8] sm:$0xff]
      %v896 = vld [vmem:[#allocation3 + $0xd0] sm:$0xff]
      %v897 = vld [vmem:[#allocation3 + $0xd8] sm:$0xff]
      %v898 = vld [vmem:[#allocation3 + $0xe0] sm:$0xff]
      %v899 = vld [vmem:[#allocation3 + $0xe8] sm:$0xff]
      %v900 = vld [vmem:[#allocation3 + $0xf0] sm:$0xff]
      %v901 = vld [vmem:[#allocation3 + $0xf8] sm:$0xff]
      %v902 = vadd.f32 %v870, %v838
      %v903 = vadd.f32 %v871, %v839
      %v904 = vadd.f32 %v872, %v840
      %v905 = vadd.f32 %v873, %v841
      %v906 = vadd.f32 %v874, %v842
      %v907 = vadd.f32 %v875, %v843
      %v908 = vadd.f32 %v876, %v844
      %v909 = vadd.f32 %v877, %v845
      %v910 = vadd.f32 %v878, %v846
      %v911 = vadd.f32 %v879, %v847
      %v912 = vadd.f32 %v880, %v848
      %v913 = vadd.f32 %v881, %v849
      %v914 = vadd.f32 %v882, %v850
      %v915 = vadd.f32 %v883, %v851
      %v916 = vadd.f32 %v884, %v852
      %v917 = vadd.f32 %v885, %v853
      %v918 = vadd.f32 %v886, %v854
      %v919 = vadd.f32 %v887, %v855
      %v920 = vadd.f32 %v888, %v856
      %v921 = vadd.f32 %v889, %v857
      %v922 = vadd.f32 %v890, %v858
      %v923 = vadd.f32 %v891, %v859
      %v924 = vadd.f32 %v892, %v860
      %v925 = vadd.f32 %v893, %v861
      %v926 = vadd.f32 %v894, %v862
      %v927 = vadd.f32 %v895, %v863
      %v928 = vadd.f32 %v896, %v864
      %v929 = vadd.f32 %v897, %v865
      %v930 = vadd.f32 %v898, %v866
      %v931 = vadd.f32 %v899, %v867
      %v932 = vadd.f32 %v900, %v868
      %v933 = vadd.f32 %v901, %v869
      %934 = vst.msk [vmem:[#allocation3] sm:$0xff] %vm468, %v902
      %935 = vst.msk [vmem:[#allocation3 + $0x8] sm:$0xff] %vm468, %v903
      %936 = vst.msk [vmem:[#allocation3 + $0x10] sm:$0xff] %vm468, %v904
      %937 = vst.msk [vmem:[#allocation3 + $0x18] sm:$0xff] %vm468, %v905
      %938 = vst.msk [vmem:[#allocation3 + $0x20] sm:$0xff] %vm468, %v906
      %939 = vst.msk [vmem:[#allocation3 + $0x28] sm:$0xff] %vm468, %v907
      %940 = vst.msk [vmem:[#allocation3 + $0x30] sm:$0xff] %vm468, %v908
      %941 = vst.msk [vmem:[#allocation3 + $0x38] sm:$0xff] %vm468, %v909
      %942 = vst.msk [vmem:[#allocation3 + $0x40] sm:$0xff] %vm468, %v910
      %943 = vst.msk [vmem:[#allocation3 + $0x48] sm:$0xff] %vm468, %v911
      %944 = vst.msk [vmem:[#allocation3 + $0x50] sm:$0xff] %vm468, %v912
      %945 = vst.msk [vmem:[#allocation3 + $0x58] sm:$0xff] %vm468, %v913
      %946 = vst.msk [vmem:[#allocation3 + $0x60] sm:$0xff] %vm468, %v914
      %947 = vst.msk [vmem:[#allocation3 + $0x68] sm:$0xff] %vm468, %v915
      %948 = vst.msk [vmem:[#allocation3 + $0x70] sm:$0xff] %vm468, %v916
      %949 = vst.msk [vmem:[#allocation3 + $0x78] sm:$0xff] %vm468, %v917
      %950 = vst.msk [vmem:[#allocation3 + $0x80] sm:$0xff] %vm468, %v918
      %951 = vst.msk [vmem:[#allocation3 + $0x88] sm:$0xff] %vm468, %v919
      %952 = vst.msk [vmem:[#allocation3 + $0x90] sm:$0xff] %vm468, %v920
      %953 = vst.msk [vmem:[#allocation3 + $0x98] sm:$0xff] %vm468, %v921
      %954 = vst.msk [vmem:[#allocation3 + $0xa0] sm:$0xff] %vm468, %v922
      %955 = vst.msk [vmem:[#allocation3 + $0xa8] sm:$0xff] %vm468, %v923
      %956 = vst.msk [vmem:[#allocation3 + $0xb0] sm:$0xff] %vm468, %v924
      %957 = vst.msk [vmem:[#allocation3 + $0xb8] sm:$0xff] %vm468, %v925
      %958 = vst.msk [vmem:[#allocation3 + $0xc0] sm:$0xff] %vm468, %v926
      %959 = vst.msk [vmem:[#allocation3 + $0xc8] sm:$0xff] %vm468, %v927
      %960 = vst.msk [vmem:[#allocation3 + $0xd0] sm:$0xff] %vm468, %v928
      %961 = vst.msk [vmem:[#allocation3 + $0xd8] sm:$0xff] %vm468, %v929
      %962 = vst.msk [vmem:[#allocation3 + $0xe0] sm:$0xff] %vm468, %v930
      %963 = vst.msk [vmem:[#allocation3 + $0xe8] sm:$0xff] %vm468, %v931
      %964 = vst.msk [vmem:[#allocation3 + $0xf0] sm:$0xff] %vm468, %v932
      %965 = vst.msk [vmem:[#allocation3 + $0xf8] sm:$0xff] %vm468, %v933
      %v966 = vld [vmem:[%s511] sm:$0xff]
      %v967 = vld [vmem:[%s511 + $0x8] sm:$0xff]
      %v968 = vld [vmem:[%s511 + $0x18] sm:$0xff]
      %v969 = vld [vmem:[%s511 + $0x20] sm:$0xff]
      %v970 = vld [vmem:[%s511 + $0x30] sm:$0xff]
      %v971 = vld [vmem:[%s511 + $0x38] sm:$0xff]
      %v972 = vld [vmem:[%s511 + $0x48] sm:$0xff]
      %v973 = vld [vmem:[%s511 + $0x50] sm:$0xff]
      %v974 = vld [vmem:[%s511 + $0x60] sm:$0xff]
      %v975 = vld [vmem:[%s511 + $0x68] sm:$0xff]
      %v976 = vld [vmem:[%s511 + $0x78] sm:$0xff]
      %v977 = vld [vmem:[%s511 + $0x80] sm:$0xff]
      %v978 = vld [vmem:[%s511 + $0x90] sm:$0xff]
      %v979 = vld [vmem:[%s511 + $0x98] sm:$0xff]
      %v980 = vld [vmem:[%s511 + $0xa8] sm:$0xff]
      %v981 = vld [vmem:[%s511 + $0xb0] sm:$0xff]
      %v982 = vld [vmem:[%s511 + $0xc0] sm:$0xff]
      %v983 = vld [vmem:[%s511 + $0xc8] sm:$0xff]
      %v984 = vld [vmem:[%s511 + $0xd8] sm:$0xff]
      %v985 = vld [vmem:[%s511 + $0xe0] sm:$0xff]
      %v986 = vld [vmem:[%s511 + $0xf0] sm:$0xff]
      %v987 = vld [vmem:[%s511 + $0xf8] sm:$0xff]
      %v988 = vld [vmem:[%s511 + $0x108] sm:$0xff]
      %v989 = vld [vmem:[%s511 + $0x110] sm:$0xff]
      %v990 = vld [vmem:[%s511 + $0x120] sm:$0xff]
      %v991 = vld [vmem:[%s511 + $0x128] sm:$0xff]
      %v992 = vld [vmem:[%s511 + $0x138] sm:$0xff]
      %v993 = vld [vmem:[%s511 + $0x140] sm:$0xff]
      %v994 = vld [vmem:[%s511 + $0x150] sm:$0xff]
      %v995 = vld [vmem:[%s511 + $0x158] sm:$0xff]
      %v996 = vld [vmem:[%s511 + $0x168] sm:$0xff]
      %v997 = vld [vmem:[%s511 + $0x170] sm:$0xff]
      %v998 = vld [vmem:[%s3 + $0x3] sm:$0x1]
      %v999 = vperm.slane %v998, 0
      %v1000 = vmul.f32 %v966, %v999
      %v1001 = vmul.f32 %v967, %v999
      %v1002 = vmul.f32 %v968, %v999
      %v1003 = vmul.f32 %v969, %v999
      %v1004 = vmul.f32 %v970, %v999
      %v1005 = vmul.f32 %v971, %v999
      %v1006 = vmul.f32 %v972, %v999
      %v1007 = vmul.f32 %v973, %v999
      %v1008 = vmul.f32 %v974, %v999
      %v1009 = vmul.f32 %v975, %v999
      %v1010 = vmul.f32 %v976, %v999
      %v1011 = vmul.f32 %v977, %v999
      %v1012 = vmul.f32 %v978, %v999
      %v1013 = vmul.f32 %v979, %v999
      %v1014 = vmul.f32 %v980, %v999
      %v1015 = vmul.f32 %v981, %v999
      %v1016 = vmul.f32 %v982, %v999
      %v1017 = vmul.f32 %v983, %v999
      %v1018 = vmul.f32 %v984, %v999
      %v1019 = vmul.f32 %v985, %v999
      %v1020 = vmul.f32 %v986, %v999
      %v1021 = vmul.f32 %v987, %v999
      %v1022 = vmul.f32 %v988, %v999
      %v1023 = vmul.f32 %v989, %v999
      %v1024 = vmul.f32 %v990, %v999
      %v1025 = vmul.f32 %v991, %v999
      %v1026 = vmul.f32 %v992, %v999
      %v1027 = vmul.f32 %v993, %v999
      %v1028 = vmul.f32 %v994, %v999
      %v1029 = vmul.f32 %v995, %v999
      %v1030 = vmul.f32 %v996, %v999
      %v1031 = vmul.f32 %v997, %v999
      %v1032 = vld [vmem:[#allocation3] sm:$0xff]
      %v1033 = vld [vmem:[#allocation3 + $0x8] sm:$0xff]
      %v1034 = vld [vmem:[#allocation3 + $0x10] sm:$0xff]
      %v1035 = vld [vmem:[#allocation3 + $0x18] sm:$0xff]
      %v1036 = vld [vmem:[#allocation3 + $0x20] sm:$0xff]
      %v1037 = vld [vmem:[#allocation3 + $0x28] sm:$0xff]
      %v1038 = vld [vmem:[#allocation3 + $0x30] sm:$0xff]
      %v1039 = vld [vmem:[#allocation3 + $0x38] sm:$0xff]
      %v1040 = vld [vmem:[#allocation3 + $0x40] sm:$0xff]
      %v1041 = vld [vmem:[#allocation3 + $0x48] sm:$0xff]
      %v1042 = vld [vmem:[#allocation3 + $0x50] sm:$0xff]
      %v1043 = vld [vmem:[#allocation3 + $0x58] sm:$0xff]
      %v1044 = vld [vmem:[#allocation3 + $0x60] sm:$0xff]
      %v1045 = vld [vmem:[#allocation3 + $0x68] sm:$0xff]
      %v1046 = vld [vmem:[#allocation3 + $0x70] sm:$0xff]
      %v1047 = vld [vmem:[#allocation3 + $0x78] sm:$0xff]
      %v1048 = vld [vmem:[#allocation3 + $0x80] sm:$0xff]
      %v1049 = vld [vmem:[#allocation3 + $0x88] sm:$0xff]
      %v1050 = vld [vmem:[#allocation3 + $0x90] sm:$0xff]
      %v1051 = vld [vmem:[#allocation3 + $0x98] sm:$0xff]
      %v1052 = vld [vmem:[#allocation3 + $0xa0] sm:$0xff]
      %v1053 = vld [vmem:[#allocation3 + $0xa8] sm:$0xff]
      %v1054 = vld [vmem:[#allocation3 + $0xb0] sm:$0xff]
      %v1055 = vld [vmem:[#allocation3 + $0xb8] sm:$0xff]
      %v1056 = vld [vmem:[#allocation3 + $0xc0] sm:$0xff]
      %v1057 = vld [vmem:[#allocation3 + $0xc8] sm:$0xff]
      %v1058 = vld [vmem:[#allocation3 + $0xd0] sm:$0xff]
      %v1059 = vld [vmem:[#allocation3 + $0xd8] sm:$0xff]
      %v1060 = vld [vmem:[#allocation3 + $0xe0] sm:$0xff]
      %v1061 = vld [vmem:[#allocation3 + $0xe8] sm:$0xff]
      %v1062 = vld [vmem:[#allocation3 + $0xf0] sm:$0xff]
      %v1063 = vld [vmem:[#allocation3 + $0xf8] sm:$0xff]
      %v1064 = vadd.f32 %v1032, %v1000
      %v1065 = vadd.f32 %v1033, %v1001
      %v1066 = vadd.f32 %v1034, %v1002
      %v1067 = vadd.f32 %v1035, %v1003
      %v1068 = vadd.f32 %v1036, %v1004
      %v1069 = vadd.f32 %v1037, %v1005
      %v1070 = vadd.f32 %v1038, %v1006
      %v1071 = vadd.f32 %v1039, %v1007
      %v1072 = vadd.f32 %v1040, %v1008
      %v1073 = vadd.f32 %v1041, %v1009
      %v1074 = vadd.f32 %v1042, %v1010
      %v1075 = vadd.f32 %v1043, %v1011
      %v1076 = vadd.f32 %v1044, %v1012
      %v1077 = vadd.f32 %v1045, %v1013
      %v1078 = vadd.f32 %v1046, %v1014
      %v1079 = vadd.f32 %v1047, %v1015
      %v1080 = vadd.f32 %v1048, %v1016
      %v1081 = vadd.f32 %v1049, %v1017
      %v1082 = vadd.f32 %v1050, %v1018
      %v1083 = vadd.f32 %v1051, %v1019
      %v1084 = vadd.f32 %v1052, %v1020
      %v1085 = vadd.f32 %v1053, %v1021
      %v1086 = vadd.f32 %v1054, %v1022
      %v1087 = vadd.f32 %v1055, %v1023
      %v1088 = vadd.f32 %v1056, %v1024
      %v1089 = vadd.f32 %v1057, %v1025
      %v1090 = vadd.f32 %v1058, %v1026
      %v1091 = vadd.f32 %v1059, %v1027
      %v1092 = vadd.f32 %v1060, %v1028
      %v1093 = vadd.f32 %v1061, %v1029
      %v1094 = vadd.f32 %v1062, %v1030
      %v1095 = vadd.f32 %v1063, %v1031
      %1096 = vst.msk [vmem:[#allocation3] sm:$0xff] %vm468, %v1064
      %1097 = vst.msk [vmem:[#allocation3 + $0x8] sm:$0xff] %vm468, %v1065
      %1098 = vst.msk [vmem:[#allocation3 + $0x10] sm:$0xff] %vm468, %v1066
      %1099 = vst.msk [vmem:[#allocation3 + $0x18] sm:$0xff] %vm468, %v1067
      %1100 = vst.msk [vmem:[#allocation3 + $0x20] sm:$0xff] %vm468, %v1068
      %1101 = vst.msk [vmem:[#allocation3 + $0x28] sm:$0xff] %vm468, %v1069
      %1102 = vst.msk [vmem:[#allocation3 + $0x30] sm:$0xff] %vm468, %v1070
      %1103 = vst.msk [vmem:[#allocation3 + $0x38] sm:$0xff] %vm468, %v1071
      %1104 = vst.msk [vmem:[#allocation3 + $0x40] sm:$0xff] %vm468, %v1072
      %1105 = vst.msk [vmem:[#allocation3 + $0x48] sm:$0xff] %vm468, %v1073
      %1106 = vst.msk [vmem:[#allocation3 + $0x50] sm:$0xff] %vm468, %v1074
      %1107 = vst.msk [vmem:[#allocation3 + $0x58] sm:$0xff] %vm468, %v1075
      %1108 = vst.msk [vmem:[#allocation3 + $0x60] sm:$0xff] %vm468, %v1076
      %1109 = vst.msk [vmem:[#allocation3 + $0x68] sm:$0xff] %vm468, %v1077
      %1110 = vst.msk [vmem:[#allocation3 + $0x70] sm:$0xff] %vm468, %v1078
      %1111 = vst.msk [vmem:[#allocation3 + $0x78] sm:$0xff] %vm468, %v1079
      %1112 = vst.msk [vmem:[#allocation3 + $0x80] sm:$0xff] %vm468, %v1080
      %1113 = vst.msk [vmem:[#allocation3 + $0x88] sm:$0xff] %vm468, %v1081
      %1114 = vst.msk [vmem:[#allocation3 + $0x90] sm:$0xff] %vm468, %v1082
      %1115 = vst.msk [vmem:[#allocation3 + $0x98] sm:$0xff] %vm468, %v1083
      %1116 = vst.msk [vmem:[#allocation3 + $0xa0] sm:$0xff] %vm468, %v1084
      %1117 = vst.msk [vmem:[#allocation3 + $0xa8] sm:$0xff] %vm468, %v1085
      %1118 = vst.msk [vmem:[#allocation3 + $0xb0] sm:$0xff] %vm468, %v1086
      %1119 = vst.msk [vmem:[#allocation3 + $0xb8] sm:$0xff] %vm468, %v1087
      %1120 = vst.msk [vmem:[#allocation3 + $0xc0] sm:$0xff] %vm468, %v1088
      %1121 = vst.msk [vmem:[#allocation3 + $0xc8] sm:$0xff] %vm468, %v1089
      %1122 = vst.msk [vmem:[#allocation3 + $0xd0] sm:$0xff] %vm468, %v1090
      %1123 = vst.msk [vmem:[#allocation3 + $0xd8] sm:$0xff] %vm468, %v1091
      %1124 = vst.msk [vmem:[#allocation3 + $0xe0] sm:$0xff] %vm468, %v1092
      %1125 = vst.msk [vmem:[#allocation3 + $0xe8] sm:$0xff] %vm468, %v1093
      %1126 = vst.msk [vmem:[#allocation3 + $0xf0] sm:$0xff] %vm468, %v1094
      %1127 = vst.msk [vmem:[#allocation3 + $0xf8] sm:$0xff] %vm468, %v1095
      %v1128 = vld [vmem:[%s511 + $0x1] sm:$0xff]
      %v1129 = vld [vmem:[%s511 + $0x9] sm:$0xff]
      %v1130 = vld [vmem:[%s511 + $0x19] sm:$0xff]
      %v1131 = vld [vmem:[%s511 + $0x21] sm:$0xff]
      %v1132 = vld [vmem:[%s511 + $0x31] sm:$0xff]
      %v1133 = vld [vmem:[%s511 + $0x39] sm:$0xff]
      %v1134 = vld [vmem:[%s511 + $0x49] sm:$0xff]
      %v1135 = vld [vmem:[%s511 + $0x51] sm:$0xff]
      %v1136 = vld [vmem:[%s511 + $0x61] sm:$0xff]
      %v1137 = vld [vmem:[%s511 + $0x69] sm:$0xff]
      %v1138 = vld [vmem:[%s511 + $0x79] sm:$0xff]
      %v1139 = vld [vmem:[%s511 + $0x81] sm:$0xff]
      %v1140 = vld [vmem:[%s511 + $0x91] sm:$0xff]
      %v1141 = vld [vmem:[%s511 + $0x99] sm:$0xff]
      %v1142 = vld [vmem:[%s511 + $0xa9] sm:$0xff]
      %v1143 = vld [vmem:[%s511 + $0xb1] sm:$0xff]
      %v1144 = vld [vmem:[%s511 + $0xc1] sm:$0xff]
      %v1145 = vld [vmem:[%s511 + $0xc9] sm:$0xff]
      %v1146 = vld [vmem:[%s511 + $0xd9] sm:$0xff]
      %v1147 = vld [vmem:[%s511 + $0xe1] sm:$0xff]
      %v1148 = vld [vmem:[%s511 + $0xf1] sm:$0xff]
      %v1149 = vld [vmem:[%s511 + $0xf9] sm:$0xff]
      %v1150 = vld [vmem:[%s511 + $0x109] sm:$0xff]
      %v1151 = vld [vmem:[%s511 + $0x111] sm:$0xff]
      %v1152 = vld [vmem:[%s511 + $0x121] sm:$0xff]
      %v1153 = vld [vmem:[%s511 + $0x129] sm:$0xff]
      %v1154 = vld [vmem:[%s511 + $0x139] sm:$0xff]
      %v1155 = vld [vmem:[%s511 + $0x141] sm:$0xff]
      %v1156 = vld [vmem:[%s511 + $0x151] sm:$0xff]
      %v1157 = vld [vmem:[%s511 + $0x159] sm:$0xff]
      %v1158 = vld [vmem:[%s511 + $0x169] sm:$0xff]
      %v1159 = vld [vmem:[%s511 + $0x171] sm:$0xff]
      %v1160 = vld [vmem:[%s3 + $0x4] sm:$0x1]
      %v1161 = vperm.slane %v1160, 0
      %v1162 = vmul.f32 %v1128, %v1161
      %v1163 = vmul.f32 %v1129, %v1161
      %v1164 = vmul.f32 %v1130, %v1161
      %v1165 = vmul.f32 %v1131, %v1161
      %v1166 = vmul.f32 %v1132, %v1161
      %v1167 = vmul.f32 %v1133, %v1161
      %v1168 = vmul.f32 %v1134, %v1161
      %v1169 = vmul.f32 %v1135, %v1161
      %v1170 = vmul.f32 %v1136, %v1161
      %v1171 = vmul.f32 %v1137, %v1161
      %v1172 = vmul.f32 %v1138, %v1161
      %v1173 = vmul.f32 %v1139, %v1161
      %v1174 = vmul.f32 %v1140, %v1161
      %v1175 = vmul.f32 %v1141, %v1161
      %v1176 = vmul.f32 %v1142, %v1161
      %v1177 = vmul.f32 %v1143, %v1161
      %v1178 = vmul.f32 %v1144, %v1161
      %v1179 = vmul.f32 %v1145, %v1161
      %v1180 = vmul.f32 %v1146, %v1161
      %v1181 = vmul.f32 %v1147, %v1161
      %v1182 = vmul.f32 %v1148, %v1161
      %v1183 = vmul.f32 %v1149, %v1161
      %v1184 = vmul.f32 %v1150, %v1161
      %v1185 = vmul.f32 %v1151, %v1161
      %v1186 = vmul.f32 %v1152, %v1161
      %v1187 = vmul.f32 %v1153, %v1161
      %v1188 = vmul.f32 %v1154, %v1161
      %v1189 = vmul.f32 %v1155, %v1161
      %v1190 = vmul.f32 %v1156, %v1161
      %v1191 = vmul.f32 %v1157, %v1161
      %v1192 = vmul.f32 %v1158, %v1161
      %v1193 = vmul.f32 %v1159, %v1161
      %v1194 = vld [vmem:[#allocation3] sm:$0xff]
      %v1195 = vld [vmem:[#allocation3 + $0x8] sm:$0xff]
      %v1196 = vld [vmem:[#allocation3 + $0x10] sm:$0xff]
      %v1197 = vld [vmem:[#allocation3 + $0x18] sm:$0xff]
      %v1198 = vld [vmem:[#allocation3 + $0x20] sm:$0xff]
      %v1199 = vld [vmem:[#allocation3 + $0x28] sm:$0xff]
      %v1200 = vld [vmem:[#allocation3 + $0x30] sm:$0xff]
      %v1201 = vld [vmem:[#allocation3 + $0x38] sm:$0xff]
      %v1202 = vld [vmem:[#allocation3 + $0x40] sm:$0xff]
      %v1203 = vld [vmem:[#allocation3 + $0x48] sm:$0xff]
      %v1204 = vld [vmem:[#allocation3 + $0x50] sm:$0xff]
      %v1205 = vld [vmem:[#allocation3 + $0x58] sm:$0xff]
      %v1206 = vld [vmem:[#allocation3 + $0x60] sm:$0xff]
      %v1207 = vld [vmem:[#allocation3 + $0x68] sm:$0xff]
      %v1208 = vld [vmem:[#allocation3 + $0x70] sm:$0xff]
      %v1209 = vld [vmem:[#allocation3 + $0x78] sm:$0xff]
      %v1210 = vld [vmem:[#allocation3 + $0x80] sm:$0xff]
      %v1211 = vld [vmem:[#allocation3 + $0x88] sm:$0xff]
      %v1212 = vld [vmem:[#allocation3 + $0x90] sm:$0xff]
      %v1213 = vld [vmem:[#allocation3 + $0x98] sm:$0xff]
      %v1214 = vld [vmem:[#allocation3 + $0xa0] sm:$0xff]
      %v1215 = vld [vmem:[#allocation3 + $0xa8] sm:$0xff]
      %v1216 = vld [vmem:[#allocation3 + $0xb0] sm:$0xff]
      %v1217 = vld [vmem:[#allocation3 + $0xb8] sm:$0xff]
      %v1218 = vld [vmem:[#allocation3 + $0xc0] sm:$0xff]
      %v1219 = vld [vmem:[#allocation3 + $0xc8] sm:$0xff]
      %v1220 = vld [vmem:[#allocation3 + $0xd0] sm:$0xff]
      %v1221 = vld [vmem:[#allocation3 + $0xd8] sm:$0xff]
      %v1222 = vld [vmem:[#allocation3 + $0xe0] sm:$0xff]
      %v1223 = vld [vmem:[#allocation3 + $0xe8] sm:$0xff]
      %v1224 = vld [vmem:[#allocation3 + $0xf0] sm:$0xff]
      %v1225 = vld [vmem:[#allocation3 + $0xf8] sm:$0xff]
      %v1226 = vadd.f32 %v1194, %v1162
      %v1227 = vadd.f32 %v1195, %v1163
      %v1228 = vadd.f32 %v1196, %v1164
      %v1229 = vadd.f32 %v1197, %v1165
      %v1230 = vadd.f32 %v1198, %v1166
      %v1231 = vadd.f32 %v1199, %v1167
      %v1232 = vadd.f32 %v1200, %v1168
      %v1233 = vadd.f32 %v1201, %v1169
      %v1234 = vadd.f32 %v1202, %v1170
      %v1235 = vadd.f32 %v1203, %v1171
      %v1236 = vadd.f32 %v1204, %v1172
      %v1237 = vadd.f32 %v1205, %v1173
      %v1238 = vadd.f32 %v1206, %v1174
      %v1239 = vadd.f32 %v1207, %v1175
      %v1240 = vadd.f32 %v1208, %v1176
      %v1241 = vadd.f32 %v1209, %v1177
      %v1242 = vadd.f32 %v1210, %v1178
      %v1243 = vadd.f32 %v1211, %v1179
      %v1244 = vadd.f32 %v1212, %v1180
      %v1245 = vadd.f32 %v1213, %v1181
      %v1246 = vadd.f32 %v1214, %v1182
      %v1247 = vadd.f32 %v1215, %v1183
      %v1248 = vadd.f32 %v1216, %v1184
      %v1249 = vadd.f32 %v1217, %v1185
      %v1250 = vadd.f32 %v1218, %v1186
      %v1251 = vadd.f32 %v1219, %v1187
      %v1252 = vadd.f32 %v1220, %v1188
      %v1253 = vadd.f32 %v1221, %v1189
      %v1254 = vadd.f32 %v1222, %v1190
      %v1255 = vadd.f32 %v1223, %v1191
      %v1256 = vadd.f32 %v1224, %v1192
      %v1257 = vadd.f32 %v1225, %v1193
      %1258 = vst.msk [vmem:[#allocation3] sm:$0xff] %vm468, %v1226
      %1259 = vst.msk [vmem:[#allocation3 + $0x8] sm:$0xff] %vm468, %v1227
      %1260 = vst.msk [vmem:[#allocation3 + $0x10] sm:$0xff] %vm468, %v1228
      %1261 = vst.msk [vmem:[#allocation3 + $0x18] sm:$0xff] %vm468, %v1229
      %1262 = vst.msk [vmem:[#allocation3 + $0x20] sm:$0xff] %vm468, %v1230
      %1263 = vst.msk [vmem:[#allocation3 + $0x28] sm:$0xff] %vm468, %v1231
      %1264 = vst.msk [vmem:[#allocation3 + $0x30] sm:$0xff] %vm468, %v1232
      %1265 = vst.msk [vmem:[#allocation3 + $0x38] sm:$0xff] %vm468, %v1233
      %1266 = vst.msk [vmem:[#allocation3 + $0x40] sm:$0xff] %vm468, %v1234
      %1267 = vst.msk [vmem:[#allocation3 + $0x48] sm:$0xff] %vm468, %v1235
      %1268 = vst.msk [vmem:[#allocation3 + $0x50] sm:$0xff] %vm468, %v1236
      %1269 = vst.msk [vmem:[#allocation3 + $0x58] sm:$0xff] %vm468, %v1237
      %1270 = vst.msk [vmem:[#allocation3 + $0x60] sm:$0xff] %vm468, %v1238
      %1271 = vst.msk [vmem:[#allocation3 + $0x68] sm:$0xff] %vm468, %v1239
      %1272 = vst.msk [vmem:[#allocation3 + $0x70] sm:$0xff] %vm468, %v1240
      %1273 = vst.msk [vmem:[#allocation3 + $0x78] sm:$0xff] %vm468, %v1241
      %1274 = vst.msk [vmem:[#allocation3 + $0x80] sm:$0xff] %vm468, %v1242
      %1275 = vst.msk [vmem:[#allocation3 + $0x88] sm:$0xff] %vm468, %v1243
      %1276 = vst.msk [vmem:[#allocation3 + $0x90] sm:$0xff] %vm468, %v1244
      %1277 = vst.msk [vmem:[#allocation3 + $0x98] sm:$0xff] %vm468, %v1245
      %1278 = vst.msk [vmem:[#allocation3 + $0xa0] sm:$0xff] %vm468, %v1246
      %1279 = vst.msk [vmem:[#allocation3 + $0xa8] sm:$0xff] %vm468, %v1247
      %1280 = vst.msk [vmem:[#allocation3 + $0xb0] sm:$0xff] %vm468, %v1248
      %1281 = vst.msk [vmem:[#allocation3 + $0xb8] sm:$0xff] %vm468, %v1249
      %1282 = vst.msk [vmem:[#allocation3 + $0xc0] sm:$0xff] %vm468, %v1250
      %1283 = vst.msk [vmem:[#allocation3 + $0xc8] sm:$0xff] %vm468, %v1251
      %1284 = vst.msk [vmem:[#allocation3 + $0xd0] sm:$0xff] %vm468, %v1252
      %1285 = vst.msk [vmem:[#allocation3 + $0xd8] sm:$0xff] %vm468, %v1253
      %1286 = vst.msk [vmem:[#allocation3 + $0xe0] sm:$0xff] %vm468, %v1254
      %1287 = vst.msk [vmem:[#allocation3 + $0xe8] sm:$0xff] %vm468, %v1255
      %1288 = vst.msk [vmem:[#allocation3 + $0xf0] sm:$0xff] %vm468, %v1256
      %1289 = vst.msk [vmem:[#allocation3 + $0xf8] sm:$0xff] %vm468, %v1257
      %v1290 = vld [vmem:[%s511 + $0x2] sm:$0xff]
      %v1291 = vld [vmem:[%s511 + $0xa] sm:$0xff]
      %v1292 = vld [vmem:[%s511 + $0x1a] sm:$0xff]
      %v1293 = vld [vmem:[%s511 + $0x22] sm:$0xff]
      %v1294 = vld [vmem:[%s511 + $0x32] sm:$0xff]
      %v1295 = vld [vmem:[%s511 + $0x3a] sm:$0xff]
      %v1296 = vld [vmem:[%s511 + $0x4a] sm:$0xff]
      %v1297 = vld [vmem:[%s511 + $0x52] sm:$0xff]
      %v1298 = vld [vmem:[%s511 + $0x62] sm:$0xff]
      %v1299 = vld [vmem:[%s511 + $0x6a] sm:$0xff]
      %v1300 = vld [vmem:[%s511 + $0x7a] sm:$0xff]
      %v1301 = vld [vmem:[%s511 + $0x82] sm:$0xff]
      %v1302 = vld [vmem:[%s511 + $0x92] sm:$0xff]
      %v1303 = vld [vmem:[%s511 + $0x9a] sm:$0xff]
      %v1304 = vld [vmem:[%s511 + $0xaa] sm:$0xff]
      %v1305 = vld [vmem:[%s511 + $0xb2] sm:$0xff]
      %v1306 = vld [vmem:[%s511 + $0xc2] sm:$0xff]
      %v1307 = vld [vmem:[%s511 + $0xca] sm:$0xff]
      %v1308 = vld [vmem:[%s511 + $0xda] sm:$0xff]
      %v1309 = vld [vmem:[%s511 + $0xe2] sm:$0xff]
      %v1310 = vld [vmem:[%s511 + $0xf2] sm:$0xff]
      %v1311 = vld [vmem:[%s511 + $0xfa] sm:$0xff]
      %v1312 = vld [vmem:[%s511 + $0x10a] sm:$0xff]
      %v1313 = vld [vmem:[%s511 + $0x112] sm:$0xff]
      %v1314 = vld [vmem:[%s511 + $0x122] sm:$0xff]
      %v1315 = vld [vmem:[%s511 + $0x12a] sm:$0xff]
      %v1316 = vld [vmem:[%s511 + $0x13a] sm:$0xff]
      %v1317 = vld [vmem:[%s511 + $0x142] sm:$0xff]
      %v1318 = vld [vmem:[%s511 + $0x152] sm:$0xff]
      %v1319 = vld [vmem:[%s511 + $0x15a] sm:$0xff]
      %v1320 = vld [vmem:[%s511 + $0x16a] sm:$0xff]
      %v1321 = vld [vmem:[%s511 + $0x172] sm:$0xff]
      %v1322 = vld [vmem:[%s3 + $0x5] sm:$0x1]
      %v1323 = vperm.slane %v1322, 0
      %v1324 = vmul.f32 %v1290, %v1323
      %v1325 = vmul.f32 %v1291, %v1323
      %v1326 = vmul.f32 %v1292, %v1323
      %v1327 = vmul.f32 %v1293, %v1323
      %v1328 = vmul.f32 %v1294, %v1323
      %v1329 = vmul.f32 %v1295, %v1323
      %v1330 = vmul.f32 %v1296, %v1323
      %v1331 = vmul.f32 %v1297, %v1323
      %v1332 = vmul.f32 %v1298, %v1323
      %v1333 = vmul.f32 %v1299, %v1323
      %v1334 = vmul.f32 %v1300, %v1323
      %v1335 = vmul.f32 %v1301, %v1323
      %v1336 = vmul.f32 %v1302, %v1323
      %v1337 = vmul.f32 %v1303, %v1323
      %v1338 = vmul.f32 %v1304, %v1323
      %v1339 = vmul.f32 %v1305, %v1323
      %v1340 = vmul.f32 %v1306, %v1323
      %v1341 = vmul.f32 %v1307, %v1323
      %v1342 = vmul.f32 %v1308, %v1323
      %v1343 = vmul.f32 %v1309, %v1323
      %v1344 = vmul.f32 %v1310, %v1323
      %v1345 = vmul.f32 %v1311, %v1323
      %v1346 = vmul.f32 %v1312, %v1323
      %v1347 = vmul.f32 %v1313, %v1323
      %v1348 = vmul.f32 %v1314, %v1323
      %v1349 = vmul.f32 %v1315, %v1323
      %v1350 = vmul.f32 %v1316, %v1323
      %v1351 = vmul.f32 %v1317, %v1323
      %v1352 = vmul.f32 %v1318, %v1323
      %v1353 = vmul.f32 %v1319, %v1323
      %v1354 = vmul.f32 %v1320, %v1323
      %v1355 = vmul.f32 %v1321, %v1323
      %v1356 = vld [vmem:[#allocation3] sm:$0xff]
      %v1357 = vld [vmem:[#allocation3 + $0x8] sm:$0xff]
      %v1358 = vld [vmem:[#allocation3 + $0x10] sm:$0xff]
      %v1359 = vld [vmem:[#allocation3 + $0x18] sm:$0xff]
      %v1360 = vld [vmem:[#allocation3 + $0x20] sm:$0xff]
      %v1361 = vld [vmem:[#allocation3 + $0x28] sm:$0xff]
      %v1362 = vld [vmem:[#allocation3 + $0x30] sm:$0xff]
      %v1363 = vld [vmem:[#allocation3 + $0x38] sm:$0xff]
      %v1364 = vld [vmem:[#allocation3 + $0x40] sm:$0xff]
      %v1365 = vld [vmem:[#allocation3 + $0x48] sm:$0xff]
      %v1366 = vld [vmem:[#allocation3 + $0x50] sm:$0xff]
      %v1367 = vld [vmem:[#allocation3 + $0x58] sm:$0xff]
      %v1368 = vld [vmem:[#allocation3 + $0x60] sm:$0xff]
      %v1369 = vld [vmem:[#allocation3 + $0x68] sm:$0xff]
      %v1370 = vld [vmem:[#allocation3 + $0x70] sm:$0xff]
      %v1371 = vld [vmem:[#allocation3 + $0x78] sm:$0xff]
      %v1372 = vld [vmem:[#allocation3 + $0x80] sm:$0xff]
      %v1373 = vld [vmem:[#allocation3 + $0x88] sm:$0xff]
      %v1374 = vld [vmem:[#allocation3 + $0x90] sm:$0xff]
      %v1375 = vld [vmem:[#allocation3 + $0x98] sm:$0xff]
      %v1376 = vld [vmem:[#allocation3 + $0xa0] sm:$0xff]
      %v1377 = vld [vmem:[#allocation3 + $0xa8] sm:$0xff]
      %v1378 = vld [vmem:[#allocation3 + $0xb0] sm:$0xff]
      %v1379 = vld [vmem:[#allocation3 + $0xb8] sm:$0xff]
      %v1380 = vld [vmem:[#allocation3 + $0xc0] sm:$0xff]
      %v1381 = vld [vmem:[#allocation3 + $0xc8] sm:$0xff]
      %v1382 = vld [vmem:[#allocation3 + $0xd0] sm:$0xff]
      %v1383 = vld [vmem:[#allocation3 + $0xd8] sm:$0xff]
      %v1384 = vld [vmem:[#allocation3 + $0xe0] sm:$0xff]
      %v1385 = vld [vmem:[#allocation3 + $0xe8] sm:$0xff]
      %v1386 = vld [vmem:[#allocation3 + $0xf0] sm:$0xff]
      %v1387 = vld [vmem:[#allocation3 + $0xf8] sm:$0xff]
      %v1388 = vadd.f32 %v1356, %v1324
      %v1389 = vadd.f32 %v1357, %v1325
      %v1390 = vadd.f32 %v1358, %v1326
      %v1391 = vadd.f32 %v1359, %v1327
      %v1392 = vadd.f32 %v1360, %v1328
      %v1393 = vadd.f32 %v1361, %v1329
      %v1394 = vadd.f32 %v1362, %v1330
      %v1395 = vadd.f32 %v1363, %v1331
      %v1396 = vadd.f32 %v1364, %v1332
      %v1397 = vadd.f32 %v1365, %v1333
      %v1398 = vadd.f32 %v1366, %v1334
      %v1399 = vadd.f32 %v1367, %v1335
      %v1400 = vadd.f32 %v1368, %v1336
      %v1401 = vadd.f32 %v1369, %v1337
      %v1402 = vadd.f32 %v1370, %v1338
      %v1403 = vadd.f32 %v1371, %v1339
      %v1404 = vadd.f32 %v1372, %v1340
      %v1405 = vadd.f32 %v1373, %v1341
      %v1406 = vadd.f32 %v1374, %v1342
      %v1407 = vadd.f32 %v1375, %v1343
      %v1408 = vadd.f32 %v1376, %v1344
      %v1409 = vadd.f32 %v1377, %v1345
      %v1410 = vadd.f32 %v1378, %v1346
      %v1411 = vadd.f32 %v1379, %v1347
      %v1412 = vadd.f32 %v1380, %v1348
      %v1413 = vadd.f32 %v1381, %v1349
      %v1414 = vadd.f32 %v1382, %v1350
      %v1415 = vadd.f32 %v1383, %v1351
      %v1416 = vadd.f32 %v1384, %v1352
      %v1417 = vadd.f32 %v1385, %v1353
      %v1418 = vadd.f32 %v1386, %v1354
      %v1419 = vadd.f32 %v1387, %v1355
      %1420 = vst.msk [vmem:[#allocation3] sm:$0xff] %vm468, %v1388
      %1421 = vst.msk [vmem:[#allocation3 + $0x8] sm:$0xff] %vm468, %v1389
      %1422 = vst.msk [vmem:[#allocation3 + $0x10] sm:$0xff] %vm468, %v1390
      %1423 = vst.msk [vmem:[#allocation3 + $0x18] sm:$0xff] %vm468, %v1391
      %1424 = vst.msk [vmem:[#allocation3 + $0x20] sm:$0xff] %vm468, %v1392
      %1425 = vst.msk [vmem:[#allocation3 + $0x28] sm:$0xff] %vm468, %v1393
      %1426 = vst.msk [vmem:[#allocation3 + $0x30] sm:$0xff] %vm468, %v1394
      %1427 = vst.msk [vmem:[#allocation3 + $0x38] sm:$0xff] %vm468, %v1395
      %1428 = vst.msk [vmem:[#allocation3 + $0x40] sm:$0xff] %vm468, %v1396
      %1429 = vst.msk [vmem:[#allocation3 + $0x48] sm:$0xff] %vm468, %v1397
      %1430 = vst.msk [vmem:[#allocation3 + $0x50] sm:$0xff] %vm468, %v1398
      %1431 = vst.msk [vmem:[#allocation3 + $0x58] sm:$0xff] %vm468, %v1399
      %1432 = vst.msk [vmem:[#allocation3 + $0x60] sm:$0xff] %vm468, %v1400
      %1433 = vst.msk [vmem:[#allocation3 + $0x68] sm:$0xff] %vm468, %v1401
      %1434 = vst.msk [vmem:[#allocation3 + $0x70] sm:$0xff] %vm468, %v1402
      %1435 = vst.msk [vmem:[#allocation3 + $0x78] sm:$0xff] %vm468, %v1403
      %1436 = vst.msk [vmem:[#allocation3 + $0x80] sm:$0xff] %vm468, %v1404
      %1437 = vst.msk [vmem:[#allocation3 + $0x88] sm:$0xff] %vm468, %v1405
      %1438 = vst.msk [vmem:[#allocation3 + $0x90] sm:$0xff] %vm468, %v1406
      %1439 = vst.msk [vmem:[#allocation3 + $0x98] sm:$0xff] %vm468, %v1407
      %1440 = vst.msk [vmem:[#allocation3 + $0xa0] sm:$0xff] %vm468, %v1408
      %1441 = vst.msk [vmem:[#allocation3 + $0xa8] sm:$0xff] %vm468, %v1409
      %1442 = vst.msk [vmem:[#allocation3 + $0xb0] sm:$0xff] %vm468, %v1410
      %1443 = vst.msk [vmem:[#allocation3 + $0xb8] sm:$0xff] %vm468, %v1411
      %1444 = vst.msk [vmem:[#allocation3 + $0xc0] sm:$0xff] %vm468, %v1412
      %1445 = vst.msk [vmem:[#allocation3 + $0xc8] sm:$0xff] %vm468, %v1413
      %1446 = vst.msk [vmem:[#allocation3 + $0xd0] sm:$0xff] %vm468, %v1414
      %1447 = vst.msk [vmem:[#allocation3 + $0xd8] sm:$0xff] %vm468, %v1415
      %1448 = vst.msk [vmem:[#allocation3 + $0xe0] sm:$0xff] %vm468, %v1416
      %1449 = vst.msk [vmem:[#allocation3 + $0xe8] sm:$0xff] %vm468, %v1417
      %1450 = vst.msk [vmem:[#allocation3 + $0xf0] sm:$0xff] %vm468, %v1418
      %1451 = vst.msk [vmem:[#allocation3 + $0xf8] sm:$0xff] %vm468, %v1419
      %s1452 = scalar_lea.vmem [#allocation2], 48
      %v1453 = vld [vmem:[%s1452] sm:$0xff]
      %v1454 = vld [vmem:[%s1452 + $0x8] sm:$0xff]
      %v1455 = vld [vmem:[%s1452 + $0x18] sm:$0xff]
      %v1456 = vld [vmem:[%s1452 + $0x20] sm:$0xff]
      %v1457 = vld [vmem:[%s1452 + $0x30] sm:$0xff]
      %v1458 = vld [vmem:[%s1452 + $0x38] sm:$0xff]
      %v1459 = vld [vmem:[%s1452 + $0x48] sm:$0xff]
      %v1460 = vld [vmem:[%s1452 + $0x50] sm:$0xff]
      %v1461 = vld [vmem:[%s1452 + $0x60] sm:$0xff]
      %v1462 = vld [vmem:[%s1452 + $0x68] sm:$0xff]
      %v1463 = vld [vmem:[%s1452 + $0x78] sm:$0xff]
      %v1464 = vld [vmem:[%s1452 + $0x80] sm:$0xff]
      %v1465 = vld [vmem:[%s1452 + $0x90] sm:$0xff]
      %v1466 = vld [vmem:[%s1452 + $0x98] sm:$0xff]
      %v1467 = vld [vmem:[%s1452 + $0xa8] sm:$0xff]
      %v1468 = vld [vmem:[%s1452 + $0xb0] sm:$0xff]
      %v1469 = vld [vmem:[%s1452 + $0xc0] sm:$0xff]
      %v1470 = vld [vmem:[%s1452 + $0xc8] sm:$0xff]
      %v1471 = vld [vmem:[%s1452 + $0xd8] sm:$0xff]
      %v1472 = vld [vmem:[%s1452 + $0xe0] sm:$0xff]
      %v1473 = vld [vmem:[%s1452 + $0xf0] sm:$0xff]
      %v1474 = vld [vmem:[%s1452 + $0xf8] sm:$0xff]
      %v1475 = vld [vmem:[%s1452 + $0x108] sm:$0xff]
      %v1476 = vld [vmem:[%s1452 + $0x110] sm:$0xff]
      %v1477 = vld [vmem:[%s1452 + $0x120] sm:$0xff]
      %v1478 = vld [vmem:[%s1452 + $0x128] sm:$0xff]
      %v1479 = vld [vmem:[%s1452 + $0x138] sm:$0xff]
      %v1480 = vld [vmem:[%s1452 + $0x140] sm:$0xff]
      %v1481 = vld [vmem:[%s1452 + $0x150] sm:$0xff]
      %v1482 = vld [vmem:[%s1452 + $0x158] sm:$0xff]
      %v1483 = vld [vmem:[%s1452 + $0x168] sm:$0xff]
      %v1484 = vld [vmem:[%s1452 + $0x170] sm:$0xff]
      %v1485 = vld [vmem:[%s3 + $0x6] sm:$0x1]
      %v1486 = vperm.slane %v1485, 0
      %v1487 = vmul.f32 %v1453, %v1486
      %v1488 = vmul.f32 %v1454, %v1486
      %v1489 = vmul.f32 %v1455, %v1486
      %v1490 = vmul.f32 %v1456, %v1486
      %v1491 = vmul.f32 %v1457, %v1486
      %v1492 = vmul.f32 %v1458, %v1486
      %v1493 = vmul.f32 %v1459, %v1486
      %v1494 = vmul.f32 %v1460, %v1486
      %v1495 = vmul.f32 %v1461, %v1486
      %v1496 = vmul.f32 %v1462, %v1486
      %v1497 = vmul.f32 %v1463, %v1486
      %v1498 = vmul.f32 %v1464, %v1486
      %v1499 = vmul.f32 %v1465, %v1486
      %v1500 = vmul.f32 %v1466, %v1486
      %v1501 = vmul.f32 %v1467, %v1486
      %v1502 = vmul.f32 %v1468, %v1486
      %v1503 = vmul.f32 %v1469, %v1486
      %v1504 = vmul.f32 %v1470, %v1486
      %v1505 = vmul.f32 %v1471, %v1486
      %v1506 = vmul.f32 %v1472, %v1486
      %v1507 = vmul.f32 %v1473, %v1486
      %v1508 = vmul.f32 %v1474, %v1486
      %v1509 = vmul.f32 %v1475, %v1486
      %v1510 = vmul.f32 %v1476, %v1486
      %v1511 = vmul.f32 %v1477, %v1486
      %v1512 = vmul.f32 %v1478, %v1486
      %v1513 = vmul.f32 %v1479, %v1486
      %v1514 = vmul.f32 %v1480, %v1486
      %v1515 = vmul.f32 %v1481, %v1486
      %v1516 = vmul.f32 %v1482, %v1486
      %v1517 = vmul.f32 %v1483, %v1486
      %v1518 = vmul.f32 %v1484, %v1486
      %v1519 = vld [vmem:[#allocation3] sm:$0xff]
      %v1520 = vld [vmem:[#allocation3 + $0x8] sm:$0xff]
      %v1521 = vld [vmem:[#allocation3 + $0x10] sm:$0xff]
      %v1522 = vld [vmem:[#allocation3 + $0x18] sm:$0xff]
      %v1523 = vld [vmem:[#allocation3 + $0x20] sm:$0xff]
      %v1524 = vld [vmem:[#allocation3 + $0x28] sm:$0xff]
      %v1525 = vld [vmem:[#allocation3 + $0x30] sm:$0xff]
      %v1526 = vld [vmem:[#allocation3 + $0x38] sm:$0xff]
      %v1527 = vld [vmem:[#allocation3 + $0x40] sm:$0xff]
      %v1528 = vld [vmem:[#allocation3 + $0x48] sm:$0xff]
      %v1529 = vld [vmem:[#allocation3 + $0x50] sm:$0xff]
      %v1530 = vld [vmem:[#allocation3 + $0x58] sm:$0xff]
      %v1531 = vld [vmem:[#allocation3 + $0x60] sm:$0xff]
      %v1532 = vld [vmem:[#allocation3 + $0x68] sm:$0xff]
      %v1533 = vld [vmem:[#allocation3 + $0x70] sm:$0xff]
      %v1534 = vld [vmem:[#allocation3 + $0x78] sm:$0xff]
      %v1535 = vld [vmem:[#allocation3 + $0x80] sm:$0xff]
      %v1536 = vld [vmem:[#allocation3 + $0x88] sm:$0xff]
      %v1537 = vld [vmem:[#allocation3 + $0x90] sm:$0xff]
      %v1538 = vld [vmem:[#allocation3 + $0x98] sm:$0xff]
      %v1539 = vld [vmem:[#allocation3 + $0xa0] sm:$0xff]
      %v1540 = vld [vmem:[#allocation3 + $0xa8] sm:$0xff]
      %v1541 = vld [vmem:[#allocation3 + $0xb0] sm:$0xff]
      %v1542 = vld [vmem:[#allocation3 + $0xb8] sm:$0xff]
      %v1543 = vld [vmem:[#allocation3 + $0xc0] sm:$0xff]
      %v1544 = vld [vmem:[#allocation3 + $0xc8] sm:$0xff]
      %v1545 = vld [vmem:[#allocation3 + $0xd0] sm:$0xff]
      %v1546 = vld [vmem:[#allocation3 + $0xd8] sm:$0xff]
      %v1547 = vld [vmem:[#allocation3 + $0xe0] sm:$0xff]
      %v1548 = vld [vmem:[#allocation3 + $0xe8] sm:$0xff]
      %v1549 = vld [vmem:[#allocation3 + $0xf0] sm:$0xff]
      %v1550 = vld [vmem:[#allocation3 + $0xf8] sm:$0xff]
      %v1551 = vadd.f32 %v1519, %v1487
      %v1552 = vadd.f32 %v1520, %v1488
      %v1553 = vadd.f32 %v1521, %v1489
      %v1554 = vadd.f32 %v1522, %v1490
      %v1555 = vadd.f32 %v1523, %v1491
      %v1556 = vadd.f32 %v1524, %v1492
      %v1557 = vadd.f32 %v1525, %v1493
      %v1558 = vadd.f32 %v1526, %v1494
      %v1559 = vadd.f32 %v1527, %v1495
      %v1560 = vadd.f32 %v1528, %v1496
      %v1561 = vadd.f32 %v1529, %v1497
      %v1562 = vadd.f32 %v1530, %v1498
      %v1563 = vadd.f32 %v1531, %v1499
      %v1564 = vadd.f32 %v1532, %v1500
      %v1565 = vadd.f32 %v1533, %v1501
      %v1566 = vadd.f32 %v1534, %v1502
      %v1567 = vadd.f32 %v1535, %v1503
      %v1568 = vadd.f32 %v1536, %v1504
      %v1569 = vadd.f32 %v1537, %v1505
      %v1570 = vadd.f32 %v1538, %v1506
      %v1571 = vadd.f32 %v1539, %v1507
      %v1572 = vadd.f32 %v1540, %v1508
      %v1573 = vadd.f32 %v1541, %v1509
      %v1574 = vadd.f32 %v1542, %v1510
      %v1575 = vadd.f32 %v1543, %v1511
      %v1576 = vadd.f32 %v1544, %v1512
      %v1577 = vadd.f32 %v1545, %v1513
      %v1578 = vadd.f32 %v1546, %v1514
      %v1579 = vadd.f32 %v1547, %v1515
      %v1580 = vadd.f32 %v1548, %v1516
      %v1581 = vadd.f32 %v1549, %v1517
      %v1582 = vadd.f32 %v1550, %v1518
      %1583 = vst.msk [vmem:[#allocation3] sm:$0xff] %vm468, %v1551
      %1584 = vst.msk [vmem:[#allocation3 + $0x8] sm:$0xff] %vm468, %v1552
      %1585 = vst.msk [vmem:[#allocation3 + $0x10] sm:$0xff] %vm468, %v1553
      %1586 = vst.msk [vmem:[#allocation3 + $0x18] sm:$0xff] %vm468, %v1554
      %1587 = vst.msk [vmem:[#allocation3 + $0x20] sm:$0xff] %vm468, %v1555
      %1588 = vst.msk [vmem:[#allocation3 + $0x28] sm:$0xff] %vm468, %v1556
      %1589 = vst.msk [vmem:[#allocation3 + $0x30] sm:$0xff] %vm468, %v1557
      %1590 = vst.msk [vmem:[#allocation3 + $0x38] sm:$0xff] %vm468, %v1558
      %1591 = vst.msk [vmem:[#allocation3 + $0x40] sm:$0xff] %vm468, %v1559
      %1592 = vst.msk [vmem:[#allocation3 + $0x48] sm:$0xff] %vm468, %v1560
      %1593 = vst.msk [vmem:[#allocation3 + $0x50] sm:$0xff] %vm468, %v1561
      %1594 = vst.msk [vmem:[#allocation3 + $0x58] sm:$0xff] %vm468, %v1562
      %1595 = vst.msk [vmem:[#allocation3 + $0x60] sm:$0xff] %vm468, %v1563
      %1596 = vst.msk [vmem:[#allocation3 + $0x68] sm:$0xff] %vm468, %v1564
      %1597 = vst.msk [vmem:[#allocation3 + $0x70] sm:$0xff] %vm468, %v1565
      %1598 = vst.msk [vmem:[#allocation3 + $0x78] sm:$0xff] %vm468, %v1566
      %1599 = vst.msk [vmem:[#allocation3 + $0x80] sm:$0xff] %vm468, %v1567
      %1600 = vst.msk [vmem:[#allocation3 + $0x88] sm:$0xff] %vm468, %v1568
      %1601 = vst.msk [vmem:[#allocation3 + $0x90] sm:$0xff] %vm468, %v1569
      %1602 = vst.msk [vmem:[#allocation3 + $0x98] sm:$0xff] %vm468, %v1570
      %1603 = vst.msk [vmem:[#allocation3 + $0xa0] sm:$0xff] %vm468, %v1571
      %1604 = vst.msk [vmem:[#allocation3 + $0xa8] sm:$0xff] %vm468, %v1572
      %1605 = vst.msk [vmem:[#allocation3 + $0xb0] sm:$0xff] %vm468, %v1573
      %1606 = vst.msk [vmem:[#allocation3 + $0xb8] sm:$0xff] %vm468, %v1574
      %1607 = vst.msk [vmem:[#allocation3 + $0xc0] sm:$0xff] %vm468, %v1575
      %1608 = vst.msk [vmem:[#allocation3 + $0xc8] sm:$0xff] %vm468, %v1576
      %1609 = vst.msk [vmem:[#allocation3 + $0xd0] sm:$0xff] %vm468, %v1577
      %1610 = vst.msk [vmem:[#allocation3 + $0xd8] sm:$0xff] %vm468, %v1578
      %1611 = vst.msk [vmem:[#allocation3 + $0xe0] sm:$0xff] %vm468, %v1579
      %1612 = vst.msk [vmem:[#allocation3 + $0xe8] sm:$0xff] %vm468, %v1580
      %1613 = vst.msk [vmem:[#allocation3 + $0xf0] sm:$0xff] %vm468, %v1581
      %1614 = vst.msk [vmem:[#allocation3 + $0xf8] sm:$0xff] %vm468, %v1582
      %v1615 = vld [vmem:[%s1452 + $0x1] sm:$0xff]
      %v1616 = vld [vmem:[%s1452 + $0x9] sm:$0xff]
      %v1617 = vld [vmem:[%s1452 + $0x19] sm:$0xff]
      %v1618 = vld [vmem:[%s1452 + $0x21] sm:$0xff]
      %v1619 = vld [vmem:[%s1452 + $0x31] sm:$0xff]
      %v1620 = vld [vmem:[%s1452 + $0x39] sm:$0xff]
      %v1621 = vld [vmem:[%s1452 + $0x49] sm:$0xff]
      %v1622 = vld [vmem:[%s1452 + $0x51] sm:$0xff]
      %v1623 = vld [vmem:[%s1452 + $0x61] sm:$0xff]
      %v1624 = vld [vmem:[%s1452 + $0x69] sm:$0xff]
      %v1625 = vld [vmem:[%s1452 + $0x79] sm:$0xff]
      %v1626 = vld [vmem:[%s1452 + $0x81] sm:$0xff]
      %v1627 = vld [vmem:[%s1452 + $0x91] sm:$0xff]
      %v1628 = vld [vmem:[%s1452 + $0x99] sm:$0xff]
      %v1629 = vld [vmem:[%s1452 + $0xa9] sm:$0xff]
      %v1630 = vld [vmem:[%s1452 + $0xb1] sm:$0xff]
      %v1631 = vld [vmem:[%s1452 + $0xc1] sm:$0xff]
      %v1632 = vld [vmem:[%s1452 + $0xc9] sm:$0xff]
      %v1633 = vld [vmem:[%s1452 + $0xd9] sm:$0xff]
      %v1634 = vld [vmem:[%s1452 + $0xe1] sm:$0xff]
      %v1635 = vld [vmem:[%s1452 + $0xf1] sm:$0xff]
      %v1636 = vld [vmem:[%s1452 + $0xf9] sm:$0xff]
      %v1637 = vld [vmem:[%s1452 + $0x109] sm:$0xff]
      %v1638 = vld [vmem:[%s1452 + $0x111] sm:$0xff]
      %v1639 = vld [vmem:[%s1452 + $0x121] sm:$0xff]
      %v1640 = vld [vmem:[%s1452 + $0x129] sm:$0xff]
      %v1641 = vld [vmem:[%s1452 + $0x139] sm:$0xff]
      %v1642 = vld [vmem:[%s1452 + $0x141] sm:$0xff]
      %v1643 = vld [vmem:[%s1452 + $0x151] sm:$0xff]
      %v1644 = vld [vmem:[%s1452 + $0x159] sm:$0xff]
      %v1645 = vld [vmem:[%s1452 + $0x169] sm:$0xff]
      %v1646 = vld [vmem:[%s1452 + $0x171] sm:$0xff]
      %v1647 = vld [vmem:[%s3 + $0x7] sm:$0x1]
      %v1648 = vperm.slane %v1647, 0
      %v1649 = vmul.f32 %v1615, %v1648
      %v1650 = vmul.f32 %v1616, %v1648
      %v1651 = vmul.f32 %v1617, %v1648
      %v1652 = vmul.f32 %v1618, %v1648
      %v1653 = vmul.f32 %v1619, %v1648
      %v1654 = vmul.f32 %v1620, %v1648
      %v1655 = vmul.f32 %v1621, %v1648
      %v1656 = vmul.f32 %v1622, %v1648
      %v1657 = vmul.f32 %v1623, %v1648
      %v1658 = vmul.f32 %v1624, %v1648
      %v1659 = vmul.f32 %v1625, %v1648
      %v1660 = vmul.f32 %v1626, %v1648
      %v1661 = vmul.f32 %v1627, %v1648
      %v1662 = vmul.f32 %v1628, %v1648
      %v1663 = vmul.f32 %v1629, %v1648
      %v1664 = vmul.f32 %v1630, %v1648
      %v1665 = vmul.f32 %v1631, %v1648
      %v1666 = vmul.f32 %v1632, %v1648
      %v1667 = vmul.f32 %v1633, %v1648
      %v1668 = vmul.f32 %v1634, %v1648
      %v1669 = vmul.f32 %v1635, %v1648
      %v1670 = vmul.f32 %v1636, %v1648
      %v1671 = vmul.f32 %v1637, %v1648
      %v1672 = vmul.f32 %v1638, %v1648
      %v1673 = vmul.f32 %v1639, %v1648
      %v1674 = vmul.f32 %v1640, %v1648
      %v1675 = vmul.f32 %v1641, %v1648
      %v1676 = vmul.f32 %v1642, %v1648
      %v1677 = vmul.f32 %v1643, %v1648
      %v1678 = vmul.f32 %v1644, %v1648
      %v1679 = vmul.f32 %v1645, %v1648
      %v1680 = vmul.f32 %v1646, %v1648
      %v1681 = vld [vmem:[#allocation3] sm:$0xff]
      %v1682 = vld [vmem:[#allocation3 + $0x8] sm:$0xff]
      %v1683 = vld [vmem:[#allocation3 + $0x10] sm:$0xff]
      %v1684 = vld [vmem:[#allocation3 + $0x18] sm:$0xff]
      %v1685 = vld [vmem:[#allocation3 + $0x20] sm:$0xff]
      %v1686 = vld [vmem:[#allocation3 + $0x28] sm:$0xff]
      %v1687 = vld [vmem:[#allocation3 + $0x30] sm:$0xff]
      %v1688 = vld [vmem:[#allocation3 + $0x38] sm:$0xff]
      %v1689 = vld [vmem:[#allocation3 + $0x40] sm:$0xff]
      %v1690 = vld [vmem:[#allocation3 + $0x48] sm:$0xff]
      %v1691 = vld [vmem:[#allocation3 + $0x50] sm:$0xff]
      %v1692 = vld [vmem:[#allocation3 + $0x58] sm:$0xff]
      %v1693 = vld [vmem:[#allocation3 + $0x60] sm:$0xff]
      %v1694 = vld [vmem:[#allocation3 + $0x68] sm:$0xff]
      %v1695 = vld [vmem:[#allocation3 + $0x70] sm:$0xff]
      %v1696 = vld [vmem:[#allocation3 + $0x78] sm:$0xff]
      %v1697 = vld [vmem:[#allocation3 + $0x80] sm:$0xff]
      %v1698 = vld [vmem:[#allocation3 + $0x88] sm:$0xff]
      %v1699 = vld [vmem:[#allocation3 + $0x90] sm:$0xff]
      %v1700 = vld [vmem:[#allocation3 + $0x98] sm:$0xff]
      %v1701 = vld [vmem:[#allocation3 + $0xa0] sm:$0xff]
      %v1702 = vld [vmem:[#allocation3 + $0xa8] sm:$0xff]
      %v1703 = vld [vmem:[#allocation3 + $0xb0] sm:$0xff]
      %v1704 = vld [vmem:[#allocation3 + $0xb8] sm:$0xff]
      %v1705 = vld [vmem:[#allocation3 + $0xc0] sm:$0xff]
      %v1706 = vld [vmem:[#allocation3 + $0xc8] sm:$0xff]
      %v1707 = vld [vmem:[#allocation3 + $0xd0] sm:$0xff]
      %v1708 = vld [vmem:[#allocation3 + $0xd8] sm:$0xff]
      %v1709 = vld [vmem:[#allocation3 + $0xe0] sm:$0xff]
      %v1710 = vld [vmem:[#allocation3 + $0xe8] sm:$0xff]
      %v1711 = vld [vmem:[#allocation3 + $0xf0] sm:$0xff]
      %v1712 = vld [vmem:[#allocation3 + $0xf8] sm:$0xff]
      %v1713 = vadd.f32 %v1681, %v1649
      %v1714 = vadd.f32 %v1682, %v1650
      %v1715 = vadd.f32 %v1683, %v1651
      %v1716 = vadd.f32 %v1684, %v1652
      %v1717 = vadd.f32 %v1685, %v1653
      %v1718 = vadd.f32 %v1686, %v1654
      %v1719 = vadd.f32 %v1687, %v1655
      %v1720 = vadd.f32 %v1688, %v1656
      %v1721 = vadd.f32 %v1689, %v1657
      %v1722 = vadd.f32 %v1690, %v1658
      %v1723 = vadd.f32 %v1691, %v1659
      %v1724 = vadd.f32 %v1692, %v1660
      %v1725 = vadd.f32 %v1693, %v1661
      %v1726 = vadd.f32 %v1694, %v1662
      %v1727 = vadd.f32 %v1695, %v1663
      %v1728 = vadd.f32 %v1696, %v1664
      %v1729 = vadd.f32 %v1697, %v1665
      %v1730 = vadd.f32 %v1698, %v1666
      %v1731 = vadd.f32 %v1699, %v1667
      %v1732 = vadd.f32 %v1700, %v1668
      %v1733 = vadd.f32 %v1701, %v1669
      %v1734 = vadd.f32 %v1702, %v1670
      %v1735 = vadd.f32 %v1703, %v1671
      %v1736 = vadd.f32 %v1704, %v1672
      %v1737 = vadd.f32 %v1705, %v1673
      %v1738 = vadd.f32 %v1706, %v1674
      %v1739 = vadd.f32 %v1707, %v1675
      %v1740 = vadd.f32 %v1708, %v1676
      %v1741 = vadd.f32 %v1709, %v1677
      %v1742 = vadd.f32 %v1710, %v1678
      %v1743 = vadd.f32 %v1711, %v1679
      %v1744 = vadd.f32 %v1712, %v1680
      %1745 = vst.msk [vmem:[#allocation3] sm:$0xff] %vm468, %v1713
      %1746 = vst.msk [vmem:[#allocation3 + $0x8] sm:$0xff] %vm468, %v1714
      %1747 = vst.msk [vmem:[#allocation3 + $0x10] sm:$0xff] %vm468, %v1715
      %1748 = vst.msk [vmem:[#allocation3 + $0x18] sm:$0xff] %vm468, %v1716
      %1749 = vst.msk [vmem:[#allocation3 + $0x20] sm:$0xff] %vm468, %v1717
      %1750 = vst.msk [vmem:[#allocation3 + $0x28] sm:$0xff] %vm468, %v1718
      %1751 = vst.msk [vmem:[#allocation3 + $0x30] sm:$0xff] %vm468, %v1719
      %1752 = vst.msk [vmem:[#allocation3 + $0x38] sm:$0xff] %vm468, %v1720
      %1753 = vst.msk [vmem:[#allocation3 + $0x40] sm:$0xff] %vm468, %v1721
      %1754 = vst.msk [vmem:[#allocation3 + $0x48] sm:$0xff] %vm468, %v1722
      %1755 = vst.msk [vmem:[#allocation3 + $0x50] sm:$0xff] %vm468, %v1723
      %1756 = vst.msk [vmem:[#allocation3 + $0x58] sm:$0xff] %vm468, %v1724
      %1757 = vst.msk [vmem:[#allocation3 + $0x60] sm:$0xff] %vm468, %v1725
      %1758 = vst.msk [vmem:[#allocation3 + $0x68] sm:$0xff] %vm468, %v1726
      %1759 = vst.msk [vmem:[#allocation3 + $0x70] sm:$0xff] %vm468, %v1727
      %1760 = vst.msk [vmem:[#allocation3 + $0x78] sm:$0xff] %vm468, %v1728
      %1761 = vst.msk [vmem:[#allocation3 + $0x80] sm:$0xff] %vm468, %v1729
      %1762 = vst.msk [vmem:[#allocation3 + $0x88] sm:$0xff] %vm468, %v1730
      %1763 = vst.msk [vmem:[#allocation3 + $0x90] sm:$0xff] %vm468, %v1731
      %1764 = vst.msk [vmem:[#allocation3 + $0x98] sm:$0xff] %vm468, %v1732
      %1765 = vst.msk [vmem:[#allocation3 + $0xa0] sm:$0xff] %vm468, %v1733
      %1766 = vst.msk [vmem:[#allocation3 + $0xa8] sm:$0xff] %vm468, %v1734
      %1767 = vst.msk [vmem:[#allocation3 + $0xb0] sm:$0xff] %vm468, %v1735
      %1768 = vst.msk [vmem:[#allocation3 + $0xb8] sm:$0xff] %vm468, %v1736
      %1769 = vst.msk [vmem:[#allocation3 + $0xc0] sm:$0xff] %vm468, %v1737
      %1770 = vst.msk [vmem:[#allocation3 + $0xc8] sm:$0xff] %vm468, %v1738
      %1771 = vst.msk [vmem:[#allocation3 + $0xd0] sm:$0xff] %vm468, %v1739
      %1772 = vst.msk [vmem:[#allocation3 + $0xd8] sm:$0xff] %vm468, %v1740
      %1773 = vst.msk [vmem:[#allocation3 + $0xe0] sm:$0xff] %vm468, %v1741
      %1774 = vst.msk [vmem:[#allocation3 + $0xe8] sm:$0xff] %vm468, %v1742
      %1775 = vst.msk [vmem:[#allocation3 + $0xf0] sm:$0xff] %vm468, %v1743
      %1776 = vst.msk [vmem:[#allocation3 + $0xf8] sm:$0xff] %vm468, %v1744
      %v1777 = vld [vmem:[%s1452 + $0x2] sm:$0xff]
      %v1778 = vld [vmem:[%s1452 + $0xa] sm:$0xff]
      %v1779 = vld [vmem:[%s1452 + $0x1a] sm:$0xff]
      %v1780 = vld [vmem:[%s1452 + $0x22] sm:$0xff]
      %v1781 = vld [vmem:[%s1452 + $0x32] sm:$0xff]
      %v1782 = vld [vmem:[%s1452 + $0x3a] sm:$0xff]
      %v1783 = vld [vmem:[%s1452 + $0x4a] sm:$0xff]
      %v1784 = vld [vmem:[%s1452 + $0x52] sm:$0xff]
      %v1785 = vld [vmem:[%s1452 + $0x62] sm:$0xff]
      %v1786 = vld [vmem:[%s1452 + $0x6a] sm:$0xff]
      %v1787 = vld [vmem:[%s1452 + $0x7a] sm:$0xff]
      %v1788 = vld [vmem:[%s1452 + $0x82] sm:$0xff]
      %v1789 = vld [vmem:[%s1452 + $0x92] sm:$0xff]
      %v1790 = vld [vmem:[%s1452 + $0x9a] sm:$0xff]
      %v1791 = vld [vmem:[%s1452 + $0xaa] sm:$0xff]
      %v1792 = vld [vmem:[%s1452 + $0xb2] sm:$0xff]
      %v1793 = vld [vmem:[%s1452 + $0xc2] sm:$0xff]
      %v1794 = vld [vmem:[%s1452 + $0xca] sm:$0xff]
      %v1795 = vld [vmem:[%s1452 + $0xda] sm:$0xff]
      %v1796 = vld [vmem:[%s1452 + $0xe2] sm:$0xff]
      %v1797 = vld [vmem:[%s1452 + $0xf2] sm:$0xff]
      %v1798 = vld [vmem:[%s1452 + $0xfa] sm:$0xff]
      %v1799 = vld [vmem:[%s1452 + $0x10a] sm:$0xff]
      %v1800 = vld [vmem:[%s1452 + $0x112] sm:$0xff]
      %v1801 = vld [vmem:[%s1452 + $0x122] sm:$0xff]
      %v1802 = vld [vmem:[%s1452 + $0x12a] sm:$0xff]
      %v1803 = vld [vmem:[%s1452 + $0x13a] sm:$0xff]
      %v1804 = vld [vmem:[%s1452 + $0x142] sm:$0xff]
      %v1805 = vld [vmem:[%s1452 + $0x152] sm:$0xff]
      %v1806 = vld [vmem:[%s1452 + $0x15a] sm:$0xff]
      %v1807 = vld [vmem:[%s1452 + $0x16a] sm:$0xff]
      %v1808 = vld [vmem:[%s1452 + $0x172] sm:$0xff]
      %v1809 = vld [vmem:[%s3 + $0x8] sm:$0x1]
      %v1810 = vperm.slane %v1809, 0
      %v1811 = vmul.f32 %v1777, %v1810
      %v1812 = vmul.f32 %v1778, %v1810
      %v1813 = vmul.f32 %v1779, %v1810
      %v1814 = vmul.f32 %v1780, %v1810
      %v1815 = vmul.f32 %v1781, %v1810
      %v1816 = vmul.f32 %v1782, %v1810
      %v1817 = vmul.f32 %v1783, %v1810
      %v1818 = vmul.f32 %v1784, %v1810
      %v1819 = vmul.f32 %v1785, %v1810
      %v1820 = vmul.f32 %v1786, %v1810
      %v1821 = vmul.f32 %v1787, %v1810
      %v1822 = vmul.f32 %v1788, %v1810
      %v1823 = vmul.f32 %v1789, %v1810
      %v1824 = vmul.f32 %v1790, %v1810
      %v1825 = vmul.f32 %v1791, %v1810
      %v1826 = vmul.f32 %v1792, %v1810
      %v1827 = vmul.f32 %v1793, %v1810
      %v1828 = vmul.f32 %v1794, %v1810
      %v1829 = vmul.f32 %v1795, %v1810
      %v1830 = vmul.f32 %v1796, %v1810
      %v1831 = vmul.f32 %v1797, %v1810
      %v1832 = vmul.f32 %v1798, %v1810
      %v1833 = vmul.f32 %v1799, %v1810
      %v1834 = vmul.f32 %v1800, %v1810
      %v1835 = vmul.f32 %v1801, %v1810
      %v1836 = vmul.f32 %v1802, %v1810
      %v1837 = vmul.f32 %v1803, %v1810
      %v1838 = vmul.f32 %v1804, %v1810
      %v1839 = vmul.f32 %v1805, %v1810
      %v1840 = vmul.f32 %v1806, %v1810
      %v1841 = vmul.f32 %v1807, %v1810
      %v1842 = vmul.f32 %v1808, %v1810
      %v1843 = vld [vmem:[#allocation3] sm:$0xff]
      %v1844 = vld [vmem:[#allocation3 + $0x8] sm:$0xff]
      %v1845 = vld [vmem:[#allocation3 + $0x10] sm:$0xff]
      %v1846 = vld [vmem:[#allocation3 + $0x18] sm:$0xff]
      %v1847 = vld [vmem:[#allocation3 + $0x20] sm:$0xff]
      %v1848 = vld [vmem:[#allocation3 + $0x28] sm:$0xff]
      %v1849 = vld [vmem:[#allocation3 + $0x30] sm:$0xff]
      %v1850 = vld [vmem:[#allocation3 + $0x38] sm:$0xff]
      %v1851 = vld [vmem:[#allocation3 + $0x40] sm:$0xff]
      %v1852 = vld [vmem:[#allocation3 + $0x48] sm:$0xff]
      %v1853 = vld [vmem:[#allocation3 + $0x50] sm:$0xff]
      %v1854 = vld [vmem:[#allocation3 + $0x58] sm:$0xff]
      %v1855 = vld [vmem:[#allocation3 + $0x60] sm:$0xff]
      %v1856 = vld [vmem:[#allocation3 + $0x68] sm:$0xff]
      %v1857 = vld [vmem:[#allocation3 + $0x70] sm:$0xff]
      %v1858 = vld [vmem:[#allocation3 + $0x78] sm:$0xff]
      %v1859 = vld [vmem:[#allocation3 + $0x80] sm:$0xff]
      %v1860 = vld [vmem:[#allocation3 + $0x88] sm:$0xff]
      %v1861 = vld [vmem:[#allocation3 + $0x90] sm:$0xff]
      %v1862 = vld [vmem:[#allocation3 + $0x98] sm:$0xff]
      %v1863 = vld [vmem:[#allocation3 + $0xa0] sm:$0xff]
      %v1864 = vld [vmem:[#allocation3 + $0xa8] sm:$0xff]
      %v1865 = vld [vmem:[#allocation3 + $0xb0] sm:$0xff]
      %v1866 = vld [vmem:[#allocation3 + $0xb8] sm:$0xff]
      %v1867 = vld [vmem:[#allocation3 + $0xc0] sm:$0xff]
      %v1868 = vld [vmem:[#allocation3 + $0xc8] sm:$0xff]
      %v1869 = vld [vmem:[#allocation3 + $0xd0] sm:$0xff]
      %v1870 = vld [vmem:[#allocation3 + $0xd8] sm:$0xff]
      %v1871 = vld [vmem:[#allocation3 + $0xe0] sm:$0xff]
      %v1872 = vld [vmem:[#allocation3 + $0xe8] sm:$0xff]
      %v1873 = vld [vmem:[#allocation3 + $0xf0] sm:$0xff]
      %v1874 = vld [vmem:[#allocation3 + $0xf8] sm:$0xff]
      %v1875 = vadd.f32 %v1843, %v1811
      %v1876 = vadd.f32 %v1844, %v1812
      %v1877 = vadd.f32 %v1845, %v1813
      %v1878 = vadd.f32 %v1846, %v1814
      %v1879 = vadd.f32 %v1847, %v1815
      %v1880 = vadd.f32 %v1848, %v1816
      %v1881 = vadd.f32 %v1849, %v1817
      %v1882 = vadd.f32 %v1850, %v1818
      %v1883 = vadd.f32 %v1851, %v1819
      %v1884 = vadd.f32 %v1852, %v1820
      %v1885 = vadd.f32 %v1853, %v1821
      %v1886 = vadd.f32 %v1854, %v1822
      %v1887 = vadd.f32 %v1855, %v1823
      %v1888 = vadd.f32 %v1856, %v1824
      %v1889 = vadd.f32 %v1857, %v1825
      %v1890 = vadd.f32 %v1858, %v1826
      %v1891 = vadd.f32 %v1859, %v1827
      %v1892 = vadd.f32 %v1860, %v1828
      %v1893 = vadd.f32 %v1861, %v1829
      %v1894 = vadd.f32 %v1862, %v1830
      %v1895 = vadd.f32 %v1863, %v1831
      %v1896 = vadd.f32 %v1864, %v1832
      %v1897 = vadd.f32 %v1865, %v1833
      %v1898 = vadd.f32 %v1866, %v1834
      %v1899 = vadd.f32 %v1867, %v1835
      %v1900 = vadd.f32 %v1868, %v1836
      %v1901 = vadd.f32 %v1869, %v1837
      %v1902 = vadd.f32 %v1870, %v1838
      %v1903 = vadd.f32 %v1871, %v1839
      %v1904 = vadd.f32 %v1872, %v1840
      %v1905 = vadd.f32 %v1873, %v1841
      %v1906 = vadd.f32 %v1874, %v1842
      %1907 = vst.msk [vmem:[#allocation3] sm:$0xff] %vm468, %v1875
      %1908 = vst.msk [vmem:[#allocation3 + $0x8] sm:$0xff] %vm468, %v1876
      %1909 = vst.msk [vmem:[#allocation3 + $0x10] sm:$0xff] %vm468, %v1877
      %1910 = vst.msk [vmem:[#allocation3 + $0x18] sm:$0xff] %vm468, %v1878
      %1911 = vst.msk [vmem:[#allocation3 + $0x20] sm:$0xff] %vm468, %v1879
      %1912 = vst.msk [vmem:[#allocation3 + $0x28] sm:$0xff] %vm468, %v1880
      %1913 = vst.msk [vmem:[#allocation3 + $0x30] sm:$0xff] %vm468, %v1881
      %1914 = vst.msk [vmem:[#allocation3 + $0x38] sm:$0xff] %vm468, %v1882
      %1915 = vst.msk [vmem:[#allocation3 + $0x40] sm:$0xff] %vm468, %v1883
      %1916 = vst.msk [vmem:[#allocation3 + $0x48] sm:$0xff] %vm468, %v1884
      %1917 = vst.msk [vmem:[#allocation3 + $0x50] sm:$0xff] %vm468, %v1885
      %1918 = vst.msk [vmem:[#allocation3 + $0x58] sm:$0xff] %vm468, %v1886
      %1919 = vst.msk [vmem:[#allocation3 + $0x60] sm:$0xff] %vm468, %v1887
      %1920 = vst.msk [vmem:[#allocation3 + $0x68] sm:$0xff] %vm468, %v1888
      %1921 = vst.msk [vmem:[#allocation3 + $0x70] sm:$0xff] %vm468, %v1889
      %1922 = vst.msk [vmem:[#allocation3 + $0x78] sm:$0xff] %vm468, %v1890
      %1923 = vst.msk [vmem:[#allocation3 + $0x80] sm:$0xff] %vm468, %v1891
      %1924 = vst.msk [vmem:[#allocation3 + $0x88] sm:$0xff] %vm468, %v1892
      %1925 = vst.msk [vmem:[#allocation3 + $0x90] sm:$0xff] %vm468, %v1893
      %1926 = vst.msk [vmem:[#allocation3 + $0x98] sm:$0xff] %vm468, %v1894
      %1927 = vst.msk [vmem:[#allocation3 + $0xa0] sm:$0xff] %vm468, %v1895
      %1928 = vst.msk [vmem:[#allocation3 + $0xa8] sm:$0xff] %vm468, %v1896
      %1929 = vst.msk [vmem:[#allocation3 + $0xb0] sm:$0xff] %vm468, %v1897
      %1930 = vst.msk [vmem:[#allocation3 + $0xb8] sm:$0xff] %vm468, %v1898
      %1931 = vst.msk [vmem:[#allocation3 + $0xc0] sm:$0xff] %vm468, %v1899
      %1932 = vst.msk [vmem:[#allocation3 + $0xc8] sm:$0xff] %vm468, %v1900
      %1933 = vst.msk [vmem:[#allocation3 + $0xd0] sm:$0xff] %vm468, %v1901
      %1934 = vst.msk [vmem:[#allocation3 + $0xd8] sm:$0xff] %vm468, %v1902
      %1935 = vst.msk [vmem:[#allocation3 + $0xe0] sm:$0xff] %vm468, %v1903
      %1936 = vst.msk [vmem:[#allocation3 + $0xe8] sm:$0xff] %vm468, %v1904
      %1937 = vst.msk [vmem:[#allocation3 + $0xf0] sm:$0xff] %vm468, %v1905
      %1938 = vst.msk [vmem:[#allocation3 + $0xf8] sm:$0xff] %vm468, %v1906
      %v1939 = vld [vmem:[#allocation3] sm:$0xff]
      %v1940 = vld [vmem:[#allocation3 + $0x8] sm:$0xff]
      %v1941 = vld [vmem:[#allocation3 + $0x10] sm:$0xff]
      %v1942 = vld [vmem:[#allocation3 + $0x18] sm:$0xff]
      %v1943 = vld [vmem:[#allocation3 + $0x20] sm:$0xff]
      %v1944 = vld [vmem:[#allocation3 + $0x28] sm:$0xff]
      %v1945 = vld [vmem:[#allocation3 + $0x30] sm:$0xff]
      %v1946 = vld [vmem:[#allocation3 + $0x38] sm:$0xff]
      %v1947 = vld [vmem:[#allocation3 + $0x40] sm:$0xff]
      %v1948 = vld [vmem:[#allocation3 + $0x48] sm:$0xff]
      %v1949 = vld [vmem:[#allocation3 + $0x50] sm:$0xff]
      %v1950 = vld [vmem:[#allocation3 + $0x58] sm:$0xff]
      %v1951 = vld [vmem:[#allocation3 + $0x60] sm:$0xff]
      %v1952 = vld [vmem:[#allocation3 + $0x68] sm:$0xff]
      %v1953 = vld [vmem:[#allocation3 + $0x70] sm:$0xff]
      %v1954 = vld [vmem:[#allocation3 + $0x78] sm:$0xff]
      %v1955 = vld [vmem:[#allocation3 + $0x80] sm:$0xff]
      %v1956 = vld [vmem:[#allocation3 + $0x88] sm:$0xff]
      %v1957 = vld [vmem:[#allocation3 + $0x90] sm:$0xff]
      %v1958 = vld [vmem:[#allocation3 + $0x98] sm:$0xff]
      %v1959 = vld [vmem:[#allocation3 + $0xa0] sm:$0xff]
      %v1960 = vld [vmem:[#allocation3 + $0xa8] sm:$0xff]
      %v1961 = vld [vmem:[#allocation3 + $0xb0] sm:$0xff]
      %v1962 = vld [vmem:[#allocation3 + $0xb8] sm:$0xff]
      %v1963 = vld [vmem:[#allocation3 + $0xc0] sm:$0xff]
      %v1964 = vld [vmem:[#allocation3 + $0xc8] sm:$0xff]
      %v1965 = vld [vmem:[#allocation3 + $0xd0] sm:$0xff]
      %v1966 = vld [vmem:[#allocation3 + $0xd8] sm:$0xff]
      %v1967 = vld [vmem:[#allocation3 + $0xe0] sm:$0xff]
      %v1968 = vld [vmem:[#allocation3 + $0xe8] sm:$0xff]
      %v1969 = vld [vmem:[#allocation3 + $0xf0] sm:$0xff]
      %v1970 = vld [vmem:[#allocation3 + $0xf8] sm:$0xff]
      %v1971 = vld [vmem:[%s4] sm:$0xf]
      %v1972 = vld [vmem:[%s5] sm:$0x1]
      %v1974 = vperm.slane %v1972, 0
      %v1977 = vsel %vm468, %v1939, 0
      %v1980 = vsel %vm468, %v1940, 0
      %v1983 = vsel %vm468, %v1941, 0
      %v1986 = vsel %vm468, %v1942, 0
      %v1989 = vsel %vm468, %v1943, 0
      %v1992 = vsel %vm468, %v1944, 0
      %v1995 = vsel %vm468, %v1945, 0
      %v1998 = vsel %vm468, %v1946, 0
      %v2001 = vsel %vm468, %v1947, 0
      %v2004 = vsel %vm468, %v1948, 0
      %v2007 = vsel %vm468, %v1949, 0
      %v2010 = vsel %vm468, %v1950, 0
      %v2013 = vsel %vm468, %v1951, 0
      %v2016 = vsel %vm468, %v1952, 0
      %v2019 = vsel %vm468, %v1953, 0
      %v2022 = vsel %vm468, %v1954, 0
      %v2025 = vsel %vm468, %v1955, 0
      %v2028 = vsel %vm468, %v1956, 0
      %v2031 = vsel %vm468, %v1957, 0
      %v2034 = vsel %vm468, %v1958, 0
      %v2037 = vsel %vm468, %v1959, 0
      %v2040 = vsel %vm468, %v1960, 0
      %v2043 = vsel %vm468, %v1961, 0
      %v2046 = vsel %vm468, %v1962, 0
      %v2049 = vsel %vm468, %v1963, 0
      %v2052 = vsel %vm468, %v1964, 0
      %v2055 = vsel %vm468, %v1965, 0
      %v2058 = vsel %vm468, %v1966, 0
      %v2061 = vsel %vm468, %v1967, 0
      %v2064 = vsel %vm468, %v1968, 0
      %v2067 = vsel %vm468, %v1969, 0
      %v2070 = vsel %vm468, %v1970, 0
      %vm2072 = vcmask 1043456
      %v2074 = vsel %vm2072, %v1971, 0
      %2076 = vmatpush.msra.mxu0 0.0
      %2077 = vmatpush.msra.mxu0 0.0
      %2078 = vmatpush.msra.mxu0 0.0
      %2079 = vmatpush.msra.mxu0 0.0
      %2080 = vmatpush.msra.mxu0 0.0
      %2081 = vmatpush.msra.mxu0 0.0
      %2082 = vmatpush.msra.mxu0 0.0
      %2083 = vmatpush.msra.mxu0 0.0
      %2084 = vmatpush.msra.mxu0 0.0
      %2085 = vmatpush.msra.mxu0 0.0
      %2086 = vmatpush.msra.mxu0 0.0
      %2087 = vmatpush.msra.mxu0 0.0
      %2088 = vmatpush.msra.mxu0 0.0
      %2089 = vmatpush.msra.mxu0 0.0
      %2090 = vmatpush.msra.mxu0 0.0
      %2091 = vmatpush.msra.mxu0 %v2074
      %2092 = vmatmul.f32.gmra.mxu0 %v1977
      %v2093 = vpop.f32.mrf.mxu0
      %v2094 = vadd.f32 %v1974, %v2093
      %2095 = vmatmul.f32.gmra.mxu0 %v1980
      %v2096 = vpop.f32.mrf.mxu0
      %v2097 = vadd.f32 %v1974, %v2096
      %2098 = vmatmul.f32.gmra.mxu0 %v1983
      %v2099 = vpop.f32.mrf.mxu0
      %v2100 = vadd.f32 %v1974, %v2099
      %2101 = vmatmul.f32.gmra.mxu0 %v1986
      %v2102 = vpop.f32.mrf.mxu0
      %v2103 = vadd.f32 %v1974, %v2102
      %2104 = vmatmul.f32.gmra.mxu0 %v1989
      %v2105 = vpop.f32.mrf.mxu0
      %v2106 = vadd.f32 %v1974, %v2105
      %2107 = vmatmul.f32.gmra.mxu0 %v1992
      %v2108 = vpop.f32.mrf.mxu0
      %v2109 = vadd.f32 %v1974, %v2108
      %2110 = vmatmul.f32.gmra.mxu0 %v1995
      %v2111 = vpop.f32.mrf.mxu0
      %v2112 = vadd.f32 %v1974, %v2111
      %2113 = vmatmul.f32.gmra.mxu0 %v1998
      %v2114 = vpop.f32.mrf.mxu0
      %v2115 = vadd.f32 %v1974, %v2114
      %2116 = vmatmul.f32.gmra.mxu0 %v2001
      %v2117 = vpop.f32.mrf.mxu0
      %v2118 = vadd.f32 %v1974, %v2117
      %2119 = vmatmul.f32.gmra.mxu0 %v2004
      %v2120 = vpop.f32.mrf.mxu0
      %v2121 = vadd.f32 %v1974, %v2120
      %2122 = vmatmul.f32.gmra.mxu0 %v2007
      %v2123 = vpop.f32.mrf.mxu0
      %v2124 = vadd.f32 %v1974, %v2123
      %2125 = vmatmul.f32.gmra.mxu0 %v2010
      %v2126 = vpop.f32.mrf.mxu0
      %v2127 = vadd.f32 %v1974, %v2126
      %2128 = vmatmul.f32.gmra.mxu0 %v2013
      %v2129 = vpop.f32.mrf.mxu0
      %v2130 = vadd.f32 %v1974, %v2129
      %2131 = vmatmul.f32.gmra.mxu0 %v2016
      %v2132 = vpop.f32.mrf.mxu0
      %v2133 = vadd.f32 %v1974, %v2132
      %2134 = vmatmul.f32.gmra.mxu0 %v2019
      %v2135 = vpop.f32.mrf.mxu0
      %v2136 = vadd.f32 %v1974, %v2135
      %2137 = vmatmul.f32.gmra.mxu0 %v2022
      %v2138 = vpop.f32.mrf.mxu0
      %v2139 = vadd.f32 %v1974, %v2138
      %2140 = vmatmul.f32.gmra.mxu0 %v2025
      %v2141 = vpop.f32.mrf.mxu0
      %v2142 = vadd.f32 %v1974, %v2141
      %2143 = vmatmul.f32.gmra.mxu0 %v2028
      %v2144 = vpop.f32.mrf.mxu0
      %v2145 = vadd.f32 %v1974, %v2144
      %2146 = vmatmul.f32.gmra.mxu0 %v2031
      %v2147 = vpop.f32.mrf.mxu0
      %v2148 = vadd.f32 %v1974, %v2147
      %2149 = vmatmul.f32.gmra.mxu0 %v2034
      %v2150 = vpop.f32.mrf.mxu0
      %v2151 = vadd.f32 %v1974, %v2150
      %2152 = vmatmul.f32.gmra.mxu0 %v2037
      %v2153 = vpop.f32.mrf.mxu0
      %v2154 = vadd.f32 %v1974, %v2153
      %2155 = vmatmul.f32.gmra.mxu0 %v2040
      %v2156 = vpop.f32.mrf.mxu0
      %v2157 = vadd.f32 %v1974, %v2156
      %2158 = vmatmul.f32.gmra.mxu0 %v2043
      %v2159 = vpop.f32.mrf.mxu0
      %v2160 = vadd.f32 %v1974, %v2159
      %2161 = vmatmul.f32.gmra.mxu0 %v2046
      %v2162 = vpop.f32.mrf.mxu0
      %v2163 = vadd.f32 %v1974, %v2162
      %2164 = vmatmul.f32.gmra.mxu0 %v2049
      %v2165 = vpop.f32.mrf.mxu0
      %v2166 = vadd.f32 %v1974, %v2165
      %2167 = vmatmul.f32.gmra.mxu0 %v2052
      %v2168 = vpop.f32.mrf.mxu0
      %v2169 = vadd.f32 %v1974, %v2168
      %2170 = vmatmul.f32.gmra.mxu0 %v2055
      %v2171 = vpop.f32.mrf.mxu0
      %v2172 = vadd.f32 %v1974, %v2171
      %2173 = vmatmul.f32.gmra.mxu0 %v2058
      %v2174 = vpop.f32.mrf.mxu0
      %v2175 = vadd.f32 %v1974, %v2174
      %2176 = vmatmul.f32.gmra.mxu0 %v2061
      %v2177 = vpop.f32.mrf.mxu0
      %v2178 = vadd.f32 %v1974, %v2177
      %2179 = vmatmul.f32.gmra.mxu0 %v2064
      %v2180 = vpop.f32.mrf.mxu0
      %v2181 = vadd.f32 %v1974, %v2180
      %2182 = vmatmul.f32.gmra.mxu0 %v2067
      %v2183 = vpop.f32.mrf.mxu0
      %v2184 = vadd.f32 %v1974, %v2183
      %2185 = vmatmul.f32.gmra.mxu0 %v2070
      %v2186 = vpop.f32.mrf.mxu0
      %v2187 = vadd.f32 %v1974, %v2186
      %2188 = vdwg.mxu0
      %vm2189 = vcmask 64512
      %2190 = vst.msk [vmem:[%s418] sm:$0xff] %vm2189, %v2094
      %2191 = vst.msk [vmem:[%s418 + $0x8] sm:$0xff] %vm2189, %v2097
      %2192 = vst.msk [vmem:[%s418 + $0x10] sm:$0xff] %vm2189, %v2100
      %2193 = vst.msk [vmem:[%s418 + $0x18] sm:$0xff] %vm2189, %v2103
      %2194 = vst.msk [vmem:[%s418 + $0x20] sm:$0xff] %vm2189, %v2106
      %2195 = vst.msk [vmem:[%s418 + $0x28] sm:$0xff] %vm2189, %v2109
      %2196 = vst.msk [vmem:[%s418 + $0x30] sm:$0xff] %vm2189, %v2112
      %2197 = vst.msk [vmem:[%s418 + $0x38] sm:$0xff] %vm2189, %v2115
      %2198 = vst.msk [vmem:[%s418 + $0x40] sm:$0xff] %vm2189, %v2118
      %2199 = vst.msk [vmem:[%s418 + $0x48] sm:$0xff] %vm2189, %v2121
      %2200 = vst.msk [vmem:[%s418 + $0x50] sm:$0xff] %vm2189, %v2124
      %2201 = vst.msk [vmem:[%s418 + $0x58] sm:$0xff] %vm2189, %v2127
      %2202 = vst.msk [vmem:[%s418 + $0x60] sm:$0xff] %vm2189, %v2130
      %2203 = vst.msk [vmem:[%s418 + $0x68] sm:$0xff] %vm2189, %v2133
      %2204 = vst.msk [vmem:[%s418 + $0x70] sm:$0xff] %vm2189, %v2136
      %2205 = vst.msk [vmem:[%s418 + $0x78] sm:$0xff] %vm2189, %v2139
      %2206 = vst.msk [vmem:[%s418 + $0x80] sm:$0xff] %vm2189, %v2142
      %2207 = vst.msk [vmem:[%s418 + $0x88] sm:$0xff] %vm2189, %v2145
      %2208 = vst.msk [vmem:[%s418 + $0x90] sm:$0xff] %vm2189, %v2148
      %2209 = vst.msk [vmem:[%s418 + $0x98] sm:$0xff] %vm2189, %v2151
      %2210 = vst.msk [vmem:[%s418 + $0xa0] sm:$0xff] %vm2189, %v2154
      %2211 = vst.msk [vmem:[%s418 + $0xa8] sm:$0xff] %vm2189, %v2157
      %2212 = vst.msk [vmem:[%s418 + $0xb0] sm:$0xff] %vm2189, %v2160
      %2213 = vst.msk [vmem:[%s418 + $0xb8] sm:$0xff] %vm2189, %v2163
      %2214 = vst.msk [vmem:[%s418 + $0xc0] sm:$0xff] %vm2189, %v2166
      %2215 = vst.msk [vmem:[%s418 + $0xc8] sm:$0xff] %vm2189, %v2169
      %2216 = vst.msk [vmem:[%s418 + $0xd0] sm:$0xff] %vm2189, %v2172
      %2217 = vst.msk [vmem:[%s418 + $0xd8] sm:$0xff] %vm2189, %v2175
      %2218 = vst.msk [vmem:[%s418 + $0xe0] sm:$0xff] %vm2189, %v2178
      %2219 = vst.msk [vmem:[%s418 + $0xe8] sm:$0xff] %vm2189, %v2181
      %2220 = vst.msk [vmem:[%s418 + $0xf0] sm:$0xff] %vm2189, %v2184
      %2221 = vst.msk [vmem:[%s418 + $0xf8] sm:$0xff] %vm2189, %v2187
      %s2222 = smul.u32 16, %s22
      %p2223 = scmp.lt.s32.totalorder %s21, 1
      %s2224 = scalar_select %p2223, %s21, 1
      %p2225 = scmp.lt.s32.totalorder %s2222, 15
      %s2226 = scalar_select %p2225, %s2222, 15
      %s2227 = smul.addr %s2226, 2
      %s2228 = smul.addr %s2224, 32
      %s2229 = sadd.s32 %s2227, %s2228
      %s2230 = smul.addr %s2229, 8
      %s2231 = scalar_lea.vmem %s6, %s2230
      // Predicated region
      $region45: #{tpu_custom_call.1} parent=43 // pred_check
        %p2232 = pneg %p212
      $region46: #{tpu_custom_call.1} parent=43 // pred_check_branch
        %2234 = sbr.rel (%p2232) target = $region48
      $region47: #{tpu_custom_call.1} parent=43 // pred_region
        %s2235 = smul.u32 16, %s22
      $region48: #{tpu_custom_call.1} parent=43 // pred_fallthru
        _
    $region44: #{tpu_custom_call.1} parent=5 // pred_fallthru
      _
    %p2236 = scmp.le.s32.totalorder 2, %s12
    // Predicated region
    $region49: #{tpu_custom_call.1} parent=5 // pred_check
      %p2237 = pneg %p2236
    $region50: #{tpu_custom_call.1} parent=5 // pred_check_branch
      %2239 = sbr.rel (%p2237) target = $region52
    $region51: #{tpu_custom_call.1} parent=5 // pred_region
      %s2240 = ssub.s32 %s12, 2
      // Predicated region
      $region53: #{tpu_custom_call.1} parent=51 // pred_check
        %p2241 = pneg %p218
      $region54: #{tpu_custom_call.1} parent=51 // pred_check_branch
        %2243 = sbr.rel (%p2241) target = $region56
      $region55: #{tpu_custom_call.1} parent=51 // pred_region
        %s2244 = smul.u32 16, %s24
        %p2245 = scmp.lt.s32.totalorder %s23, 1
        %s2246 = scalar_select %p2245, %s23, 1
        %p2247 = scmp.lt.s32.totalorder %s2244, 15
        %s2248 = scalar_select %p2247, %s2244, 15
        %s2249 = smul.addr %s2248, 2
        %s2250 = smul.addr %s2246, 32
        %s2251 = sadd.s32 %s2249, %s2250
        %s2252 = smul.addr %s2251, 8
        %s2253 = scalar_lea.vmem %s6, %s2252
      $region56: #{tpu_custom_call.1} parent=51 // pred_fallthru
        _
    $region52: #{tpu_custom_call.1} parent=5 // pred_fallthru
      _
  $region6: #{tpu_custom_call.1} parent=0 // loop_footer
    %s16 = sadd.s32 1, %s12
  $region7: #{tpu_custom_call.1} parent=0 // loop_footer_branch
    %11 = sbr.rel target = $region3
  $region8: #{tpu_custom_call.1} parent=0 // loop_exit
    _

</llo_original>
